<compile_context>
chip_gen: v7x
topology: tpu7x:2x2x1
jax: 0.10.0
libtpu: 0.0.40
codegen_flags: <defaults>
</compile_context>

<pallas_src>
import functools

import numpy as np
import jax
import jax.numpy as jnp
from jax.experimental import pallas as pl
from jax.experimental.pallas import tpu as pltpu

K_SIZE = 12
EPS = 1e-5

_LANE = 128


# --------------------------- per-generation tuning ---------------------------
def _hw_budgets():
    """Returns (block_budget_bytes, vmem_limit_bytes, lane_target)."""
    big_vmem = False
    try:
        info = pltpu.get_tpu_info()
        cap = getattr(info, "vmem_capacity_bytes", 0) or 0
        big_vmem = int(cap) > 96 * 1024 * 1024
    except Exception:
        big_vmem = False
    if big_vmem:
        # v5e / v6e class (128 MiB VMEM): bigger blocks amortize the ~0.35 us
        # per-grid-step overhead of this purely memory-bound op.
        return 8 * 1024 * 1024, 64 * 1024 * 1024, 1024
    # v7x class (64 MiB VMEM) or unknown: keep 2x(in)+2x(out) double-buffered
    # blocks plus the (C, C) operator comfortably inside the scoped limit.
    return 4 * 1024 * 1024, 40 * 1024 * 1024, 512


# --------------------------- Pallas kernels ----------------------------------
def _reduce_attn_kernel(x_ref, t_ref, aff_ref, att_ref, acc_ref, *,
                        L, l_tile, lane_w, grid_l, use_mxu, use_roll):
    li = pl.program_id(1)
    n_chunks = l_tile // lane_w
    needs_mask = (L % l_tile) != 0
    last_block_start = (grid_l - 1) * l_tile            # static

    @pl.when(li == 0)
    def _init():
        acc_ref[...] = jnp.zeros_like(acc_ref)

    def _accumulate(tail):
        # Lane-wise VPU accumulation: static unrolled loop of 128-wide adds;
        # the single cross-lane reduce happens once, in the finalize.
        acc = acc_ref[...]
        for k in range(n_chunks):
            start = k * lane_w
            if tail:
                g0 = last_block_start + start            # static on the tail step
                if g0 >= L:
                    continue                             # fully out of range: skip
            xk = x_ref[:, :, pl.ds(start, lane_w)]
            if xk.dtype != jnp.float32:
                xk = xk.astype(jnp.float32)
            if tail and g0 + lane_w > L:                 # only the straddling chunk
                lane = jax.lax.broadcasted_iota(jnp.int32, xk.shape, 2) + g0
                xk = jnp.where(lane < L, xk, 0.0)
            acc = acc + xk
        acc_ref[...] = acc

    if needs_mask:
        @pl.when(li < grid_l - 1)
        def _full_steps():
            _accumulate(tail=False)

        @pl.when(li == grid_l - 1)
        def _tail_step():
            _accumulate(tail=True)
    else:
        _accumulate(tail=False)

    @pl.when(li == grid_l - 1)
    def _finalize():
        # Pooled descriptor: one cross-lane reduce + sum-then-divide in f32.
        y = jnp.sum(acc_ref[...], axis=-1) * (1.0 / L)              # (n_tile, C)
        C = y.shape[-1]

        # conv1 + conv1_a + conv1_b folded into one banded (C, C) operator.
        if use_mxu:
            # t_ref holds T with lin = y @ T; single MXU contraction.
            lin = jnp.dot(y, t_ref[...], preferred_element_type=jnp.float32)
        else:
            # t_ref holds T^T; VPU multiply + lane reduce (cheap at small C).
            lin = jnp.sum(y[:, None, :] * t_ref[...][None, :, :], axis=-1)

        # MaxPool1d(k=3, s=1, p=1) with -inf padding.
        if use_roll:
            # O(C): two XLU lane rotations + edge masks + VPU maxes.
            col = jax.lax.broadcasted_iota(jnp.int32, y.shape, 1)
            ninf = jnp.float32(-jnp.inf)
            left = jnp.where(col == 0, ninf, pltpu.roll(y, shift=1, axis=1))
            right = jnp.where(col == C - 1, ninf,
                              pltpu.roll(y, shift=C - 1, axis=1))
            mp = jnp.maximum(y, jnp.maximum(left, right))
        else:
            # Small-C fallback: neighbour mask + lane-reduce max.
            ii = jax.lax.broadcasted_iota(jnp.int32, (C, C), 0)
            jj = jax.lax.broadcasted_iota(jnp.int32, (C, C), 1)
            nbr = (jnp.abs(ii - jj) <= 1)[None, :, :]
            mp = jnp.max(jnp.where(nbr, y[:, None, :], -jnp.inf), axis=-1)

        bias = aff_ref[0:1, :]                           # folded bias row (1, C)
        cm = aff_ref[1:2, :]                             # maxpool-branch scale (1, C)
        att_ref[...] = jax.nn.sigmoid(lin + bias + cm * mp)


def _apply_kernel(att_ref, x_ref, o_ref):
    o_ref[...] = (x_ref[...] * att_ref[...][:, :, None]).astype(o_ref.dtype)


# ------------------------------ wrapper ---------------------------------------
def _pick_tiles(N, C, L, block_budget, lane_target):
    """Lane-dense L tile plus a legal batch tile that fits the block budget."""
    if L >= _LANE:
        l_tile = min(lane_target, (L // _LANE) * _LANE)
    else:
        l_tile = L                                       # full dim (legal, tiny)

    def blk_bytes(nt, lt):
        return nt * C * lt * 4

    # Batch tile.  Legal sizes are N (full) or multiples of 8: the attention
    # vector is blocked (n_tile, C), so a non-full second-minor block must be
    # 8-aligned.  Prefer <= N/2 so the "parallel" batch axis has >= 2 steps
    # (both v7x TensorCores busy; ~0.35 us/step cost elsewhere), then shrink
    # (batch first, L second) until one block fits the budget.
    n_tile = N
    half8 = ((N // 2) // 8) * 8
    if half8 >= 8:
        n_tile = half8
    while n_tile > 8 and blk_bytes(n_tile, l_tile) > block_budget:
        n_tile = max(8, ((n_tile // 2) // 8) * 8)
    while l_tile > _LANE and blk_bytes(n_tile, l_tile) > block_budget:
        l_tile = max(_LANE, ((l_tile // 2) // _LANE) * _LANE)
    return n_tile, l_tile


def eica_forward(x, t, aff):
    """x: (N, C, L); t: (C, C) folded operator (lin = y @ t); aff: (2, C)."""
    N, C, L = x.shape
    block_budget, vmem_limit, lane_target = _hw_budgets()
    n_tile, l_tile = _pick_tiles(N, C, L, block_budget, lane_target)
    lane_w = min(l_tile, _LANE)
    grid = (pl.cdiv(N, n_tile), pl.cdiv(L, l_tile))

    use_mxu = C >= 128                        # MXU contraction for big C
    use_roll = use_mxu and (C % _LANE == 0)   # lane rotations want 128-aligned C
    t_op = t if use_mxu else t.T              # small-C path contracts over lanes

    # -- phase 1: pooled descriptor + channel attention -> (N, C) float32 -----
    att = pl.pallas_call(
        functools.partial(_reduce_attn_kernel, L=L, l_tile=l_tile,
                          lane_w=lane_w, grid_l=grid[1],
                          use_mxu=use_mxu, use_roll=use_roll),
        out_shape=jax.ShapeDtypeStruct((N, C), jnp.float32),
        grid=grid,
        in_specs=[
            pl.BlockSpec((n_tile, C, l_tile), lambda n, l: (n, 0, l)),
            pl.BlockSpec((C, C), lambda n, l: (0, 0)),
            pl.BlockSpec((2, C), lambda n, l: (0, 0)),
        ],
        out_specs=pl.BlockSpec((n_tile, C), lambda n, l: (n, 0)),
        scratch_shapes=[pltpu.VMEM((n_tile, C, lane_w), jnp.float32)],
        compiler_params=pltpu.CompilerParams(
            dimension_semantics=("parallel", "arbitrary"),
            vmem_limit_bytes=vmem_limit),
    )(x, t_op, aff)

    # -- phase 2: stream x and apply attention (in place on x's buffer) -------
    out = pl.pallas_call(
        _apply_kernel,
        out_shape=jax.ShapeDtypeStruct((N, C, L), x.dtype),
        grid=grid,
        in_specs=[
            pl.BlockSpec((n_tile, C), lambda n, l: (n, 0)),
            pl.BlockSpec((n_tile, C, l_tile), lambda n, l: (n, 0, l)),
        ],
        out_specs=pl.BlockSpec((n_tile, C, l_tile), lambda n, l: (n, 0, l)),
        # x's buffer is reused for the output; the caller donates x at the jit
        # boundary (jax.jit(..., donate_argnums=0)) so no defensive copy.
        input_output_aliases={1: 0},
        compiler_params=pltpu.CompilerParams(
            dimension_semantics=("parallel", "parallel"),
            vmem_limit_bytes=vmem_limit),
    )(att, x)
    return out


# --------------------------- parameter folding --------------------------------
def make_toeplitz(w, C, pad):
    """T such that (y @ T)[n, i] == zero-padded cross-correlation of y[n] with w."""
    w = np.asarray(w, np.float32)
    K = w.shape[0]
    j = np.arange(C)[:, None]
    i = np.arange(C)[None, :]
    k = j - i + pad
    valid = (k >= 0) & (k < K)
    return np.where(valid, w[np.clip(k, 0, K - 1)], 0.0).astype(np.float32)


def fold_params(p, C):
    """Fold 1x1 convs + eval-mode BN into affines, collapse the three linear
    branches into one (C, C) operator T (lin = y @ T) + bias row; the maxpool
    branch keeps a scalar affine (cm, dm)."""
    sga = p["ga"] / np.sqrt(p["va"] + EPS)
    sgb = p["gb"] / np.sqrt(p["vb"] + EPS)
    sgm = p["gm"] / np.sqrt(p["vm"] + EPS)
    ca, da = p["wa1"] * sga, p["ba"] - p["ma"] * sga
    cb, db = p["wb1"] * sgb, p["bb"] - p["mb"] * sgb
    cm, dm = sgm * p["wmax"], (p["bm"] - p["mm"] * sgm) * p["wmax"]

    pad_a = (K_SIZE // 2 - 2) // 2
    pad_b = (K_SIZE - 2) // 2
    Ta = make_toeplitz(p["wa_k"], C, pad_a)
    Tb = make_toeplitz(p["wb_k"], C, pad_b)

    t_total = (p["w1"] * np.eye(C, dtype=np.float32)
               + ca * Ta + cb * Tb).astype(np.float32)
    bias = (da * Ta.sum(axis=0) + db * Tb.sum(axis=0) + dm).astype(np.float32)
    aff = np.stack([bias, np.full((C,), cm, np.float32)]).astype(np.float32)
    return jnp.asarray(t_total), jnp.asarray(aff)


# ----------------------- numpy reference (for checking) -----------------------
def ref_forward(x, p):
    N, C, L = x.shape
    y = x.mean(axis=2)

    def bn(t, g, b, m, v):
        return (t - m) / np.sqrt(v + EPS) * g + b

    def conv1d(t, w, pad):
        K = len(w)
        tp = np.pad(t, ((0, 0), (pad, pad)))
        out = np.zeros_like(t)
        for i in range(C):
            out[:, i] = sum(w[k] * tp[:, i + k] for k in range(K))
        return out

    def maxpool3(t):
        tp = np.pad(t, ((0, 0), (1, 1)), constant_values=-np.inf)
        return np.maximum(tp[:, 0:C], np.maximum(tp[:, 1:C + 1], tp[:, 2:C + 2]))

    b0 = y * p["w1"]
    ta = conv1d(bn(y * p["wa1"], p["ga"], p["ba"], p["ma"], p["va"]),
                p["wa_k"], (K_SIZE // 2 - 2) // 2)
    tb = conv1d(bn(y * p["wb1"], p["gb"], p["bb"], p["mb"], p["vb"]),
                p["wb_k"], (K_SIZE - 2) // 2)
    tm = bn(maxpool3(y), p["gm"], p["bm"], p["mm"], p["vm"]) * p["wmax"]
    att = 1.0 / (1.0 + np.exp(-(b0 + ta + tb + tm)))
    return x * att[:, :, None]


if __name__ == "__main__":
    key = jax.random.PRNGKey(0)
    keys = jax.random.split(key, 8)

    # Small deterministic shapes: several lane-dense L tiles plus a partial
    # tail (exercises the static tail-mask path) and N large enough that the
    # "parallel" batch axis is split into >= 2 steps.
    N, C, L = 16, 16, 1200
    x = jax.random.normal(keys[0], (N, C, L), jnp.float32)

    Ka = K_SIZE // 2 - 1          # 5
    Kb = K_SIZE - 1               # 11

    # Deterministic synthetic parameters (shapes from __init__; no checkpoint).
    params = dict(
        w1=float(jax.random.normal(keys[1], ()) * 0.5),      # conv1        (1,1,1)
        wa1=float(jax.random.normal(keys[2], ()) * 0.5),     # conv1_a[0]   (1,1,1)
        wa_k=np.asarray(jax.random.normal(keys[3], (Ka,)) * 0.3, np.float32),
        wb1=float(jax.random.normal(keys[4], ()) * 0.5),     # conv1_b[0]   (1,1,1)
        wb_k=np.asarray(jax.random.normal(keys[5], (Kb,)) * 0.2, np.float32),
        wmax=float(jax.random.normal(keys[6], ()) * 0.5),    # max_conv1[2] (1,1,1)
        # BatchNorm1d(1), inference (eval) semantics.
        ga=1.1, ba=0.05, ma=0.1, va=0.9,
        gb=0.9, bb=-0.03, mb=-0.2, vb=1.2,
        gm=1.05, bm=0.02, mm=0.0, vm=1.0,
    )

    t, aff = fold_params(params, C)
    x_np = np.asarray(x)          # host copy before x's buffer is donated

    fwd = jax.jit(eica_forward, donate_argnums=0)   # true in-place apply pass
    out = jax.block_until_ready(fwd(x, t, aff))

    ref = ref_forward(x_np, params)
    np.testing.assert_allclose(np.asarray(out), ref, rtol=1e-4, atol=1e-4)
    print("KERNEL_OK")
</pallas_src>

<mosaic_0001>
module attributes {stable_mosaic.version = 11 : i64} {
  func.func @_reduce_attn_kernel(%arg0: i32, %arg1: i32, %arg2: memref<8x16x512xf32, #tpu.memory_space<vmem>>, %arg3: memref<16x16xf32, #tpu.memory_space<vmem>>, %arg4: memref<2x16xf32, #tpu.memory_space<vmem>>, %arg5: memref<8x16xf32, #tpu.memory_space<vmem>>, %arg6: memref<8x16x128xf32, #tpu.memory_space<vmem>>) attributes {dimension_semantics = [#tpu.dimension_semantics<parallel>, #tpu.dimension_semantics<arbitrary>], iteration_bounds = array<i64: 2, 3>, scalar_prefetch = 0 : i64, scratch_operands = 1 : i64, tpu.core_type = #tpu.core_type<tc>, window_params = [{transform_indices = @transform_0, window_bounds = array<i64: 8, 16, 512>}, {pipeline_mode = #tpu.pipeline_mode<synchronous>, transform_indices = @transform_1, window_bounds = array<i64: 16, 16>}, {pipeline_mode = #tpu.pipeline_mode<synchronous>, transform_indices = @transform_2, window_bounds = array<i64: 2, 16>}, {transform_indices = @transform_3, window_bounds = array<i64: 8, 16>}]} {
    %c0_i32 = arith.constant 0 : i32
    %0 = arith.cmpi eq, %arg1, %c0_i32 : i32
    %1 = arith.extui %0 : i1 to i32
    %c0_i32_0 = arith.constant 0 : i32
    %2 = arith.cmpi ne, %1, %c0_i32_0 : i32
    scf.if %2 {
      %cst = arith.constant 0.000000e+00 : f32
      %12 = vector.broadcast %cst : f32 to vector<8x16x128xf32>
      %c0 = arith.constant 0 : index
      %c0_6 = arith.constant 0 : index
      %c0_7 = arith.constant 0 : index
      %13 = vector.load %arg6[%c0, %c0_6, %c0_7] : memref<8x16x128xf32, #tpu.memory_space<vmem>>, vector<8x16x128xf32>
      tpu.vector_store %arg6[%c0, %c0_6, %c0_7], %12 {strides = array<i32>} : memref<8x16x128xf32, #tpu.memory_space<vmem>>, vector<8x16x128xf32>,
    } else {
    }
    %c2_i32 = arith.constant 2 : i32
    %3 = arith.cmpi slt, %arg1, %c2_i32 : i32
    %4 = arith.extui %3 : i1 to i32
    %c0_i32_1 = arith.constant 0 : i32
    %5 = arith.cmpi ne, %4, %c0_i32_1 : i32
    scf.if %5 {
      %c0 = arith.constant 0 : index
      %c0_6 = arith.constant 0 : index
      %c0_7 = arith.constant 0 : index
      %12 = vector.load %arg6[%c0, %c0_6, %c0_7] : memref<8x16x128xf32, #tpu.memory_space<vmem>>, vector<8x16x128xf32>
      %c0_8 = arith.constant 0 : index
      %c0_9 = arith.constant 0 : index
      %c0_10 = arith.constant 0 : index
      %13 = vector.load %arg2[%c0_8, %c0_9, %c0_10] : memref<8x16x512xf32, #tpu.memory_space<vmem>>, vector<8x16x128xf32>
      %14 = arith.addf %12, %13 : vector<8x16x128xf32>
      %c0_11 = arith.constant 0 : index
      %c0_12 = arith.constant 0 : index
      %c128 = arith.constant 128 : index
      %15 = vector.load %arg2[%c0_11, %c0_12, %c128] : memref<8x16x512xf32, #tpu.memory_space<vmem>>, vector<8x16x128xf32>
      %16 = arith.addf %14, %15 : vector<8x16x128xf32>
      %c0_13 = arith.constant 0 : index
      %c0_14 = arith.constant 0 : index
      %c256 = arith.constant 256 : index
      %17 = vector.load %arg2[%c0_13, %c0_14, %c256] : memref<8x16x512xf32, #tpu.memory_space<vmem>>, vector<8x16x128xf32>
      %18 = arith.addf %16, %17 : vector<8x16x128xf32>
      %c0_15 = arith.constant 0 : index
      %c0_16 = arith.constant 0 : index
      %c384 = arith.constant 384 : index
      %19 = vector.load %arg2[%c0_15, %c0_16, %c384] : memref<8x16x512xf32, #tpu.memory_space<vmem>>, vector<8x16x128xf32>
      %20 = arith.addf %18, %19 : vector<8x16x128xf32>
      %c0_17 = arith.constant 0 : index
      %c0_18 = arith.constant 0 : index
      %c0_19 = arith.constant 0 : index
      %21 = vector.load %arg6[%c0_17, %c0_18, %c0_19] : memref<8x16x128xf32, #tpu.memory_space<vmem>>, vector<8x16x128xf32>
      tpu.vector_store %arg6[%c0_17, %c0_18, %c0_19], %20 {strides = array<i32>} : memref<8x16x128xf32, #tpu.memory_space<vmem>>, vector<8x16x128xf32>,
    } else {
    }
    %c2_i32_2 = arith.constant 2 : i32
    %6 = arith.cmpi eq, %arg1, %c2_i32_2 : i32
    %7 = arith.extui %6 : i1 to i32
    %c0_i32_3 = arith.constant 0 : i32
    %8 = arith.cmpi ne, %7, %c0_i32_3 : i32
    scf.if %8 {
      %c0 = arith.constant 0 : index
      %c0_6 = arith.constant 0 : index
      %c0_7 = arith.constant 0 : index
      %12 = vector.load %arg6[%c0, %c0_6, %c0_7] : memref<8x16x128xf32, #tpu.memory_space<vmem>>, vector<8x16x128xf32>
      %c0_8 = arith.constant 0 : index
      %c0_9 = arith.constant 0 : index
      %c0_10 = arith.constant 0 : index
      %13 = vector.load %arg2[%c0_8, %c0_9, %c0_10] : memref<8x16x512xf32, #tpu.memory_space<vmem>>, vector<8x16x128xf32>
      %14 = arith.addf %12, %13 : vector<8x16x128xf32>
      %c0_11 = arith.constant 0 : index
      %c0_12 = arith.constant 0 : index
      %c128 = arith.constant 128 : index
      %15 = vector.load %arg2[%c0_11, %c0_12, %c128] : memref<8x16x512xf32, #tpu.memory_space<vmem>>, vector<8x16x128xf32>
      %16 = tpu.iota {dimensions = array<i32: 2>} : vector<8x16x128xi32>
      %c1152_i32 = arith.constant 1152 : i32
      %17 = vector.broadcast %c1152_i32 : i32 to vector<8x16x128xi32>
      %18 = arith.addi %16, %17 : vector<8x16x128xi32>
      %c1200_i32 = arith.constant 1200 : i32
      %19 = vector.broadcast %c1200_i32 : i32 to vector<8x16x128xi32>
      %20 = arith.cmpi slt, %18, %19 : vector<8x16x128xi32>
      %cst = arith.constant 0.000000e+00 : f32
      %21 = vector.broadcast %cst : f32 to vector<8x16x128xf32>
      %22 = arith.select %20, %15, %21 : vector<8x16x128xi1>, vector<8x16x128xf32>
      %23 = arith.addf %14, %22 : vector<8x16x128xf32>
      %c0_13 = arith.constant 0 : index
      %c0_14 = arith.constant 0 : index
      %c0_15 = arith.constant 0 : index
      %24 = vector.load %arg6[%c0_13, %c0_14, %c0_15] : memref<8x16x128xf32, #tpu.memory_space<vmem>>, vector<8x16x128xf32>
      tpu.vector_store %arg6[%c0_13, %c0_14, %c0_15], %23 {strides = array<i32>} : memref<8x16x128xf32, #tpu.memory_space<vmem>>, vector<8x16x128xf32>,
    } else {
    }
    %c2_i32_4 = arith.constant 2 : i32
    %9 = arith.cmpi eq, %arg1, %c2_i32_4 : i32
    %10 = arith.extui %9 : i1 to i32
    %c0_i32_5 = arith.constant 0 : i32
    %11 = arith.cmpi ne, %10, %c0_i32_5 : i32
    scf.if %11 {
      %c0 = arith.constant 0 : index
      %c0_6 = arith.constant 0 : index
      %c0_7 = arith.constant 0 : index
      %12 = vector.load %arg6[%c0, %c0_6, %c0_7] : memref<8x16x128xf32, #tpu.memory_space<vmem>>, vector<8x16x128xf32>
      %cst = arith.constant dense<0.000000e+00> : vector<8x16xf32>
      %13 = vector.multi_reduction <add>, %12, %cst [2] : vector<8x16x128xf32> to vector<8x16xf32>
      %cst_8 = arith.constant 8.33333353E-4 : f32
      %14 = vector.broadcast %cst_8 : f32 to vector<8x16xf32>
      %15 = arith.mulf %13, %14 : vector<8x16xf32>
      %16 = vector.shape_cast %15 : vector<8x16xf32> to vector<8x1x16xf32>
      %c0_9 = arith.constant 0 : index
      %c0_10 = arith.constant 0 : index
      %17 = vector.load %arg3[%c0_9, %c0_10] : memref<16x16xf32, #tpu.memory_space<vmem>>, vector<16x16xf32>
      %18 = vector.shape_cast %17 : vector<16x16xf32> to vector<1x16x16xf32>
      %19 = vector.broadcast %16 : vector<8x1x16xf32> to vector<8x16x16xf32>
      %20 = vector.broadcast %18 : vector<1x16x16xf32> to vector<8x16x16xf32>
      %21 = arith.mulf %19, %20 : vector<8x16x16xf32>
      %cst_11 = arith.constant dense<0.000000e+00> : vector<8x16xf32>
      %22 = vector.multi_reduction <add>, %21, %cst_11 [2] : vector<8x16x16xf32> to vector<8x16xf32>
      %23 = tpu.iota {dimensions = array<i32: 0>} : vector<16x16xi32>
      %24 = tpu.iota {dimensions = array<i32: 1>} : vector<16x16xi32>
      %25 = arith.subi %23, %24 : vector<16x16xi32>
      %26 = math.absi %25 : vector<16x16xi32>
      %c1_i32 = arith.constant 1 : i32
      %27 = vector.broadcast %c1_i32 : i32 to vector<16x16xi32>
      %28 = arith.cmpi sle, %26, %27 : vector<16x16xi32>
      %29 = vector.shape_cast %28 : vector<16x16xi1> to vector<1x16x16xi1>
      %30 = vector.shape_cast %15 : vector<8x16xf32> to vector<8x1x16xf32>
      %cst_12 = arith.constant 0xFF800000 : f32
      %31 = vector.shape_cast %29 : vector<1x16x16xi1> to vector<1x16x16xi1>
      %32 = vector.broadcast %31 : vector<1x16x16xi1> to vector<8x16x16xi1>
      %33 = vector.shape_cast %30 : vector<8x1x16xf32> to vector<8x1x16xf32>
      %34 = vector.broadcast %33 : vector<8x1x16xf32> to vector<8x16x16xf32>
      %35 = vector.broadcast %cst_12 : f32 to vector<8x16x16xf32>
      %36 = arith.select %32, %34, %35 : vector<8x16x16xi1>, vector<8x16x16xf32>
      %cst_13 = arith.constant dense<0xFF800000> : vector<8x16xf32>
      %37 = vector.multi_reduction <maximumf>, %36, %cst_13 [2] : vector<8x16x16xf32> to vector<8x16xf32>
      %c0_14 = arith.constant 0 : index
      %c0_15 = arith.constant 0 : index
      %38 = vector.load %arg4[%c0_14, %c0_15] : memref<2x16xf32, #tpu.memory_space<vmem>>, vector<1x16xf32>
      %c1 = arith.constant 1 : index
      %c0_16 = arith.constant 0 : index
      %39 = vector.load %arg4[%c1, %c0_16] : memref<2x16xf32, #tpu.memory_space<vmem>>, vector<1x16xf32>
      %40 = vector.broadcast %38 : vector<1x16xf32> to vector<8x16xf32>
      %41 = arith.addf %22, %40 : vector<8x16xf32>
      %42 = vector.broadcast %39 : vector<1x16xf32> to vector<8x16xf32>
      %43 = arith.mulf %42, %37 : vector<8x16xf32>
      %44 = arith.addf %41, %43 : vector<8x16xf32>
      %45 = arith.negf %44 : vector<8x16xf32>
      %46 = math.exp %45 : vector<8x16xf32>
      %cst_17 = arith.constant 1.000000e+00 : f32
      %47 = vector.broadcast %cst_17 : f32 to vector<8x16xf32>
      %48 = arith.addf %47, %46 : vector<8x16xf32>
      %49 = arith.divf %47, %48 : vector<8x16xf32>
      %c0_18 = arith.constant 0 : index
      %c0_19 = arith.constant 0 : index
      %50 = vector.load %arg5[%c0_18, %c0_19] : memref<8x16xf32, #tpu.memory_space<vmem>>, vector<8x16xf32>
      tpu.vector_store %arg5[%c0_18, %c0_19], %49 {strides = array<i32>} : memref<8x16xf32, #tpu.memory_space<vmem>>, vector<8x16xf32>,
    } else {
    }
    return
  }
  func.func @transform_0(%arg0: i32, %arg1: i32) -> (i32, i32, i32) {
    %c0_i32 = arith.constant 0 : i32
    %c0_i32_0 = arith.constant 0 : i32
    return %arg0, %c0_i32, %arg1 : i32, i32, i32
  }
  func.func @transform_1(%arg0: i32, %arg1: i32) -> (i32, i32) {
    %c0_i32 = arith.constant 0 : i32
    %c0_i32_0 = arith.constant 0 : i32
    %c0_i32_1 = arith.constant 0 : i32
    return %c0_i32, %c0_i32_0 : i32, i32
  }
  func.func @transform_2(%arg0: i32, %arg1: i32) -> (i32, i32) {
    %c0_i32 = arith.constant 0 : i32
    %c0_i32_0 = arith.constant 0 : i32
    %c0_i32_1 = arith.constant 0 : i32
    return %c0_i32, %c0_i32_0 : i32, i32
  }
  func.func @transform_3(%arg0: i32, %arg1: i32) -> (i32, i32) {
    %c0_i32 = arith.constant 0 : i32
    %c0_i32_0 = arith.constant 0 : i32
    return %arg0, %c0_i32 : i32, i32
  }
}

module attributes {stable_mosaic.version = 11 : i64} {
  func.func @_apply_kernel(%arg0: i32, %arg1: i32, %arg2: memref<8x16xf32, #tpu.memory_space<vmem>>, %arg3: memref<8x16x512xf32, #tpu.memory_space<vmem>>, %arg4: memref<8x16x512xf32, #tpu.memory_space<vmem>>) attributes {dimension_semantics = [#tpu.dimension_semantics<parallel>, #tpu.dimension_semantics<parallel>], iteration_bounds = array<i64: 2, 3>, scalar_prefetch = 0 : i64, scratch_operands = 0 : i64, tpu.core_type = #tpu.core_type<tc>, window_params = [{transform_indices = @transform_0, window_bounds = array<i64: 8, 16>}, {transform_indices = @transform_1, window_bounds = array<i64: 8, 16, 512>}, {transform_indices = @transform_2, window_bounds = array<i64: 8, 16, 512>}]} {
    %c0 = arith.constant 0 : index
    %c0_0 = arith.constant 0 : index
    %c0_1 = arith.constant 0 : index
    %0 = vector.load %arg3[%c0, %c0_0, %c0_1] : memref<8x16x512xf32, #tpu.memory_space<vmem>>, vector<8x16x512xf32>
    %c0_2 = arith.constant 0 : index
    %c0_3 = arith.constant 0 : index
    %1 = vector.load %arg2[%c0_2, %c0_3] : memref<8x16xf32, #tpu.memory_space<vmem>>, vector<8x16xf32>
    %2 = vector.shape_cast %1 : vector<8x16xf32> to vector<8x16x1xf32>
    %3 = vector.broadcast %2 : vector<8x16x1xf32> to vector<8x16x512xf32>
    %4 = arith.mulf %0, %3 : vector<8x16x512xf32>
    %c0_4 = arith.constant 0 : index
    %c0_5 = arith.constant 0 : index
    %c0_6 = arith.constant 0 : index
    %5 = vector.load %arg4[%c0_4, %c0_5, %c0_6] : memref<8x16x512xf32, #tpu.memory_space<vmem>>, vector<8x16x512xf32>
    tpu.vector_store %arg4[%c0_4, %c0_5, %c0_6], %4 {strides = array<i32>} : memref<8x16x512xf32, #tpu.memory_space<vmem>>, vector<8x16x512xf32>,
    return
  }
  func.func @transform_0(%arg0: i32, %arg1: i32) -> (i32, i32) {
    %c0_i32 = arith.constant 0 : i32
    %c0_i32_0 = arith.constant 0 : i32
    return %arg0, %c0_i32 : i32, i32
  }
  func.func @transform_1(%arg0: i32, %arg1: i32) -> (i32, i32, i32) {
    %c0_i32 = arith.constant 0 : i32
    %c0_i32_0 = arith.constant 0 : i32
    return %arg0, %c0_i32, %arg1 : i32, i32, i32
  }
  func.func @transform_2(%arg0: i32, %arg1: i32) -> (i32, i32, i32) {
    %c0_i32 = arith.constant 0 : i32
    %c0_i32_0 = arith.constant 0 : i32
    return %arg0, %c0_i32, %arg1 : i32, i32, i32
  }
}

</mosaic_0001>

<llo_original>
// kernel: eica_forward.3
$region0: #{eica_forward.3}
  #allocation0 [shape = 'u32[]', space=smem, size = 0x4, offset = 0x4, fixed_abs, tag = 'smem constant byte address 0x4 - core index']
  #allocation1 [shape = 'u32[144,128]{1,0:T(1,128)}', space=vmem, size = 0x12000, scoped, tag = 'internal scratch']
  %s0 = inlined_call_operand.vmem [shape: f32[16,16], index: 0, kind: input, shape index: {}]
  %s1 = inlined_call_operand.hbm [shape: f32[16,16,1200], index: 1, kind: input, shape index: {}, may-alias: {1,2}]
  %s2 = inlined_call_operand.hbm [shape: f32[16,16,1200], index: 2, kind: output, shape index: {}, may-alias: {1,2}]
  %s3 = sld [smem:[#allocation0]]
  $region45: #{eica_forward.3} parent=0
    _
  %s5 = ssub.s32 1, %s3
  %s6 = scalar_select 0, %s5, %s3
  $region1: #{eica_forward.3} parent=0
    #allocation2 [shape = 'u8[524288]{0}', space=vmem, size = 0x80000, scoped, tag = 'input window, operand 1']
    #allocation3 [shape = 's32[2]{0}', space=sflag, size = 0x8, scoped, tag = 'scoped memory for eica_forward.3']
    #allocation4 [shape = 's32[2]{0}', space=sflag, size = 0x8, scoped, tag = 'scoped memory for eica_forward.3']
    #allocation5 [shape = 'u8[524288]{0}', space=vmem, size = 0x80000, scoped, tag = 'output window, operand 0']
    %7 = vsyncpa [#allocation3], 0
    %s8 = scalar_lea.sflag [#allocation3], 1
    %9 = vsyncpa %s8, 0
    %10 = vsyncpa [#allocation4], 0
    %s11 = scalar_lea.sflag [#allocation4], 1
    %12 = vsyncpa %s11, 0
    loop: start=0, step=1, limit=8
    $region2: #{eica_forward.3} parent=1 // loop_pre_header
      _
    $region3: #{eica_forward.3} parent=1 // loop_header
      %s14 = sphi 0, %s18
      %p15 = scmp.ge.s32.totalorder %s14, 8
      %s21 = sphi 0, %s33
      %s22 = sphi 0, %s29
      %s23 = sphi 0, %s21
      %s24 = sphi 0, %s22
      %s25 = sphi 0, %s23
      %s26 = sphi 0, %s24
      %s36 = sphi 0, %s38
      %s39 = sphi 0, %s36
      %s40 = sphi 0, %s39
      %s56 = sphi 0, %s40
      %s64 = sphi 0, %s66
      %s67 = sphi 0, %s64
      %s68 = sphi 0, %s67
      %s84 = sphi 0, %s68
      %s92 = sphi 0, %s94
      %s95 = sphi 0, %s92
      %s96 = sphi 0, %s95
      %s112 = sphi 0, %s96
    $region4: #{eica_forward.3} parent=1 // loop_header_branch
      %17 = sbr.rel (%p15) target = $region8
    $region5: #{eica_forward.3} parent=1 // loop_body
      %s19 = ssub.s32 %s14, 1
      %s20 = ssub.s32 %s14, 2
      %s27 = sadd.s32 1, %s22
      %p28 = scmp.ge.s32.totalorder %s27, 3
      %s29 = scalar_select %p28, 0, %s27
      %s30 = sadd.s32 1, %s21
      %s31 = scalar_select %p28, %s30, %s21
      %p32 = scmp.ge.s32.totalorder %s31, 2
      %s33 = scalar_select %p32, 0, %s31
      %s34 = ssub.s32 %s21, %s33
      %p35 = scmp.eq.s32.totalorder %s34, 0
      %s37 = sadd.s32 %s36, 1
      %s38 = scalar_select %p35, %s36, %s37
      %p41 = pneg %p35
      %p42 = scmp.eq.s32.totalorder %s14, 5
      %p43 = por %p41, %p42
      %p44 = scmp.ne.s32.totalorder %s36, %s39
      %p45 = scmp.eq.s32.totalorder %s14, 0
      %p46 = por %p44, %p45
      %p47 = scmp.ne.s32.totalorder %s36, %s39
      %p48 = scmp.eq.s32.totalorder %s19, 5
      %p49 = por %p47, %p48
      %p50 = scmp.ne.s32.totalorder %s39, %s40
      %p51 = scmp.eq.s32.totalorder %s19, 0
      %p52 = por %p50, %p51
      %p53 = scmp.ne.s32.totalorder %s39, %s40
      %p54 = scmp.eq.s32.totalorder %s20, 5
      %p55 = por %p53, %p54
      %p57 = scmp.ne.s32.totalorder %s40, %s56
      %p58 = scmp.eq.s32.totalorder %s20, 0
      %p59 = por %p57, %p58
      %s60 = ssub.s32 %s21, %s33
      %s61 = ssub.s32 %s22, %s29
      %s62 = sor.u32 %s60, %s61
      %p63 = scmp.eq.s32.totalorder %s62, 0
      %s65 = sadd.s32 %s64, 1
      %s66 = scalar_select %p63, %s64, %s65
      %p69 = pneg %p63
      %p70 = scmp.eq.s32.totalorder %s14, 5
      %p71 = por %p69, %p70
      %p72 = scmp.ne.s32.totalorder %s64, %s67
      %p73 = scmp.eq.s32.totalorder %s14, 0
      %p74 = por %p72, %p73
      %p75 = scmp.ne.s32.totalorder %s64, %s67
      %p76 = scmp.eq.s32.totalorder %s19, 5
      %p77 = por %p75, %p76
      %p78 = scmp.ne.s32.totalorder %s67, %s68
      %p79 = scmp.eq.s32.totalorder %s19, 0
      %p80 = por %p78, %p79
      %p81 = scmp.ne.s32.totalorder %s67, %s68
      %p82 = scmp.eq.s32.totalorder %s20, 5
      %p83 = por %p81, %p82
      %p85 = scmp.ne.s32.totalorder %s68, %s84
      %p86 = scmp.eq.s32.totalorder %s20, 0
      %p87 = por %p85, %p86
      %s88 = ssub.s32 %s21, %s33
      %s89 = ssub.s32 %s22, %s29
      %s90 = sor.u32 %s88, %s89
      %p91 = scmp.eq.s32.totalorder %s90, 0
      %s93 = sadd.s32 %s92, 1
      %s94 = scalar_select %p91, %s92, %s93
      %p97 = pneg %p91
      %p98 = scmp.eq.s32.totalorder %s14, 5
      %p99 = por %p97, %p98
      %p100 = scmp.ne.s32.totalorder %s92, %s95
      %p101 = scmp.eq.s32.totalorder %s14, 0
      %p102 = por %p100, %p101
      %p103 = scmp.ne.s32.totalorder %s92, %s95
      %p104 = scmp.eq.s32.totalorder %s19, 5
      %p105 = por %p103, %p104
      %p106 = scmp.ne.s32.totalorder %s95, %s96
      %p107 = scmp.eq.s32.totalorder %s19, 0
      %p108 = por %p106, %p107
      %p109 = scmp.ne.s32.totalorder %s95, %s96
      %p110 = scmp.eq.s32.totalorder %s20, 5
      %p111 = por %p109, %p110
      %p113 = scmp.ne.s32.totalorder %s96, %s112
      %p114 = scmp.eq.s32.totalorder %s20, 0
      %p115 = por %p113, %p114
      %p116 = scmp.le.s32.totalorder 1, %s14
      %p117 = scmp.lt.s32.totalorder %s14, 7
      %p118 = pnand %p116, %p117
      %p119 = pneg %p118
      // Predicated region
      $region9: #{eica_forward.3} parent=5 // pred_check
        _
      $region10: #{eica_forward.3} parent=5 // pred_check_branch
        %121 = sbr.rel (%p118) target = $region12
      $region11: #{eica_forward.3} parent=5 // pred_region
        %s122 = ssub.s32 %s14, 1
      $region12: #{eica_forward.3} parent=5 // pred_fallthru
        _
      %p123 = scmp.lt.s32.totalorder %s14, 6
      // Predicated region
      $region13: #{eica_forward.3} parent=5 // pred_check
        %p124 = pneg %p123
      $region14: #{eica_forward.3} parent=5 // pred_check_branch
        %126 = sbr.rel (%p124) target = $region16
      $region15: #{eica_forward.3} parent=5 // pred_region
        // Predicated region
        $region17: #{eica_forward.3} parent=15 // pred_check
          %p127 = pneg %p46
        $region18: #{eica_forward.3} parent=15 // pred_check_branch
          %129 = sbr.rel (%p127) target = $region20
        $region19: #{eica_forward.3} parent=15 // pred_region
          %p130 = scmp.lt.s32.totalorder %s21, 1
          %s131 = scalar_select %p130, %s21, 1
          %s132 = smul.addr %s131, 8
          %s133 = scalar_lea.vmem %s0, %s132
        $region20: #{eica_forward.3} parent=15 // pred_fallthru
          _
        // Predicated region
        $region21: #{eica_forward.3} parent=15 // pred_check
          %p134 = pneg %p74
        $region22: #{eica_forward.3} parent=15 // pred_check_branch
          %136 = sbr.rel (%p134) target = $region24
        $region23: #{eica_forward.3} parent=15 // pred_region
          %s137 = sand.u32 %s64, 1
          %s138 = scalar_lea.sflag [#allocation3], %s137
          %s139 = sand.u32 %s64, 1
          %s140 = smul.addr %s139, 512
          %s141 = scalar_lea.vmem [#allocation2], %s140
          %s142 = smul.u32 8, %s21
          %s143 = smul.u32 4, %s22
          %s144 = ssub.s32 10, %s143
          %p145 = scmp.lt.s32.totalorder %s144, 4
          %s146 = scalar_select %p145, %s144, 4
          %s147 = smul.u32 2048, %s146
          %s149 = ssub.s32 8192, %s147
          %150 = vsyncadd %s138, %s149
          %p151 = scmp.ne.s32.totalorder 0, %s147
          %s152 = smul.addr %s142, 20
          %s153 = sadd.s32 %s143, %s152
          %s154 = smul.addr %s153, 128
          %s155 = scalar_lea.hbm %s1, %s154
          %s156 = smul.u32 %s146, 8
          %s157 = smul.u32 %s156, 16
          %s158 = sshll.u32 %s141, 4
          %s159 = int_to_ptr.vmem [resolvable:$true] %s158
          %s160 = sshll.u32 %s157, 4
          %164 = dma.hbm_to_vmem [thread:$0]  (%p151), %s155, %s160, %s159, %s138, 1280, 512, %s156
        $region24: #{eica_forward.3} parent=15 // pred_fallthru
          _
      $region16: #{eica_forward.3} parent=5 // pred_fallthru
        _
      %p165 = scmp.le.s32.totalorder 1, %s14
      %p166 = scmp.lt.s32.totalorder %s14, 7
      %p167 = pnand %p165, %p166
      %p168 = pneg %p167
      // Predicated region
      $region25: #{eica_forward.3} parent=5 // pred_check
        _
      $region26: #{eica_forward.3} parent=5 // pred_check_branch
        %170 = sbr.rel (%p167) target = $region28
      $region27: #{eica_forward.3} parent=5 // pred_region
        %s171 = ssub.s32 %s14, 1
        %s172 = sand.u32 %s67, 1
        %s173 = scalar_lea.sflag [#allocation3], %s172
        %s174 = sand.u32 %s67, 1
        %s175 = smul.addr %s174, 512
        %s176 = scalar_lea.vmem [#allocation2], %s175
        // Predicated region
        $region29: #{eica_forward.3} parent=27 // pred_check
          %p177 = pneg %p80
        $region30: #{eica_forward.3} parent=27 // pred_check_branch
          %179 = sbr.rel (%p177) target = $region32
        $region31: #{eica_forward.3} parent=27 // pred_region
          %180 = dma.done %s173, 8192
        $region32: #{eica_forward.3} parent=27 // pred_fallthru
          _
        %p181 = scmp.lt.s32.totalorder %s23, 1
        %s182 = scalar_select %p181, %s23, 1
        %s183 = smul.addr %s182, 8
        %s184 = scalar_lea.vmem %s0, %s183
        %p185 = pneg %p52
        %p186 = pneg %p49
        %s187 = sand.u32 %s67, 1
        %s188 = scalar_lea.sflag [#allocation3], %s187
        %s189 = sand.u32 %s67, 1
        %s190 = smul.addr %s189, 512
        %s191 = scalar_lea.vmem [#allocation2], %s190
        %p192 = pneg %p80
        %p193 = pneg %p77
        %p194 = pneg %p108
        %p195 = pneg %p105
        %s196 = sand.u32 %s95, 1
        %s197 = scalar_lea.sflag [#allocation4], %s196
        %s198 = sand.u32 %s95, 1
        %s199 = smul.addr %s198, 512
        %s200 = scalar_lea.vmem [#allocation5], %s199
        %p201 = scmp.lt.s32.totalorder %s23, 1
        %s202 = scalar_select %p201, %s23, 1
        %s203 = smul.addr %s202, 8
        %s204 = scalar_lea.vmem %s0, %s203
        %s205 = smul.u32 8, %s23
        %s206 = smul.u32 4, %s24
        %s207 = ssub.s32 10, %s206
        %p208 = scmp.lt.s32.totalorder %s207, 4
        %s209 = scalar_select %p208, %s207, 4
        %s210 = smul.u32 2048, %s209
        %s211 = smul.u32 8, %s23
        %s212 = smul.u32 4, %s24
        %s213 = ssub.s32 10, %s212
        %p214 = scmp.lt.s32.totalorder %s213, 4
        %s215 = scalar_select %p214, %s213, 4
        %s216 = smul.u32 2048, %s215
        %v217 = vld [vmem:[%s176] sm:$0xff]
        %v218 = vld [vmem:[%s176 + $0x8] sm:$0xff]
        %v219 = vld [vmem:[%s176 + $0x10] sm:$0xff]
        %v220 = vld [vmem:[%s176 + $0x18] sm:$0xff]
        %v221 = vld [vmem:[%s176 + $0x20] sm:$0xff]
        %v222 = vld [vmem:[%s176 + $0x28] sm:$0xff]
        %v223 = vld [vmem:[%s176 + $0x30] sm:$0xff]
        %v224 = vld [vmem:[%s176 + $0x38] sm:$0xff]
        %v225 = vld [vmem:[%s176 + $0x40] sm:$0xff]
        %v226 = vld [vmem:[%s176 + $0x48] sm:$0xff]
        %v227 = vld [vmem:[%s176 + $0x50] sm:$0xff]
        %v228 = vld [vmem:[%s176 + $0x58] sm:$0xff]
        %v229 = vld [vmem:[%s176 + $0x60] sm:$0xff]
        %v230 = vld [vmem:[%s176 + $0x68] sm:$0xff]
        %v231 = vld [vmem:[%s176 + $0x70] sm:$0xff]
        %v232 = vld [vmem:[%s176 + $0x78] sm:$0xff]
        %v233 = vld [vmem:[%s176 + $0x80] sm:$0xff]
        %v234 = vld [vmem:[%s176 + $0x88] sm:$0xff]
        %v235 = vld [vmem:[%s176 + $0x90] sm:$0xff]
        %v236 = vld [vmem:[%s176 + $0x98] sm:$0xff]
        %v237 = vld [vmem:[%s176 + $0xa0] sm:$0xff]
        %v238 = vld [vmem:[%s176 + $0xa8] sm:$0xff]
        %v239 = vld [vmem:[%s176 + $0xb0] sm:$0xff]
        %v240 = vld [vmem:[%s176 + $0xb8] sm:$0xff]
        %v241 = vld [vmem:[%s176 + $0xc0] sm:$0xff]
        %v242 = vld [vmem:[%s176 + $0xc8] sm:$0xff]
        %v243 = vld [vmem:[%s176 + $0xd0] sm:$0xff]
        %v244 = vld [vmem:[%s176 + $0xd8] sm:$0xff]
        %v245 = vld [vmem:[%s176 + $0xe0] sm:$0xff]
        %v246 = vld [vmem:[%s176 + $0xe8] sm:$0xff]
        %v247 = vld [vmem:[%s176 + $0xf0] sm:$0xff]
        %v248 = vld [vmem:[%s176 + $0xf8] sm:$0xff]
        %v249 = vld [vmem:[%s176 + $0x100] sm:$0xff]
        %v250 = vld [vmem:[%s176 + $0x108] sm:$0xff]
        %v251 = vld [vmem:[%s176 + $0x110] sm:$0xff]
        %v252 = vld [vmem:[%s176 + $0x118] sm:$0xff]
        %v253 = vld [vmem:[%s176 + $0x120] sm:$0xff]
        %v254 = vld [vmem:[%s176 + $0x128] sm:$0xff]
        %v255 = vld [vmem:[%s176 + $0x130] sm:$0xff]
        %v256 = vld [vmem:[%s176 + $0x138] sm:$0xff]
        %v257 = vld [vmem:[%s176 + $0x140] sm:$0xff]
        %v258 = vld [vmem:[%s176 + $0x148] sm:$0xff]
        %v259 = vld [vmem:[%s176 + $0x150] sm:$0xff]
        %v260 = vld [vmem:[%s176 + $0x158] sm:$0xff]
        %v261 = vld [vmem:[%s176 + $0x160] sm:$0xff]
        %v262 = vld [vmem:[%s176 + $0x168] sm:$0xff]
        %v263 = vld [vmem:[%s176 + $0x170] sm:$0xff]
        %v264 = vld [vmem:[%s176 + $0x178] sm:$0xff]
        %v265 = vld [vmem:[%s176 + $0x180] sm:$0xff]
        %v266 = vld [vmem:[%s176 + $0x188] sm:$0xff]
        %v267 = vld [vmem:[%s176 + $0x190] sm:$0xff]
        %v268 = vld [vmem:[%s176 + $0x198] sm:$0xff]
        %v269 = vld [vmem:[%s176 + $0x1a0] sm:$0xff]
        %v270 = vld [vmem:[%s176 + $0x1a8] sm:$0xff]
        %v271 = vld [vmem:[%s176 + $0x1b0] sm:$0xff]
        %v272 = vld [vmem:[%s176 + $0x1b8] sm:$0xff]
        %v273 = vld [vmem:[%s176 + $0x1c0] sm:$0xff]
        %v274 = vld [vmem:[%s176 + $0x1c8] sm:$0xff]
        %v275 = vld [vmem:[%s176 + $0x1d0] sm:$0xff]
        %v276 = vld [vmem:[%s176 + $0x1d8] sm:$0xff]
        %v277 = vld [vmem:[%s176 + $0x1e0] sm:$0xff]
        %v278 = vld [vmem:[%s176 + $0x1e8] sm:$0xff]
        %v279 = vld [vmem:[%s176 + $0x1f0] sm:$0xff]
        %v280 = vld [vmem:[%s176 + $0x1f8] sm:$0xff]
        %v281 = vld [vmem:[%s204] sm:$0xff]
        %v282 = vlaneseq
        %v283 = vshrl.u32 %v282, 7
        %v284 = vsub.s32 0, %v283
        %v285 = vrot.slane %v281, %v284
        %287 = vbcast.lane.b32.xlu0 %v285, 256
        %v288 = vpop.permute.xlu0 %287
        %s290 = sor.u32 256, 8
        %291 = vbcast.lane.b32.xlu0 %v285, %s290
        %v292 = vpop.permute.xlu0 %291
        %v293 = vlaneseq
        %v294 = vshrl.u32 %v293, 7
        %v295 = vsub.s32 1, %v294
        %v296 = vrot.slane %v281, %v295
        %298 = vbcast.lane.b32.xlu0 %v296, 256
        %v299 = vpop.permute.xlu0 %298
        %s301 = sor.u32 256, 8
        %302 = vbcast.lane.b32.xlu0 %v296, %s301
        %v303 = vpop.permute.xlu0 %302
        %v304 = vlaneseq
        %v305 = vshrl.u32 %v304, 7
        %v306 = vsub.s32 2, %v305
        %v307 = vrot.slane %v281, %v306
        %309 = vbcast.lane.b32.xlu0 %v307, 256
        %v310 = vpop.permute.xlu0 %309
        %s312 = sor.u32 256, 8
        %313 = vbcast.lane.b32.xlu0 %v307, %s312
        %v314 = vpop.permute.xlu0 %313
        %v315 = vlaneseq
        %v316 = vshrl.u32 %v315, 7
        %v317 = vsub.s32 3, %v316
        %v318 = vrot.slane %v281, %v317
        %320 = vbcast.lane.b32.xlu0 %v318, 256
        %v321 = vpop.permute.xlu0 %320
        %s323 = sor.u32 256, 8
        %324 = vbcast.lane.b32.xlu0 %v318, %s323
        %v325 = vpop.permute.xlu0 %324
        %v326 = vlaneseq
        %v327 = vshrl.u32 %v326, 7
        %v328 = vsub.s32 4, %v327
        %v329 = vrot.slane %v281, %v328
        %331 = vbcast.lane.b32.xlu0 %v329, 256
        %v332 = vpop.permute.xlu0 %331
        %s334 = sor.u32 256, 8
        %335 = vbcast.lane.b32.xlu0 %v329, %s334
        %v336 = vpop.permute.xlu0 %335
        %v337 = vlaneseq
        %v338 = vshrl.u32 %v337, 7
        %v339 = vsub.s32 5, %v338
        %v340 = vrot.slane %v281, %v339
        %342 = vbcast.lane.b32.xlu0 %v340, 256
        %v343 = vpop.permute.xlu0 %342
        %s345 = sor.u32 256, 8
        %346 = vbcast.lane.b32.xlu0 %v340, %s345
        %v347 = vpop.permute.xlu0 %346
        %v348 = vlaneseq
        %v349 = vshrl.u32 %v348, 7
        %v350 = vsub.s32 6, %v349
        %v351 = vrot.slane %v281, %v350
        %353 = vbcast.lane.b32.xlu0 %v351, 256
        %v354 = vpop.permute.xlu0 %353
        %s356 = sor.u32 256, 8
        %357 = vbcast.lane.b32.xlu0 %v351, %s356
        %v358 = vpop.permute.xlu0 %357
        %v359 = vlaneseq
        %v360 = vshrl.u32 %v359, 7
        %v361 = vsub.s32 7, %v360
        %v362 = vrot.slane %v281, %v361
        %364 = vbcast.lane.b32.xlu0 %v362, 256
        %v365 = vpop.permute.xlu0 %364
        %s367 = sor.u32 256, 8
        %368 = vbcast.lane.b32.xlu0 %v362, %s367
        %v369 = vpop.permute.xlu0 %368
        %v370 = vmul.f32 %v217, %v288
        %v371 = vmul.f32 %v218, %v288
        %v372 = vmul.f32 %v219, %v288
        %v373 = vmul.f32 %v220, %v288
        %v374 = vmul.f32 %v221, %v292
        %v375 = vmul.f32 %v222, %v292
        %v376 = vmul.f32 %v223, %v292
        %v377 = vmul.f32 %v224, %v292
        %v378 = vmul.f32 %v225, %v299
        %v379 = vmul.f32 %v226, %v299
        %v380 = vmul.f32 %v227, %v299
        %v381 = vmul.f32 %v228, %v299
        %v382 = vmul.f32 %v229, %v303
        %v383 = vmul.f32 %v230, %v303
        %v384 = vmul.f32 %v231, %v303
        %v385 = vmul.f32 %v232, %v303
        %v386 = vmul.f32 %v233, %v310
        %v387 = vmul.f32 %v234, %v310
        %v388 = vmul.f32 %v235, %v310
        %v389 = vmul.f32 %v236, %v310
        %v390 = vmul.f32 %v237, %v314
        %v391 = vmul.f32 %v238, %v314
        %v392 = vmul.f32 %v239, %v314
        %v393 = vmul.f32 %v240, %v314
        %v394 = vmul.f32 %v241, %v321
        %v395 = vmul.f32 %v242, %v321
        %v396 = vmul.f32 %v243, %v321
        %v397 = vmul.f32 %v244, %v321
        %v398 = vmul.f32 %v245, %v325
        %v399 = vmul.f32 %v246, %v325
        %v400 = vmul.f32 %v247, %v325
        %v401 = vmul.f32 %v248, %v325
        %v402 = vmul.f32 %v249, %v332
        %v403 = vmul.f32 %v250, %v332
        %v404 = vmul.f32 %v251, %v332
        %v405 = vmul.f32 %v252, %v332
        %v406 = vmul.f32 %v253, %v336
        %v407 = vmul.f32 %v254, %v336
        %v408 = vmul.f32 %v255, %v336
        %v409 = vmul.f32 %v256, %v336
        %v410 = vmul.f32 %v257, %v343
        %v411 = vmul.f32 %v258, %v343
        %v412 = vmul.f32 %v259, %v343
        %v413 = vmul.f32 %v260, %v343
        %v414 = vmul.f32 %v261, %v347
        %v415 = vmul.f32 %v262, %v347
        %v416 = vmul.f32 %v263, %v347
        %v417 = vmul.f32 %v264, %v347
        %v418 = vmul.f32 %v265, %v354
        %v419 = vmul.f32 %v266, %v354
        %v420 = vmul.f32 %v267, %v354
        %v421 = vmul.f32 %v268, %v354
        %v422 = vmul.f32 %v269, %v358
        %v423 = vmul.f32 %v270, %v358
        %v424 = vmul.f32 %v271, %v358
        %v425 = vmul.f32 %v272, %v358
        %v426 = vmul.f32 %v273, %v365
        %v427 = vmul.f32 %v274, %v365
        %v428 = vmul.f32 %v275, %v365
        %v429 = vmul.f32 %v276, %v365
        %v430 = vmul.f32 %v277, %v369
        %v431 = vmul.f32 %v278, %v369
        %v432 = vmul.f32 %v279, %v369
        %v433 = vmul.f32 %v280, %v369
        %434 = vst [vmem:[%s200] sm:$0xff] %v370
        %435 = vst [vmem:[%s200 + $0x8] sm:$0xff] %v371
        %436 = vst [vmem:[%s200 + $0x10] sm:$0xff] %v372
        %437 = vst [vmem:[%s200 + $0x18] sm:$0xff] %v373
        %438 = vst [vmem:[%s200 + $0x20] sm:$0xff] %v374
        %439 = vst [vmem:[%s200 + $0x28] sm:$0xff] %v375
        %440 = vst [vmem:[%s200 + $0x30] sm:$0xff] %v376
        %441 = vst [vmem:[%s200 + $0x38] sm:$0xff] %v377
        %442 = vst [vmem:[%s200 + $0x40] sm:$0xff] %v378
        %443 = vst [vmem:[%s200 + $0x48] sm:$0xff] %v379
        %444 = vst [vmem:[%s200 + $0x50] sm:$0xff] %v380
        %445 = vst [vmem:[%s200 + $0x58] sm:$0xff] %v381
        %446 = vst [vmem:[%s200 + $0x60] sm:$0xff] %v382
        %447 = vst [vmem:[%s200 + $0x68] sm:$0xff] %v383
        %448 = vst [vmem:[%s200 + $0x70] sm:$0xff] %v384
        %449 = vst [vmem:[%s200 + $0x78] sm:$0xff] %v385
        %450 = vst [vmem:[%s200 + $0x80] sm:$0xff] %v386
        %451 = vst [vmem:[%s200 + $0x88] sm:$0xff] %v387
        %452 = vst [vmem:[%s200 + $0x90] sm:$0xff] %v388
        %453 = vst [vmem:[%s200 + $0x98] sm:$0xff] %v389
        %454 = vst [vmem:[%s200 + $0xa0] sm:$0xff] %v390
        %455 = vst [vmem:[%s200 + $0xa8] sm:$0xff] %v391
        %456 = vst [vmem:[%s200 + $0xb0] sm:$0xff] %v392
        %457 = vst [vmem:[%s200 + $0xb8] sm:$0xff] %v393
        %458 = vst [vmem:[%s200 + $0xc0] sm:$0xff] %v394
        %459 = vst [vmem:[%s200 + $0xc8] sm:$0xff] %v395
        %460 = vst [vmem:[%s200 + $0xd0] sm:$0xff] %v396
        %461 = vst [vmem:[%s200 + $0xd8] sm:$0xff] %v397
        %462 = vst [vmem:[%s200 + $0xe0] sm:$0xff] %v398
        %463 = vst [vmem:[%s200 + $0xe8] sm:$0xff] %v399
        %464 = vst [vmem:[%s200 + $0xf0] sm:$0xff] %v400
        %465 = vst [vmem:[%s200 + $0xf8] sm:$0xff] %v401
        %466 = vst [vmem:[%s200 + $0x100] sm:$0xff] %v402
        %467 = vst [vmem:[%s200 + $0x108] sm:$0xff] %v403
        %468 = vst [vmem:[%s200 + $0x110] sm:$0xff] %v404
        %469 = vst [vmem:[%s200 + $0x118] sm:$0xff] %v405
        %470 = vst [vmem:[%s200 + $0x120] sm:$0xff] %v406
        %471 = vst [vmem:[%s200 + $0x128] sm:$0xff] %v407
        %472 = vst [vmem:[%s200 + $0x130] sm:$0xff] %v408
        %473 = vst [vmem:[%s200 + $0x138] sm:$0xff] %v409
        %474 = vst [vmem:[%s200 + $0x140] sm:$0xff] %v410
        %475 = vst [vmem:[%s200 + $0x148] sm:$0xff] %v411
        %476 = vst [vmem:[%s200 + $0x150] sm:$0xff] %v412
        %477 = vst [vmem:[%s200 + $0x158] sm:$0xff] %v413
        %478 = vst [vmem:[%s200 + $0x160] sm:$0xff] %v414
        %479 = vst [vmem:[%s200 + $0x168] sm:$0xff] %v415
        %480 = vst [vmem:[%s200 + $0x170] sm:$0xff] %v416
        %481 = vst [vmem:[%s200 + $0x178] sm:$0xff] %v417
        %482 = vst [vmem:[%s200 + $0x180] sm:$0xff] %v418
        %483 = vst [vmem:[%s200 + $0x188] sm:$0xff] %v419
        %484 = vst [vmem:[%s200 + $0x190] sm:$0xff] %v420
        %485 = vst [vmem:[%s200 + $0x198] sm:$0xff] %v421
        %486 = vst [vmem:[%s200 + $0x1a0] sm:$0xff] %v422
        %487 = vst [vmem:[%s200 + $0x1a8] sm:$0xff] %v423
        %488 = vst [vmem:[%s200 + $0x1b0] sm:$0xff] %v424
        %489 = vst [vmem:[%s200 + $0x1b8] sm:$0xff] %v425
        %490 = vst [vmem:[%s200 + $0x1c0] sm:$0xff] %v426
        %491 = vst [vmem:[%s200 + $0x1c8] sm:$0xff] %v427
        %492 = vst [vmem:[%s200 + $0x1d0] sm:$0xff] %v428
        %493 = vst [vmem:[%s200 + $0x1d8] sm:$0xff] %v429
        %494 = vst [vmem:[%s200 + $0x1e0] sm:$0xff] %v430
        %495 = vst [vmem:[%s200 + $0x1e8] sm:$0xff] %v431
        %496 = vst [vmem:[%s200 + $0x1f0] sm:$0xff] %v432
        %497 = vst [vmem:[%s200 + $0x1f8] sm:$0xff] %v433
        %s498 = sand.u32 %s95, 1
        %s499 = scalar_lea.sflag [#allocation4], %s498
        %s500 = sand.u32 %s95, 1
        %s501 = smul.addr %s500, 512
        %s502 = scalar_lea.vmem [#allocation5], %s501
        // Predicated region
        $region33: #{eica_forward.3} parent=27 // pred_check
          %p503 = pneg %p105
        $region34: #{eica_forward.3} parent=27 // pred_check_branch
          %505 = sbr.rel (%p503) target = $region36
        $region35: #{eica_forward.3} parent=27 // pred_region
          %s506 = smul.u32 8, %s23
          %s507 = smul.u32 4, %s24
          %s508 = ssub.s32 10, %s507
          %p509 = scmp.lt.s32.totalorder %s508, 4
          %s510 = scalar_select %p509, %s508, 4
          %s511 = smul.u32 2048, %s510
          %s513 = ssub.s32 8192, %s511
          %514 = vsyncadd %s499, %s513
          %p515 = scmp.ne.s32.totalorder 0, %s511
          %s516 = smul.addr %s506, 20
          %s517 = sadd.s32 %s507, %s516
          %s518 = smul.addr %s517, 128
          %s519 = scalar_lea.hbm %s2, %s518
          %s520 = smul.u32 %s510, 8
          %s521 = smul.u32 %s520, 16
          %s522 = sshll.u32 %s502, 4
          %s523 = int_to_ptr.vmem [resolvable:$true] %s522
          %s524 = sshll.u32 %s521, 4
          %528 = dma.vmem_to_hbm [thread:$0]  (%p515), %s523, %s524, %s519, %s499, 512, 1280, %s520
        $region36: #{eica_forward.3} parent=27 // pred_fallthru
          _
      $region28: #{eica_forward.3} parent=5 // pred_fallthru
        _
      %p529 = scmp.le.s32.totalorder 2, %s14
      // Predicated region
      $region37: #{eica_forward.3} parent=5 // pred_check
        %p530 = pneg %p529
      $region38: #{eica_forward.3} parent=5 // pred_check_branch
        %532 = sbr.rel (%p530) target = $region40
      $region39: #{eica_forward.3} parent=5 // pred_region
        %s533 = ssub.s32 %s14, 2
        // Predicated region
        $region41: #{eica_forward.3} parent=39 // pred_check
          %p534 = pneg %p111
        $region42: #{eica_forward.3} parent=39 // pred_check_branch
          %536 = sbr.rel (%p534) target = $region44
        $region43: #{eica_forward.3} parent=39 // pred_region
          %s537 = sand.u32 %s96, 1
          %s538 = scalar_lea.sflag [#allocation4], %s537
          %s539 = sand.u32 %s96, 1
          %s540 = smul.addr %s539, 512
          %s541 = scalar_lea.vmem [#allocation5], %s540
          %542 = dma.done %s538, 8192
        $region44: #{eica_forward.3} parent=39 // pred_fallthru
          _
      $region40: #{eica_forward.3} parent=5 // pred_fallthru
        _
    $region6: #{eica_forward.3} parent=1 // loop_footer
      %s18 = sadd.s32 1, %s14
    $region7: #{eica_forward.3} parent=1 // loop_footer_branch
      %13 = sbr.rel target = $region3
    $region8: #{eica_forward.3} parent=1 // loop_exit
      _
    %543 = vsyncpa [#allocation3], 1
    %s544 = scalar_lea.sflag [#allocation3], 1
    %545 = vsyncpa %s544, 1
    %546 = vsyncpa [#allocation4], 1
    %s547 = scalar_lea.sflag [#allocation4], 1
    %548 = vsyncpa %s547, 1

// kernel: eica_forward.2
$region0: #{eica_forward.2}
  #allocation0 [shape = 'u32[]', space=smem, size = 0x4, offset = 0x4, fixed_abs, tag = 'smem constant byte address 0x4 - core index']
  #allocation1 [shape = 'u32[144,128]{1,0:T(1,128)}', space=vmem, size = 0x12000, scoped, tag = 'internal scratch']
  #allocation2 [shape = 'f32[8,16,128]{2,1,0:T(8,128)}', space=vmem, size = 0x10000, scoped, tag = 'scratch operand']
  %s0 = inlined_call_operand.hbm [shape: f32[16,16,1200], index: 0, kind: input, shape index: {}]
  %s1 = inlined_call_operand.vmem [shape: f32[16,16], index: 1, kind: input, shape index: {}]
  %s2 = inlined_call_operand.hbm [shape: f32[2,16], index: 2, kind: input, shape index: {}]
  %s3 = inlined_call_operand.vmem [shape: f32[16,16], index: 3, kind: output, shape index: {}]
  %s4 = sld [smem:[#allocation0]]
  $region65: #{eica_forward.2} parent=0
    _
  %s6 = ssub.s32 1, %s4
  %s7 = scalar_select 0, %s6, %s4
  $region1: #{eica_forward.2} parent=0
    #allocation3 [shape = 'u8[524288]{0}', space=vmem, size = 0x80000, scoped, tag = 'input window, operand 0']
    #allocation4 [shape = 's32[2]{0}', space=sflag, size = 0x8, scoped, tag = 'scoped memory for eica_forward.2']
    #allocation5 [shape = 'u8[1024]{0}', space=vmem, size = 0x400, scoped, tag = 'input window, operand 2, single buffered']
    #allocation6 [shape = 's32[1]{0}', space=sflag, size = 0x4, scoped, tag = 'scoped memory for eica_forward.2']
    %8 = vsyncpa [#allocation4], 0
    %s9 = scalar_lea.sflag [#allocation4], 1
    %10 = vsyncpa %s9, 0
    %11 = vsyncpa [#allocation6], 0
    loop: start=0, step=1, limit=8
    $region2: #{eica_forward.2} parent=1 // loop_pre_header
      _
    $region3: #{eica_forward.2} parent=1 // loop_header
      %s13 = sphi 0, %s17
      %p14 = scmp.ge.s32.totalorder %s13, 8
      %s20 = sphi 0, %s32
      %s21 = sphi 0, %s28
      %s22 = sphi 0, %s20
      %s23 = sphi 0, %s21
      %s24 = sphi 0, %s22
      %s25 = sphi 0, %s23
      %s37 = sphi 0, %s39
      %s40 = sphi 0, %s37
      %s41 = sphi 0, %s40
      %s57 = sphi 0, %s41
      %s61 = sphi 0, %s61
      %s63 = sphi 0, %s61
      %s64 = sphi 0, %s63
      %s78 = sphi 0, %s64
      %s82 = sphi 0, %s82
      %s84 = sphi 0, %s82
      %s85 = sphi 0, %s84
      %s99 = sphi 0, %s85
      %s105 = sphi 0, %s107
      %s108 = sphi 0, %s105
      %s109 = sphi 0, %s108
      %s125 = sphi 0, %s109
    $region4: #{eica_forward.2} parent=1 // loop_header_branch
      %16 = sbr.rel (%p14) target = $region8
    $region5: #{eica_forward.2} parent=1 // loop_body
      %s18 = ssub.s32 %s13, 1
      %s19 = ssub.s32 %s13, 2
      %s26 = sadd.s32 1, %s21
      %p27 = scmp.ge.s32.totalorder %s26, 3
      %s28 = scalar_select %p27, 0, %s26
      %s29 = sadd.s32 1, %s20
      %s30 = scalar_select %p27, %s29, %s20
      %p31 = scmp.ge.s32.totalorder %s30, 2
      %s32 = scalar_select %p31, 0, %s30
      %s33 = ssub.s32 %s20, %s32
      %s34 = ssub.s32 %s21, %s28
      %s35 = sor.u32 %s33, %s34
      %p36 = scmp.eq.s32.totalorder %s35, 0
      %s38 = sadd.s32 %s37, 1
      %s39 = scalar_select %p36, %s37, %s38
      %p42 = pneg %p36
      %p43 = scmp.eq.s32.totalorder %s13, 5
      %p44 = por %p42, %p43
      %p45 = scmp.ne.s32.totalorder %s37, %s40
      %p46 = scmp.eq.s32.totalorder %s13, 0
      %p47 = por %p45, %p46
      %p48 = scmp.ne.s32.totalorder %s37, %s40
      %p49 = scmp.eq.s32.totalorder %s18, 5
      %p50 = por %p48, %p49
      %p51 = scmp.ne.s32.totalorder %s40, %s41
      %p52 = scmp.eq.s32.totalorder %s18, 0
      %p53 = por %p51, %p52
      %p54 = scmp.ne.s32.totalorder %s40, %s41
      %p55 = scmp.eq.s32.totalorder %s19, 5
      %p56 = por %p54, %p55
      %p58 = scmp.ne.s32.totalorder %s41, %s57
      %p59 = scmp.eq.s32.totalorder %s19, 0
      %p60 = por %p58, %p59
      %s62 = sadd.s32 %s61, 1
      %p65 = scmp.eq.s32.totalorder %s13, 5
      %p66 = scmp.ne.s32.totalorder %s61, %s63
      %p67 = scmp.eq.s32.totalorder %s13, 0
      %p68 = por %p66, %p67
      %p69 = scmp.ne.s32.totalorder %s61, %s63
      %p70 = scmp.eq.s32.totalorder %s18, 5
      %p71 = por %p69, %p70
      %p72 = scmp.ne.s32.totalorder %s63, %s64
      %p73 = scmp.eq.s32.totalorder %s18, 0
      %p74 = por %p72, %p73
      %p75 = scmp.ne.s32.totalorder %s63, %s64
      %p76 = scmp.eq.s32.totalorder %s19, 5
      %p77 = por %p75, %p76
      %p79 = scmp.ne.s32.totalorder %s64, %s78
      %p80 = scmp.eq.s32.totalorder %s19, 0
      %p81 = por %p79, %p80
      %s83 = sadd.s32 %s82, 1
      %p86 = scmp.eq.s32.totalorder %s13, 5
      %p87 = scmp.ne.s32.totalorder %s82, %s84
      %p88 = scmp.eq.s32.totalorder %s13, 0
      %p89 = por %p87, %p88
      %p90 = scmp.ne.s32.totalorder %s82, %s84
      %p91 = scmp.eq.s32.totalorder %s18, 5
      %p92 = por %p90, %p91
      %p93 = scmp.ne.s32.totalorder %s84, %s85
      %p94 = scmp.eq.s32.totalorder %s18, 0
      %p95 = por %p93, %p94
      %p96 = scmp.ne.s32.totalorder %s84, %s85
      %p97 = scmp.eq.s32.totalorder %s19, 5
      %p98 = por %p96, %p97
      %p100 = scmp.ne.s32.totalorder %s85, %s99
      %p101 = scmp.eq.s32.totalorder %s19, 0
      %p102 = por %p100, %p101
      %s103 = ssub.s32 %s20, %s32
      %p104 = scmp.eq.s32.totalorder %s103, 0
      %s106 = sadd.s32 %s105, 1
      %s107 = scalar_select %p104, %s105, %s106
      %p110 = pneg %p104
      %p111 = scmp.eq.s32.totalorder %s13, 5
      %p112 = por %p110, %p111
      %p113 = scmp.ne.s32.totalorder %s105, %s108
      %p114 = scmp.eq.s32.totalorder %s13, 0
      %p115 = por %p113, %p114
      %p116 = scmp.ne.s32.totalorder %s105, %s108
      %p117 = scmp.eq.s32.totalorder %s18, 5
      %p118 = por %p116, %p117
      %p119 = scmp.ne.s32.totalorder %s108, %s109
      %p120 = scmp.eq.s32.totalorder %s18, 0
      %p121 = por %p119, %p120
      %p122 = scmp.ne.s32.totalorder %s108, %s109
      %p123 = scmp.eq.s32.totalorder %s19, 5
      %p124 = por %p122, %p123
      %p126 = scmp.ne.s32.totalorder %s109, %s125
      %p127 = scmp.eq.s32.totalorder %s19, 0
      %p128 = por %p126, %p127
      %p129 = scmp.le.s32.totalorder 1, %s13
      %p130 = scmp.lt.s32.totalorder %s13, 7
      %p131 = pnand %p129, %p130
      %p132 = pneg %p131
      // Predicated region
      $region9: #{eica_forward.2} parent=5 // pred_check
        _
      $region10: #{eica_forward.2} parent=5 // pred_check_branch
        %134 = sbr.rel (%p131) target = $region12
      $region11: #{eica_forward.2} parent=5 // pred_region
        %s135 = ssub.s32 %s13, 1
        // Predicated region
        $region13: #{eica_forward.2} parent=11 // pred_check
          %p136 = pneg %p74
        $region14: #{eica_forward.2} parent=11 // pred_check_branch
          %138 = sbr.rel (%p136) target = $region16
        $region15: #{eica_forward.2} parent=11 // pred_region
          _
        $region16: #{eica_forward.2} parent=11 // pred_fallthru
          _
        // Predicated region
        $region17: #{eica_forward.2} parent=11 // pred_check
          %p139 = pneg %p95
        $region18: #{eica_forward.2} parent=11 // pred_check_branch
          %141 = sbr.rel (%p139) target = $region20
        $region19: #{eica_forward.2} parent=11 // pred_region
          %s143 = ssub.s32 32, 32
          %144 = vsyncadd [#allocation6], %s143
          %s146 = sshll.u32 [#allocation5], 4
          %s147 = int_to_ptr.vmem [resolvable:$true] %s146
          %149 = dma.hbm_to_vmem [thread:$0]  %s2, 32, %s147, [#allocation6]
        $region20: #{eica_forward.2} parent=11 // pred_fallthru
          _
      $region12: #{eica_forward.2} parent=5 // pred_fallthru
        _
      %p150 = scmp.lt.s32.totalorder %s13, 6
      // Predicated region
      $region21: #{eica_forward.2} parent=5 // pred_check
        %p151 = pneg %p150
      $region22: #{eica_forward.2} parent=5 // pred_check_branch
        %153 = sbr.rel (%p151) target = $region24
      $region23: #{eica_forward.2} parent=5 // pred_region
        // Predicated region
        $region25: #{eica_forward.2} parent=23 // pred_check
          %p154 = pneg %p47
        $region26: #{eica_forward.2} parent=23 // pred_check_branch
          %156 = sbr.rel (%p154) target = $region28
        $region27: #{eica_forward.2} parent=23 // pred_region
          %s157 = sand.u32 %s37, 1
          %s158 = scalar_lea.sflag [#allocation4], %s157
          %s159 = sand.u32 %s37, 1
          %s160 = smul.addr %s159, 512
          %s161 = scalar_lea.vmem [#allocation3], %s160
          %s162 = smul.u32 8, %s20
          %s163 = smul.u32 4, %s21
          %s164 = ssub.s32 10, %s163
          %p165 = scmp.lt.s32.totalorder %s164, 4
          %s166 = scalar_select %p165, %s164, 4
          %s167 = smul.u32 2048, %s166
          %s169 = ssub.s32 8192, %s167
          %170 = vsyncadd %s158, %s169
          %p171 = scmp.ne.s32.totalorder 0, %s167
          %s172 = smul.addr %s162, 20
          %s173 = sadd.s32 %s163, %s172
          %s174 = smul.addr %s173, 128
          %s175 = scalar_lea.hbm %s0, %s174
          %s176 = smul.u32 %s166, 8
          %s177 = smul.u32 %s176, 16
          %s178 = sshll.u32 %s161, 4
          %s179 = int_to_ptr.vmem [resolvable:$true] %s178
          %s180 = sshll.u32 %s177, 4
          %184 = dma.hbm_to_vmem [thread:$0]  (%p171), %s175, %s180, %s179, %s158, 1280, 512, %s176
        $region28: #{eica_forward.2} parent=23 // pred_fallthru
          _
      $region24: #{eica_forward.2} parent=5 // pred_fallthru
        _
      %p185 = scmp.le.s32.totalorder 1, %s13
      %p186 = scmp.lt.s32.totalorder %s13, 7
      %p187 = pnand %p185, %p186
      %p188 = pneg %p187
      // Predicated region
      $region29: #{eica_forward.2} parent=5 // pred_check
        _
      $region30: #{eica_forward.2} parent=5 // pred_check_branch
        %190 = sbr.rel (%p187) target = $region32
      $region31: #{eica_forward.2} parent=5 // pred_region
        %s191 = ssub.s32 %s13, 1
        %s192 = sand.u32 %s40, 1
        %s193 = scalar_lea.sflag [#allocation4], %s192
        %s194 = sand.u32 %s40, 1
        %s195 = smul.addr %s194, 512
        %s196 = scalar_lea.vmem [#allocation3], %s195
        // Predicated region
        $region33: #{eica_forward.2} parent=31 // pred_check
          %p197 = pneg %p53
        $region34: #{eica_forward.2} parent=31 // pred_check_branch
          %199 = sbr.rel (%p197) target = $region36
        $region35: #{eica_forward.2} parent=31 // pred_region
          %200 = dma.done %s193, 8192
        $region36: #{eica_forward.2} parent=31 // pred_fallthru
          _
        // Predicated region
        $region37: #{eica_forward.2} parent=31 // pred_check
          %p201 = pneg %p95
        $region38: #{eica_forward.2} parent=31 // pred_check_branch
          %203 = sbr.rel (%p201) target = $region40
        $region39: #{eica_forward.2} parent=31 // pred_region
          %204 = dma.done [#allocation6], 32
        $region40: #{eica_forward.2} parent=31 // pred_fallthru
          _
        %s205 = sand.u32 %s40, 1
        %s206 = scalar_lea.sflag [#allocation4], %s205
        %s207 = sand.u32 %s40, 1
        %s208 = smul.addr %s207, 512
        %s209 = scalar_lea.vmem [#allocation3], %s208
        %p210 = pneg %p53
        %p211 = pneg %p50
        %p212 = pneg %p74
        %p213 = pneg %p71
        %p214 = pneg %p95
        %p215 = pneg %p92
        %p216 = pneg %p121
        %p217 = pneg %p118
        %p218 = scmp.lt.s32.totalorder %s22, 1
        %s219 = scalar_select %p218, %s22, 1
        %s220 = smul.addr %s219, 8
        %s221 = scalar_lea.vmem %s3, %s220
        %s222 = smul.u32 8, %s22
        %s223 = smul.u32 4, %s23
        %s224 = ssub.s32 10, %s223
        %p225 = scmp.lt.s32.totalorder %s224, 4
        %s226 = scalar_select %p225, %s224, 4
        %s227 = smul.u32 2048, %s226
        %p228 = scmp.lt.s32.totalorder %s22, 1
        %s229 = scalar_select %p228, %s22, 1
        %s230 = smul.addr %s229, 8
        %s231 = scalar_lea.vmem %s3, %s230
        %p232 = scmp.eq.s32.totalorder %s23, 0
        // Predicated region
        $region41: #{eica_forward.2} parent=31 // pred_check
          %p233 = pneg %p232
        $region42: #{eica_forward.2} parent=31 // pred_check_branch
          %235 = sbr.rel (%p233) target = $region44
        $region43: #{eica_forward.2} parent=31 // pred_region
          %236 = vst [vmem:[#allocation2] sm:$0xff] 0.0
          %237 = vst [vmem:[#allocation2 + $0x8] sm:$0xff] 0.0
          %238 = vst [vmem:[#allocation2 + $0x10] sm:$0xff] 0.0
          %239 = vst [vmem:[#allocation2 + $0x18] sm:$0xff] 0.0
          %240 = vst [vmem:[#allocation2 + $0x20] sm:$0xff] 0.0
          %241 = vst [vmem:[#allocation2 + $0x28] sm:$0xff] 0.0
          %242 = vst [vmem:[#allocation2 + $0x30] sm:$0xff] 0.0
          %243 = vst [vmem:[#allocation2 + $0x38] sm:$0xff] 0.0
          %244 = vst [vmem:[#allocation2 + $0x40] sm:$0xff] 0.0
          %245 = vst [vmem:[#allocation2 + $0x48] sm:$0xff] 0.0
          %246 = vst [vmem:[#allocation2 + $0x50] sm:$0xff] 0.0
          %247 = vst [vmem:[#allocation2 + $0x58] sm:$0xff] 0.0
          %248 = vst [vmem:[#allocation2 + $0x60] sm:$0xff] 0.0
          %249 = vst [vmem:[#allocation2 + $0x68] sm:$0xff] 0.0
          %250 = vst [vmem:[#allocation2 + $0x70] sm:$0xff] 0.0
          %251 = vst [vmem:[#allocation2 + $0x78] sm:$0xff] 0.0
        $region44: #{eica_forward.2} parent=31 // pred_fallthru
          _
        %p252 = scmp.lt.s32.totalorder %s23, 2
        // Predicated region
        $region45: #{eica_forward.2} parent=31 // pred_check
          %p253 = pneg %p252
        $region46: #{eica_forward.2} parent=31 // pred_check_branch
          %255 = sbr.rel (%p253) target = $region48
        $region47: #{eica_forward.2} parent=31 // pred_region
          %v256 = vld [vmem:[#allocation2] sm:$0xff]
          %v257 = vld [vmem:[#allocation2 + $0x8] sm:$0xff]
          %v258 = vld [vmem:[#allocation2 + $0x10] sm:$0xff]
          %v259 = vld [vmem:[#allocation2 + $0x18] sm:$0xff]
          %v260 = vld [vmem:[#allocation2 + $0x20] sm:$0xff]
          %v261 = vld [vmem:[#allocation2 + $0x28] sm:$0xff]
          %v262 = vld [vmem:[#allocation2 + $0x30] sm:$0xff]
          %v263 = vld [vmem:[#allocation2 + $0x38] sm:$0xff]
          %v264 = vld [vmem:[#allocation2 + $0x40] sm:$0xff]
          %v265 = vld [vmem:[#allocation2 + $0x48] sm:$0xff]
          %v266 = vld [vmem:[#allocation2 + $0x50] sm:$0xff]
          %v267 = vld [vmem:[#allocation2 + $0x58] sm:$0xff]
          %v268 = vld [vmem:[#allocation2 + $0x60] sm:$0xff]
          %v269 = vld [vmem:[#allocation2 + $0x68] sm:$0xff]
          %v270 = vld [vmem:[#allocation2 + $0x70] sm:$0xff]
          %v271 = vld [vmem:[#allocation2 + $0x78] sm:$0xff]
          %v272 = vld [vmem:[%s196] sm:$0xff]
          %v273 = vld [vmem:[%s196 + $0x20] sm:$0xff]
          %v274 = vld [vmem:[%s196 + $0x40] sm:$0xff]
          %v275 = vld [vmem:[%s196 + $0x60] sm:$0xff]
          %v276 = vld [vmem:[%s196 + $0x80] sm:$0xff]
          %v277 = vld [vmem:[%s196 + $0xa0] sm:$0xff]
          %v278 = vld [vmem:[%s196 + $0xc0] sm:$0xff]
          %v279 = vld [vmem:[%s196 + $0xe0] sm:$0xff]
          %v280 = vld [vmem:[%s196 + $0x100] sm:$0xff]
          %v281 = vld [vmem:[%s196 + $0x120] sm:$0xff]
          %v282 = vld [vmem:[%s196 + $0x140] sm:$0xff]
          %v283 = vld [vmem:[%s196 + $0x160] sm:$0xff]
          %v284 = vld [vmem:[%s196 + $0x180] sm:$0xff]
          %v285 = vld [vmem:[%s196 + $0x1a0] sm:$0xff]
          %v286 = vld [vmem:[%s196 + $0x1c0] sm:$0xff]
          %v287 = vld [vmem:[%s196 + $0x1e0] sm:$0xff]
          %v288 = vadd.f32 %v256, %v272
          %v289 = vadd.f32 %v257, %v273
          %v290 = vadd.f32 %v258, %v274
          %v291 = vadd.f32 %v259, %v275
          %v292 = vadd.f32 %v260, %v276
          %v293 = vadd.f32 %v261, %v277
          %v294 = vadd.f32 %v262, %v278
          %v295 = vadd.f32 %v263, %v279
          %v296 = vadd.f32 %v264, %v280
          %v297 = vadd.f32 %v265, %v281
          %v298 = vadd.f32 %v266, %v282
          %v299 = vadd.f32 %v267, %v283
          %v300 = vadd.f32 %v268, %v284
          %v301 = vadd.f32 %v269, %v285
          %v302 = vadd.f32 %v270, %v286
          %v303 = vadd.f32 %v271, %v287
          %v304 = vld [vmem:[%s196 + $0x8] sm:$0xff]
          %v305 = vld [vmem:[%s196 + $0x28] sm:$0xff]
          %v306 = vld [vmem:[%s196 + $0x48] sm:$0xff]
          %v307 = vld [vmem:[%s196 + $0x68] sm:$0xff]
          %v308 = vld [vmem:[%s196 + $0x88] sm:$0xff]
          %v309 = vld [vmem:[%s196 + $0xa8] sm:$0xff]
          %v310 = vld [vmem:[%s196 + $0xc8] sm:$0xff]
          %v311 = vld [vmem:[%s196 + $0xe8] sm:$0xff]
          %v312 = vld [vmem:[%s196 + $0x108] sm:$0xff]
          %v313 = vld [vmem:[%s196 + $0x128] sm:$0xff]
          %v314 = vld [vmem:[%s196 + $0x148] sm:$0xff]
          %v315 = vld [vmem:[%s196 + $0x168] sm:$0xff]
          %v316 = vld [vmem:[%s196 + $0x188] sm:$0xff]
          %v317 = vld [vmem:[%s196 + $0x1a8] sm:$0xff]
          %v318 = vld [vmem:[%s196 + $0x1c8] sm:$0xff]
          %v319 = vld [vmem:[%s196 + $0x1e8] sm:$0xff]
          %v320 = vadd.f32 %v288, %v304
          %v321 = vadd.f32 %v289, %v305
          %v322 = vadd.f32 %v290, %v306
          %v323 = vadd.f32 %v291, %v307
          %v324 = vadd.f32 %v292, %v308
          %v325 = vadd.f32 %v293, %v309
          %v326 = vadd.f32 %v294, %v310
          %v327 = vadd.f32 %v295, %v311
          %v328 = vadd.f32 %v296, %v312
          %v329 = vadd.f32 %v297, %v313
          %v330 = vadd.f32 %v298, %v314
          %v331 = vadd.f32 %v299, %v315
          %v332 = vadd.f32 %v300, %v316
          %v333 = vadd.f32 %v301, %v317
          %v334 = vadd.f32 %v302, %v318
          %v335 = vadd.f32 %v303, %v319
          %v336 = vld [vmem:[%s196 + $0x10] sm:$0xff]
          %v337 = vld [vmem:[%s196 + $0x30] sm:$0xff]
          %v338 = vld [vmem:[%s196 + $0x50] sm:$0xff]
          %v339 = vld [vmem:[%s196 + $0x70] sm:$0xff]
          %v340 = vld [vmem:[%s196 + $0x90] sm:$0xff]
          %v341 = vld [vmem:[%s196 + $0xb0] sm:$0xff]
          %v342 = vld [vmem:[%s196 + $0xd0] sm:$0xff]
          %v343 = vld [vmem:[%s196 + $0xf0] sm:$0xff]
          %v344 = vld [vmem:[%s196 + $0x110] sm:$0xff]
          %v345 = vld [vmem:[%s196 + $0x130] sm:$0xff]
          %v346 = vld [vmem:[%s196 + $0x150] sm:$0xff]
          %v347 = vld [vmem:[%s196 + $0x170] sm:$0xff]
          %v348 = vld [vmem:[%s196 + $0x190] sm:$0xff]
          %v349 = vld [vmem:[%s196 + $0x1b0] sm:$0xff]
          %v350 = vld [vmem:[%s196 + $0x1d0] sm:$0xff]
          %v351 = vld [vmem:[%s196 + $0x1f0] sm:$0xff]
          %v352 = vadd.f32 %v320, %v336
          %v353 = vadd.f32 %v321, %v337
          %v354 = vadd.f32 %v322, %v338
          %v355 = vadd.f32 %v323, %v339
          %v356 = vadd.f32 %v324, %v340
          %v357 = vadd.f32 %v325, %v341
          %v358 = vadd.f32 %v326, %v342
          %v359 = vadd.f32 %v327, %v343
          %v360 = vadd.f32 %v328, %v344
          %v361 = vadd.f32 %v329, %v345
          %v362 = vadd.f32 %v330, %v346
          %v363 = vadd.f32 %v331, %v347
          %v364 = vadd.f32 %v332, %v348
          %v365 = vadd.f32 %v333, %v349
          %v366 = vadd.f32 %v334, %v350
          %v367 = vadd.f32 %v335, %v351
          %v368 = vld [vmem:[%s196 + $0x18] sm:$0xff]
          %v369 = vld [vmem:[%s196 + $0x38] sm:$0xff]
          %v370 = vld [vmem:[%s196 + $0x58] sm:$0xff]
          %v371 = vld [vmem:[%s196 + $0x78] sm:$0xff]
          %v372 = vld [vmem:[%s196 + $0x98] sm:$0xff]
          %v373 = vld [vmem:[%s196 + $0xb8] sm:$0xff]
          %v374 = vld [vmem:[%s196 + $0xd8] sm:$0xff]
          %v375 = vld [vmem:[%s196 + $0xf8] sm:$0xff]
          %v376 = vld [vmem:[%s196 + $0x118] sm:$0xff]
          %v377 = vld [vmem:[%s196 + $0x138] sm:$0xff]
          %v378 = vld [vmem:[%s196 + $0x158] sm:$0xff]
          %v379 = vld [vmem:[%s196 + $0x178] sm:$0xff]
          %v380 = vld [vmem:[%s196 + $0x198] sm:$0xff]
          %v381 = vld [vmem:[%s196 + $0x1b8] sm:$0xff]
          %v382 = vld [vmem:[%s196 + $0x1d8] sm:$0xff]
          %v383 = vld [vmem:[%s196 + $0x1f8] sm:$0xff]
          %v384 = vadd.f32 %v352, %v368
          %v385 = vadd.f32 %v353, %v369
          %v386 = vadd.f32 %v354, %v370
          %v387 = vadd.f32 %v355, %v371
          %v388 = vadd.f32 %v356, %v372
          %v389 = vadd.f32 %v357, %v373
          %v390 = vadd.f32 %v358, %v374
          %v391 = vadd.f32 %v359, %v375
          %v392 = vadd.f32 %v360, %v376
          %v393 = vadd.f32 %v361, %v377
          %v394 = vadd.f32 %v362, %v378
          %v395 = vadd.f32 %v363, %v379
          %v396 = vadd.f32 %v364, %v380
          %v397 = vadd.f32 %v365, %v381
          %v398 = vadd.f32 %v366, %v382
          %v399 = vadd.f32 %v367, %v383
          %400 = vst [vmem:[#allocation2] sm:$0xff] %v384
          %401 = vst [vmem:[#allocation2 + $0x8] sm:$0xff] %v385
          %402 = vst [vmem:[#allocation2 + $0x10] sm:$0xff] %v386
          %403 = vst [vmem:[#allocation2 + $0x18] sm:$0xff] %v387
          %404 = vst [vmem:[#allocation2 + $0x20] sm:$0xff] %v388
          %405 = vst [vmem:[#allocation2 + $0x28] sm:$0xff] %v389
          %406 = vst [vmem:[#allocation2 + $0x30] sm:$0xff] %v390
          %407 = vst [vmem:[#allocation2 + $0x38] sm:$0xff] %v391
          %408 = vst [vmem:[#allocation2 + $0x40] sm:$0xff] %v392
          %409 = vst [vmem:[#allocation2 + $0x48] sm:$0xff] %v393
          %410 = vst [vmem:[#allocation2 + $0x50] sm:$0xff] %v394
          %411 = vst [vmem:[#allocation2 + $0x58] sm:$0xff] %v395
          %412 = vst [vmem:[#allocation2 + $0x60] sm:$0xff] %v396
          %413 = vst [vmem:[#allocation2 + $0x68] sm:$0xff] %v397
          %414 = vst [vmem:[#allocation2 + $0x70] sm:$0xff] %v398
          %415 = vst [vmem:[#allocation2 + $0x78] sm:$0xff] %v399
        $region48: #{eica_forward.2} parent=31 // pred_fallthru
          _
        %p416 = scmp.eq.s32.totalorder %s23, 2
        // Predicated region
        $region49: #{eica_forward.2} parent=31 // pred_check
          %p417 = pneg %p416
        $region50: #{eica_forward.2} parent=31 // pred_check_branch
          %419 = sbr.rel (%p417) target = $region52
        $region51: #{eica_forward.2} parent=31 // pred_region
          %v420 = vld [vmem:[#allocation2] sm:$0xff]
          %v421 = vld [vmem:[#allocation2 + $0x8] sm:$0xff]
          %v422 = vld [vmem:[#allocation2 + $0x10] sm:$0xff]
          %v423 = vld [vmem:[#allocation2 + $0x18] sm:$0xff]
          %v424 = vld [vmem:[#allocation2 + $0x20] sm:$0xff]
          %v425 = vld [vmem:[#allocation2 + $0x28] sm:$0xff]
          %v426 = vld [vmem:[#allocation2 + $0x30] sm:$0xff]
          %v427 = vld [vmem:[#allocation2 + $0x38] sm:$0xff]
          %v428 = vld [vmem:[#allocation2 + $0x40] sm:$0xff]
          %v429 = vld [vmem:[#allocation2 + $0x48] sm:$0xff]
          %v430 = vld [vmem:[#allocation2 + $0x50] sm:$0xff]
          %v431 = vld [vmem:[#allocation2 + $0x58] sm:$0xff]
          %v432 = vld [vmem:[#allocation2 + $0x60] sm:$0xff]
          %v433 = vld [vmem:[#allocation2 + $0x68] sm:$0xff]
          %v434 = vld [vmem:[#allocation2 + $0x70] sm:$0xff]
          %v435 = vld [vmem:[#allocation2 + $0x78] sm:$0xff]
          %v436 = vld [vmem:[%s196] sm:$0xff]
          %v437 = vld [vmem:[%s196 + $0x20] sm:$0xff]
          %v438 = vld [vmem:[%s196 + $0x40] sm:$0xff]
          %v439 = vld [vmem:[%s196 + $0x60] sm:$0xff]
          %v440 = vld [vmem:[%s196 + $0x80] sm:$0xff]
          %v441 = vld [vmem:[%s196 + $0xa0] sm:$0xff]
          %v442 = vld [vmem:[%s196 + $0xc0] sm:$0xff]
          %v443 = vld [vmem:[%s196 + $0xe0] sm:$0xff]
          %v444 = vld [vmem:[%s196 + $0x100] sm:$0xff]
          %v445 = vld [vmem:[%s196 + $0x120] sm:$0xff]
          %v446 = vld [vmem:[%s196 + $0x140] sm:$0xff]
          %v447 = vld [vmem:[%s196 + $0x160] sm:$0xff]
          %v448 = vld [vmem:[%s196 + $0x180] sm:$0xff]
          %v449 = vld [vmem:[%s196 + $0x1a0] sm:$0xff]
          %v450 = vld [vmem:[%s196 + $0x1c0] sm:$0xff]
          %v451 = vld [vmem:[%s196 + $0x1e0] sm:$0xff]
          %v452 = vadd.f32 %v420, %v436
          %v453 = vadd.f32 %v421, %v437
          %v454 = vadd.f32 %v422, %v438
          %v455 = vadd.f32 %v423, %v439
          %v456 = vadd.f32 %v424, %v440
          %v457 = vadd.f32 %v425, %v441
          %v458 = vadd.f32 %v426, %v442
          %v459 = vadd.f32 %v427, %v443
          %v460 = vadd.f32 %v428, %v444
          %v461 = vadd.f32 %v429, %v445
          %v462 = vadd.f32 %v430, %v446
          %v463 = vadd.f32 %v431, %v447
          %v464 = vadd.f32 %v432, %v448
          %v465 = vadd.f32 %v433, %v449
          %v466 = vadd.f32 %v434, %v450
          %v467 = vadd.f32 %v435, %v451
          %v468 = vld [vmem:[%s196 + $0x8] sm:$0xff]
          %v469 = vld [vmem:[%s196 + $0x28] sm:$0xff]
          %v470 = vld [vmem:[%s196 + $0x48] sm:$0xff]
          %v471 = vld [vmem:[%s196 + $0x68] sm:$0xff]
          %v472 = vld [vmem:[%s196 + $0x88] sm:$0xff]
          %v473 = vld [vmem:[%s196 + $0xa8] sm:$0xff]
          %v474 = vld [vmem:[%s196 + $0xc8] sm:$0xff]
          %v475 = vld [vmem:[%s196 + $0xe8] sm:$0xff]
          %v476 = vld [vmem:[%s196 + $0x108] sm:$0xff]
          %v477 = vld [vmem:[%s196 + $0x128] sm:$0xff]
          %v478 = vld [vmem:[%s196 + $0x148] sm:$0xff]
          %v479 = vld [vmem:[%s196 + $0x168] sm:$0xff]
          %v480 = vld [vmem:[%s196 + $0x188] sm:$0xff]
          %v481 = vld [vmem:[%s196 + $0x1a8] sm:$0xff]
          %v482 = vld [vmem:[%s196 + $0x1c8] sm:$0xff]
          %v483 = vld [vmem:[%s196 + $0x1e8] sm:$0xff]
          %v484 = vlaneseq
          %v485 = vand.u32 %v484, 127
          %v486 = vadd.s32 %v485, 1152
          %vm487 = vcmp.lt.s32.totalorder %v486, 1200
          %v488 = vsel %vm487, %v468, 0.0
          %v489 = vsel %vm487, %v469, 0.0
          %v490 = vsel %vm487, %v470, 0.0
          %v491 = vsel %vm487, %v471, 0.0
          %v492 = vsel %vm487, %v472, 0.0
          %v493 = vsel %vm487, %v473, 0.0
          %v494 = vsel %vm487, %v474, 0.0
          %v495 = vsel %vm487, %v475, 0.0
          %v496 = vsel %vm487, %v476, 0.0
          %v497 = vsel %vm487, %v477, 0.0
          %v498 = vsel %vm487, %v478, 0.0
          %v499 = vsel %vm487, %v479, 0.0
          %v500 = vsel %vm487, %v480, 0.0
          %v501 = vsel %vm487, %v481, 0.0
          %v502 = vsel %vm487, %v482, 0.0
          %v503 = vsel %vm487, %v483, 0.0
          %v504 = vadd.f32 %v452, %v488
          %v505 = vadd.f32 %v453, %v489
          %v506 = vadd.f32 %v454, %v490
          %v507 = vadd.f32 %v455, %v491
          %v508 = vadd.f32 %v456, %v492
          %v509 = vadd.f32 %v457, %v493
          %v510 = vadd.f32 %v458, %v494
          %v511 = vadd.f32 %v459, %v495
          %v512 = vadd.f32 %v460, %v496
          %v513 = vadd.f32 %v461, %v497
          %v514 = vadd.f32 %v462, %v498
          %v515 = vadd.f32 %v463, %v499
          %v516 = vadd.f32 %v464, %v500
          %v517 = vadd.f32 %v465, %v501
          %v518 = vadd.f32 %v466, %v502
          %v519 = vadd.f32 %v467, %v503
          %520 = vst [vmem:[#allocation2] sm:$0xff] %v504
          %521 = vst [vmem:[#allocation2 + $0x8] sm:$0xff] %v505
          %522 = vst [vmem:[#allocation2 + $0x10] sm:$0xff] %v506
          %523 = vst [vmem:[#allocation2 + $0x18] sm:$0xff] %v507
          %524 = vst [vmem:[#allocation2 + $0x20] sm:$0xff] %v508
          %525 = vst [vmem:[#allocation2 + $0x28] sm:$0xff] %v509
          %526 = vst [vmem:[#allocation2 + $0x30] sm:$0xff] %v510
          %527 = vst [vmem:[#allocation2 + $0x38] sm:$0xff] %v511
          %528 = vst [vmem:[#allocation2 + $0x40] sm:$0xff] %v512
          %529 = vst [vmem:[#allocation2 + $0x48] sm:$0xff] %v513
          %530 = vst [vmem:[#allocation2 + $0x50] sm:$0xff] %v514
          %531 = vst [vmem:[#allocation2 + $0x58] sm:$0xff] %v515
          %532 = vst [vmem:[#allocation2 + $0x60] sm:$0xff] %v516
          %533 = vst [vmem:[#allocation2 + $0x68] sm:$0xff] %v517
          %534 = vst [vmem:[#allocation2 + $0x70] sm:$0xff] %v518
          %535 = vst [vmem:[#allocation2 + $0x78] sm:$0xff] %v519
          %v536 = vld [vmem:[#allocation2] sm:$0xff]
          %v537 = vld [vmem:[#allocation2 + $0x8] sm:$0xff]
          %v538 = vld [vmem:[#allocation2 + $0x10] sm:$0xff]
          %v539 = vld [vmem:[#allocation2 + $0x18] sm:$0xff]
          %v540 = vld [vmem:[#allocation2 + $0x20] sm:$0xff]
          %v541 = vld [vmem:[#allocation2 + $0x28] sm:$0xff]
          %v542 = vld [vmem:[#allocation2 + $0x30] sm:$0xff]
          %v543 = vld [vmem:[#allocation2 + $0x38] sm:$0xff]
          %v544 = vld [vmem:[#allocation2 + $0x40] sm:$0xff]
          %v545 = vld [vmem:[#allocation2 + $0x48] sm:$0xff]
          %v546 = vld [vmem:[#allocation2 + $0x50] sm:$0xff]
          %v547 = vld [vmem:[#allocation2 + $0x58] sm:$0xff]
          %v548 = vld [vmem:[#allocation2 + $0x60] sm:$0xff]
          %v549 = vld [vmem:[#allocation2 + $0x68] sm:$0xff]
          %v550 = vld [vmem:[#allocation2 + $0x70] sm:$0xff]
          %v551 = vld [vmem:[#allocation2 + $0x78] sm:$0xff]
          %552 = vadd.xlane.f32.xlu0 %v536
          %v553 = vpop.xlane.xlu0 %552
          %554 = vadd.xlane.f32.xlu0 %v537
          %v555 = vpop.xlane.xlu0 %554
          %556 = vadd.xlane.f32.xlu0 %v538
          %v557 = vpop.xlane.xlu0 %556
          %558 = vadd.xlane.f32.xlu0 %v539
          %v559 = vpop.xlane.xlu0 %558
          %560 = vadd.xlane.f32.xlu0 %v540
          %v561 = vpop.xlane.xlu0 %560
          %562 = vadd.xlane.f32.xlu0 %v541
          %v563 = vpop.xlane.xlu0 %562
          %564 = vadd.xlane.f32.xlu0 %v542
          %v565 = vpop.xlane.xlu0 %564
          %566 = vadd.xlane.f32.xlu0 %v543
          %v567 = vpop.xlane.xlu0 %566
          %568 = vadd.xlane.f32.xlu0 %v544
          %v569 = vpop.xlane.xlu0 %568
          %570 = vadd.xlane.f32.xlu0 %v545
          %v571 = vpop.xlane.xlu0 %570
          %572 = vadd.xlane.f32.xlu0 %v546
          %v573 = vpop.xlane.xlu0 %572
          %574 = vadd.xlane.f32.xlu0 %v547
          %v575 = vpop.xlane.xlu0 %574
          %576 = vadd.xlane.f32.xlu0 %v548
          %v577 = vpop.xlane.xlu0 %576
          %578 = vadd.xlane.f32.xlu0 %v549
          %v579 = vpop.xlane.xlu0 %578
          %580 = vadd.xlane.f32.xlu0 %v550
          %v581 = vpop.xlane.xlu0 %580
          %582 = vadd.xlane.f32.xlu0 %v551
          %v583 = vpop.xlane.xlu0 %582
          %v584 = vmul.f32 %v553, 0.00083333335
          %v585 = vmul.f32 %v555, 0.00083333335
          %v586 = vmul.f32 %v557, 0.00083333335
          %v587 = vmul.f32 %v559, 0.00083333335
          %v588 = vmul.f32 %v561, 0.00083333335
          %v589 = vmul.f32 %v563, 0.00083333335
          %v590 = vmul.f32 %v565, 0.00083333335
          %v591 = vmul.f32 %v567, 0.00083333335
          %v592 = vmul.f32 %v569, 0.00083333335
          %v593 = vmul.f32 %v571, 0.00083333335
          %v594 = vmul.f32 %v573, 0.00083333335
          %v595 = vmul.f32 %v575, 0.00083333335
          %v596 = vmul.f32 %v577, 0.00083333335
          %v597 = vmul.f32 %v579, 0.00083333335
          %v598 = vmul.f32 %v581, 0.00083333335
          %v599 = vmul.f32 %v583, 0.00083333335
          %v600 = vld [vmem:[%s1] sm:$0xff]
          %v601 = vld [vmem:[%s1 + $0x8] sm:$0xff]
          %v604 = vlaneseq
          %v605 = vshrl.u32 %v604, 7
          %v606 = vsub.s32 0, %v605
          %v607 = vrot.slane %v600, %v606
          %609 = vbcast.lane.b32.xlu0 %v607, 256
          %v610 = vpop.permute.xlu0 %609
          %s612 = sor.u32 256, 8
          %613 = vbcast.lane.b32.xlu0 %v607, %s612
          %v614 = vpop.permute.xlu0 %613
          %v615 = vlaneseq
          %v616 = vshrl.u32 %v615, 7
          %v617 = vsub.s32 1, %v616
          %v618 = vrot.slane %v600, %v617
          %620 = vbcast.lane.b32.xlu0 %v618, 256
          %v621 = vpop.permute.xlu0 %620
          %s623 = sor.u32 256, 8
          %624 = vbcast.lane.b32.xlu0 %v618, %s623
          %v625 = vpop.permute.xlu0 %624
          %v626 = vlaneseq
          %v627 = vshrl.u32 %v626, 7
          %v628 = vsub.s32 2, %v627
          %v629 = vrot.slane %v600, %v628
          %631 = vbcast.lane.b32.xlu0 %v629, 256
          %v632 = vpop.permute.xlu0 %631
          %s634 = sor.u32 256, 8
          %635 = vbcast.lane.b32.xlu0 %v629, %s634
          %v636 = vpop.permute.xlu0 %635
          %v637 = vlaneseq
          %v638 = vshrl.u32 %v637, 7
          %v639 = vsub.s32 3, %v638
          %v640 = vrot.slane %v600, %v639
          %642 = vbcast.lane.b32.xlu0 %v640, 256
          %v643 = vpop.permute.xlu0 %642
          %s645 = sor.u32 256, 8
          %646 = vbcast.lane.b32.xlu0 %v640, %s645
          %v647 = vpop.permute.xlu0 %646
          %v648 = vlaneseq
          %v649 = vshrl.u32 %v648, 7
          %v650 = vsub.s32 4, %v649
          %v651 = vrot.slane %v600, %v650
          %653 = vbcast.lane.b32.xlu0 %v651, 256
          %v654 = vpop.permute.xlu0 %653
          %s656 = sor.u32 256, 8
          %657 = vbcast.lane.b32.xlu0 %v651, %s656
          %v658 = vpop.permute.xlu0 %657
          %v659 = vlaneseq
          %v660 = vshrl.u32 %v659, 7
          %v661 = vsub.s32 5, %v660
          %v662 = vrot.slane %v600, %v661
          %664 = vbcast.lane.b32.xlu0 %v662, 256
          %v665 = vpop.permute.xlu0 %664
          %s667 = sor.u32 256, 8
          %668 = vbcast.lane.b32.xlu0 %v662, %s667
          %v669 = vpop.permute.xlu0 %668
          %v670 = vlaneseq
          %v671 = vshrl.u32 %v670, 7
          %v672 = vsub.s32 6, %v671
          %v673 = vrot.slane %v600, %v672
          %675 = vbcast.lane.b32.xlu0 %v673, 256
          %v676 = vpop.permute.xlu0 %675
          %s678 = sor.u32 256, 8
          %679 = vbcast.lane.b32.xlu0 %v673, %s678
          %v680 = vpop.permute.xlu0 %679
          %v681 = vlaneseq
          %v682 = vshrl.u32 %v681, 7
          %v683 = vsub.s32 7, %v682
          %v684 = vrot.slane %v600, %v683
          %686 = vbcast.lane.b32.xlu0 %v684, 256
          %v687 = vpop.permute.xlu0 %686
          %s689 = sor.u32 256, 8
          %690 = vbcast.lane.b32.xlu0 %v684, %s689
          %v691 = vpop.permute.xlu0 %690
          %v692 = vlaneseq
          %v693 = vshrl.u32 %v692, 7
          %v694 = vsub.s32 0, %v693
          %v695 = vrot.slane %v601, %v694
          %697 = vbcast.lane.b32.xlu0 %v695, 256
          %v698 = vpop.permute.xlu0 %697
          %s700 = sor.u32 256, 8
          %701 = vbcast.lane.b32.xlu0 %v695, %s700
          %v702 = vpop.permute.xlu0 %701
          %v703 = vlaneseq
          %v704 = vshrl.u32 %v703, 7
          %v705 = vsub.s32 1, %v704
          %v706 = vrot.slane %v601, %v705
          %708 = vbcast.lane.b32.xlu0 %v706, 256
          %v709 = vpop.permute.xlu0 %708
          %s711 = sor.u32 256, 8
          %712 = vbcast.lane.b32.xlu0 %v706, %s711
          %v713 = vpop.permute.xlu0 %712
          %v714 = vlaneseq
          %v715 = vshrl.u32 %v714, 7
          %v716 = vsub.s32 2, %v715
          %v717 = vrot.slane %v601, %v716
          %719 = vbcast.lane.b32.xlu0 %v717, 256
          %v720 = vpop.permute.xlu0 %719
          %s722 = sor.u32 256, 8
          %723 = vbcast.lane.b32.xlu0 %v717, %s722
          %v724 = vpop.permute.xlu0 %723
          %v725 = vlaneseq
          %v726 = vshrl.u32 %v725, 7
          %v727 = vsub.s32 3, %v726
          %v728 = vrot.slane %v601, %v727
          %730 = vbcast.lane.b32.xlu0 %v728, 256
          %v731 = vpop.permute.xlu0 %730
          %s733 = sor.u32 256, 8
          %734 = vbcast.lane.b32.xlu0 %v728, %s733
          %v735 = vpop.permute.xlu0 %734
          %v736 = vlaneseq
          %v737 = vshrl.u32 %v736, 7
          %v738 = vsub.s32 4, %v737
          %v739 = vrot.slane %v601, %v738
          %741 = vbcast.lane.b32.xlu0 %v739, 256
          %v742 = vpop.permute.xlu0 %741
          %s744 = sor.u32 256, 8
          %745 = vbcast.lane.b32.xlu0 %v739, %s744
          %v746 = vpop.permute.xlu0 %745
          %v747 = vlaneseq
          %v748 = vshrl.u32 %v747, 7
          %v749 = vsub.s32 5, %v748
          %v750 = vrot.slane %v601, %v749
          %752 = vbcast.lane.b32.xlu0 %v750, 256
          %v753 = vpop.permute.xlu0 %752
          %s755 = sor.u32 256, 8
          %756 = vbcast.lane.b32.xlu0 %v750, %s755
          %v757 = vpop.permute.xlu0 %756
          %v758 = vlaneseq
          %v759 = vshrl.u32 %v758, 7
          %v760 = vsub.s32 6, %v759
          %v761 = vrot.slane %v601, %v760
          %763 = vbcast.lane.b32.xlu0 %v761, 256
          %v764 = vpop.permute.xlu0 %763
          %s766 = sor.u32 256, 8
          %767 = vbcast.lane.b32.xlu0 %v761, %s766
          %v768 = vpop.permute.xlu0 %767
          %v769 = vlaneseq
          %v770 = vshrl.u32 %v769, 7
          %v771 = vsub.s32 7, %v770
          %v772 = vrot.slane %v601, %v771
          %774 = vbcast.lane.b32.xlu0 %v772, 256
          %v775 = vpop.permute.xlu0 %774
          %s777 = sor.u32 256, 8
          %778 = vbcast.lane.b32.xlu0 %v772, %s777
          %v779 = vpop.permute.xlu0 %778
          %v812 = vmul.f32 %v584, %v610
          %v813 = vmul.f32 %v585, %v614
          %v814 = vmul.f32 %v584, %v621
          %v815 = vmul.f32 %v585, %v625
          %v816 = vmul.f32 %v584, %v632
          %v817 = vmul.f32 %v585, %v636
          %v818 = vmul.f32 %v584, %v643
          %v819 = vmul.f32 %v585, %v647
          %v820 = vmul.f32 %v584, %v654
          %v821 = vmul.f32 %v585, %v658
          %v822 = vmul.f32 %v584, %v665
          %v823 = vmul.f32 %v585, %v669
          %v824 = vmul.f32 %v584, %v676
          %v825 = vmul.f32 %v585, %v680
          %v826 = vmul.f32 %v584, %v687
          %v827 = vmul.f32 %v585, %v691
          %v828 = vmul.f32 %v584, %v698
          %v829 = vmul.f32 %v585, %v702
          %v830 = vmul.f32 %v584, %v709
          %v831 = vmul.f32 %v585, %v713
          %v832 = vmul.f32 %v584, %v720
          %v833 = vmul.f32 %v585, %v724
          %v834 = vmul.f32 %v584, %v731
          %v835 = vmul.f32 %v585, %v735
          %v836 = vmul.f32 %v584, %v742
          %v837 = vmul.f32 %v585, %v746
          %v838 = vmul.f32 %v584, %v753
          %v839 = vmul.f32 %v585, %v757
          %v840 = vmul.f32 %v584, %v764
          %v841 = vmul.f32 %v585, %v768
          %v842 = vmul.f32 %v584, %v775
          %v843 = vmul.f32 %v585, %v779
          %v844 = vmul.f32 %v586, %v610
          %v845 = vmul.f32 %v587, %v614
          %v846 = vmul.f32 %v586, %v621
          %v847 = vmul.f32 %v587, %v625
          %v848 = vmul.f32 %v586, %v632
          %v849 = vmul.f32 %v587, %v636
          %v850 = vmul.f32 %v586, %v643
          %v851 = vmul.f32 %v587, %v647
          %v852 = vmul.f32 %v586, %v654
          %v853 = vmul.f32 %v587, %v658
          %v854 = vmul.f32 %v586, %v665
          %v855 = vmul.f32 %v587, %v669
          %v856 = vmul.f32 %v586, %v676
          %v857 = vmul.f32 %v587, %v680
          %v858 = vmul.f32 %v586, %v687
          %v859 = vmul.f32 %v587, %v691
          %v860 = vmul.f32 %v586, %v698
          %v861 = vmul.f32 %v587, %v702
          %v862 = vmul.f32 %v586, %v709
          %v863 = vmul.f32 %v587, %v713
          %v864 = vmul.f32 %v586, %v720
          %v865 = vmul.f32 %v587, %v724
          %v866 = vmul.f32 %v586, %v731
          %v867 = vmul.f32 %v587, %v735
          %v868 = vmul.f32 %v586, %v742
          %v869 = vmul.f32 %v587, %v746
          %v870 = vmul.f32 %v586, %v753
          %v871 = vmul.f32 %v587, %v757
          %v872 = vmul.f32 %v586, %v764
          %v873 = vmul.f32 %v587, %v768
          %v874 = vmul.f32 %v586, %v775
          %v875 = vmul.f32 %v587, %v779
          %v876 = vmul.f32 %v588, %v610
          %v877 = vmul.f32 %v589, %v614
          %v878 = vmul.f32 %v588, %v621
          %v879 = vmul.f32 %v589, %v625
          %v880 = vmul.f32 %v588, %v632
          %v881 = vmul.f32 %v589, %v636
          %v882 = vmul.f32 %v588, %v643
          %v883 = vmul.f32 %v589, %v647
          %v884 = vmul.f32 %v588, %v654
          %v885 = vmul.f32 %v589, %v658
          %v886 = vmul.f32 %v588, %v665
          %v887 = vmul.f32 %v589, %v669
          %v888 = vmul.f32 %v588, %v676
          %v889 = vmul.f32 %v589, %v680
          %v890 = vmul.f32 %v588, %v687
          %v891 = vmul.f32 %v589, %v691
          %v892 = vmul.f32 %v588, %v698
          %v893 = vmul.f32 %v589, %v702
          %v894 = vmul.f32 %v588, %v709
          %v895 = vmul.f32 %v589, %v713
          %v896 = vmul.f32 %v588, %v720
          %v897 = vmul.f32 %v589, %v724
          %v898 = vmul.f32 %v588, %v731
          %v899 = vmul.f32 %v589, %v735
          %v900 = vmul.f32 %v588, %v742
          %v901 = vmul.f32 %v589, %v746
          %v902 = vmul.f32 %v588, %v753
          %v903 = vmul.f32 %v589, %v757
          %v904 = vmul.f32 %v588, %v764
          %v905 = vmul.f32 %v589, %v768
          %v906 = vmul.f32 %v588, %v775
          %v907 = vmul.f32 %v589, %v779
          %v908 = vmul.f32 %v590, %v610
          %v909 = vmul.f32 %v591, %v614
          %v910 = vmul.f32 %v590, %v621
          %v911 = vmul.f32 %v591, %v625
          %v912 = vmul.f32 %v590, %v632
          %v913 = vmul.f32 %v591, %v636
          %v914 = vmul.f32 %v590, %v643
          %v915 = vmul.f32 %v591, %v647
          %v916 = vmul.f32 %v590, %v654
          %v917 = vmul.f32 %v591, %v658
          %v918 = vmul.f32 %v590, %v665
          %v919 = vmul.f32 %v591, %v669
          %v920 = vmul.f32 %v590, %v676
          %v921 = vmul.f32 %v591, %v680
          %v922 = vmul.f32 %v590, %v687
          %v923 = vmul.f32 %v591, %v691
          %v924 = vmul.f32 %v590, %v698
          %v925 = vmul.f32 %v591, %v702
          %v926 = vmul.f32 %v590, %v709
          %v927 = vmul.f32 %v591, %v713
          %v928 = vmul.f32 %v590, %v720
          %v929 = vmul.f32 %v591, %v724
          %v930 = vmul.f32 %v590, %v731
          %v931 = vmul.f32 %v591, %v735
          %v932 = vmul.f32 %v590, %v742
          %v933 = vmul.f32 %v591, %v746
          %v934 = vmul.f32 %v590, %v753
          %v935 = vmul.f32 %v591, %v757
          %v936 = vmul.f32 %v590, %v764
          %v937 = vmul.f32 %v591, %v768
          %v938 = vmul.f32 %v590, %v775
          %v939 = vmul.f32 %v591, %v779
          %v940 = vmul.f32 %v592, %v610
          %v941 = vmul.f32 %v593, %v614
          %v942 = vmul.f32 %v592, %v621
          %v943 = vmul.f32 %v593, %v625
          %v944 = vmul.f32 %v592, %v632
          %v945 = vmul.f32 %v593, %v636
          %v946 = vmul.f32 %v592, %v643
          %v947 = vmul.f32 %v593, %v647
          %v948 = vmul.f32 %v592, %v654
          %v949 = vmul.f32 %v593, %v658
          %v950 = vmul.f32 %v592, %v665
          %v951 = vmul.f32 %v593, %v669
          %v952 = vmul.f32 %v592, %v676
          %v953 = vmul.f32 %v593, %v680
          %v954 = vmul.f32 %v592, %v687
          %v955 = vmul.f32 %v593, %v691
          %v956 = vmul.f32 %v592, %v698
          %v957 = vmul.f32 %v593, %v702
          %v958 = vmul.f32 %v592, %v709
          %v959 = vmul.f32 %v593, %v713
          %v960 = vmul.f32 %v592, %v720
          %v961 = vmul.f32 %v593, %v724
          %v962 = vmul.f32 %v592, %v731
          %v963 = vmul.f32 %v593, %v735
          %v964 = vmul.f32 %v592, %v742
          %v965 = vmul.f32 %v593, %v746
          %v966 = vmul.f32 %v592, %v753
          %v967 = vmul.f32 %v593, %v757
          %v968 = vmul.f32 %v592, %v764
          %v969 = vmul.f32 %v593, %v768
          %v970 = vmul.f32 %v592, %v775
          %v971 = vmul.f32 %v593, %v779
          %v972 = vmul.f32 %v594, %v610
          %v973 = vmul.f32 %v595, %v614
          %v974 = vmul.f32 %v594, %v621
          %v975 = vmul.f32 %v595, %v625
          %v976 = vmul.f32 %v594, %v632
          %v977 = vmul.f32 %v595, %v636
          %v978 = vmul.f32 %v594, %v643
          %v979 = vmul.f32 %v595, %v647
          %v980 = vmul.f32 %v594, %v654
          %v981 = vmul.f32 %v595, %v658
          %v982 = vmul.f32 %v594, %v665
          %v983 = vmul.f32 %v595, %v669
          %v984 = vmul.f32 %v594, %v676
          %v985 = vmul.f32 %v595, %v680
          %v986 = vmul.f32 %v594, %v687
          %v987 = vmul.f32 %v595, %v691
          %v988 = vmul.f32 %v594, %v698
          %v989 = vmul.f32 %v595, %v702
          %v990 = vmul.f32 %v594, %v709
          %v991 = vmul.f32 %v595, %v713
          %v992 = vmul.f32 %v594, %v720
          %v993 = vmul.f32 %v595, %v724
          %v994 = vmul.f32 %v594, %v731
          %v995 = vmul.f32 %v595, %v735
          %v996 = vmul.f32 %v594, %v742
          %v997 = vmul.f32 %v595, %v746
          %v998 = vmul.f32 %v594, %v753
          %v999 = vmul.f32 %v595, %v757
          %v1000 = vmul.f32 %v594, %v764
          %v1001 = vmul.f32 %v595, %v768
          %v1002 = vmul.f32 %v594, %v775
          %v1003 = vmul.f32 %v595, %v779
          %v1004 = vmul.f32 %v596, %v610
          %v1005 = vmul.f32 %v597, %v614
          %v1006 = vmul.f32 %v596, %v621
          %v1007 = vmul.f32 %v597, %v625
          %v1008 = vmul.f32 %v596, %v632
          %v1009 = vmul.f32 %v597, %v636
          %v1010 = vmul.f32 %v596, %v643
          %v1011 = vmul.f32 %v597, %v647
          %v1012 = vmul.f32 %v596, %v654
          %v1013 = vmul.f32 %v597, %v658
          %v1014 = vmul.f32 %v596, %v665
          %v1015 = vmul.f32 %v597, %v669
          %v1016 = vmul.f32 %v596, %v676
          %v1017 = vmul.f32 %v597, %v680
          %v1018 = vmul.f32 %v596, %v687
          %v1019 = vmul.f32 %v597, %v691
          %v1020 = vmul.f32 %v596, %v698
          %v1021 = vmul.f32 %v597, %v702
          %v1022 = vmul.f32 %v596, %v709
          %v1023 = vmul.f32 %v597, %v713
          %v1024 = vmul.f32 %v596, %v720
          %v1025 = vmul.f32 %v597, %v724
          %v1026 = vmul.f32 %v596, %v731
          %v1027 = vmul.f32 %v597, %v735
          %v1028 = vmul.f32 %v596, %v742
          %v1029 = vmul.f32 %v597, %v746
          %v1030 = vmul.f32 %v596, %v753
          %v1031 = vmul.f32 %v597, %v757
          %v1032 = vmul.f32 %v596, %v764
          %v1033 = vmul.f32 %v597, %v768
          %v1034 = vmul.f32 %v596, %v775
          %v1035 = vmul.f32 %v597, %v779
          %v1036 = vmul.f32 %v598, %v610
          %v1037 = vmul.f32 %v599, %v614
          %v1038 = vmul.f32 %v598, %v621
          %v1039 = vmul.f32 %v599, %v625
          %v1040 = vmul.f32 %v598, %v632
          %v1041 = vmul.f32 %v599, %v636
          %v1042 = vmul.f32 %v598, %v643
          %v1043 = vmul.f32 %v599, %v647
          %v1044 = vmul.f32 %v598, %v654
          %v1045 = vmul.f32 %v599, %v658
          %v1046 = vmul.f32 %v598, %v665
          %v1047 = vmul.f32 %v599, %v669
          %v1048 = vmul.f32 %v598, %v676
          %v1049 = vmul.f32 %v599, %v680
          %v1050 = vmul.f32 %v598, %v687
          %v1051 = vmul.f32 %v599, %v691
          %v1052 = vmul.f32 %v598, %v698
          %v1053 = vmul.f32 %v599, %v702
          %v1054 = vmul.f32 %v598, %v709
          %v1055 = vmul.f32 %v599, %v713
          %v1056 = vmul.f32 %v598, %v720
          %v1057 = vmul.f32 %v599, %v724
          %v1058 = vmul.f32 %v598, %v731
          %v1059 = vmul.f32 %v599, %v735
          %v1060 = vmul.f32 %v598, %v742
          %v1061 = vmul.f32 %v599, %v746
          %v1062 = vmul.f32 %v598, %v753
          %v1063 = vmul.f32 %v599, %v757
          %v1064 = vmul.f32 %v598, %v764
          %v1065 = vmul.f32 %v599, %v768
          %v1066 = vmul.f32 %v598, %v775
          %v1067 = vmul.f32 %v599, %v779
          %1324 = vset.pattern.permute.xlu0 0
          %1325 = vperm.xlu0 %1324, %v812
          %v1326 = vpop.permute.xlu0 %1325
          %1327 = vset.pattern.permute.xlu0 0
          %1328 = vperm.xlu0 %1327, %v813
          %v1329 = vpop.permute.xlu0 %1328
          %1330 = vset.pattern.permute.xlu0 0
          %1331 = vperm.xlu0 %1330, %v814
          %v1332 = vpop.permute.xlu0 %1331
          %1333 = vset.pattern.permute.xlu0 0
          %1334 = vperm.xlu0 %1333, %v815
          %v1335 = vpop.permute.xlu0 %1334
          %1336 = vset.pattern.permute.xlu0 0
          %1337 = vperm.xlu0 %1336, %v816
          %v1338 = vpop.permute.xlu0 %1337
          %1339 = vset.pattern.permute.xlu0 0
          %1340 = vperm.xlu0 %1339, %v817
          %v1341 = vpop.permute.xlu0 %1340
          %1342 = vset.pattern.permute.xlu0 0
          %1343 = vperm.xlu0 %1342, %v818
          %v1344 = vpop.permute.xlu0 %1343
          %1345 = vset.pattern.permute.xlu0 0
          %1346 = vperm.xlu0 %1345, %v819
          %v1347 = vpop.permute.xlu0 %1346
          %1348 = vset.pattern.permute.xlu0 0
          %1349 = vperm.xlu0 %1348, %v820
          %v1350 = vpop.permute.xlu0 %1349
          %1351 = vset.pattern.permute.xlu0 0
          %1352 = vperm.xlu0 %1351, %v821
          %v1353 = vpop.permute.xlu0 %1352
          %1354 = vset.pattern.permute.xlu0 0
          %1355 = vperm.xlu0 %1354, %v822
          %v1356 = vpop.permute.xlu0 %1355
          %1357 = vset.pattern.permute.xlu0 0
          %1358 = vperm.xlu0 %1357, %v823
          %v1359 = vpop.permute.xlu0 %1358
          %1360 = vset.pattern.permute.xlu0 0
          %1361 = vperm.xlu0 %1360, %v824
          %v1362 = vpop.permute.xlu0 %1361
          %1363 = vset.pattern.permute.xlu0 0
          %1364 = vperm.xlu0 %1363, %v825
          %v1365 = vpop.permute.xlu0 %1364
          %1366 = vset.pattern.permute.xlu0 0
          %1367 = vperm.xlu0 %1366, %v826
          %v1368 = vpop.permute.xlu0 %1367
          %1369 = vset.pattern.permute.xlu0 0
          %1370 = vperm.xlu0 %1369, %v827
          %v1371 = vpop.permute.xlu0 %1370
          %1372 = vset.pattern.permute.xlu0 0
          %1373 = vperm.xlu0 %1372, %v828
          %v1374 = vpop.permute.xlu0 %1373
          %1375 = vset.pattern.permute.xlu0 0
          %1376 = vperm.xlu0 %1375, %v829
          %v1377 = vpop.permute.xlu0 %1376
          %1378 = vset.pattern.permute.xlu0 0
          %1379 = vperm.xlu0 %1378, %v830
          %v1380 = vpop.permute.xlu0 %1379
          %1381 = vset.pattern.permute.xlu0 0
          %1382 = vperm.xlu0 %1381, %v831
          %v1383 = vpop.permute.xlu0 %1382
          %1384 = vset.pattern.permute.xlu0 0
          %1385 = vperm.xlu0 %1384, %v832
          %v1386 = vpop.permute.xlu0 %1385
          %1387 = vset.pattern.permute.xlu0 0
          %1388 = vperm.xlu0 %1387, %v833
          %v1389 = vpop.permute.xlu0 %1388
          %1390 = vset.pattern.permute.xlu0 0
          %1391 = vperm.xlu0 %1390, %v834
          %v1392 = vpop.permute.xlu0 %1391
          %1393 = vset.pattern.permute.xlu0 0
          %1394 = vperm.xlu0 %1393, %v835
          %v1395 = vpop.permute.xlu0 %1394
          %1396 = vset.pattern.permute.xlu0 0
          %1397 = vperm.xlu0 %1396, %v836
          %v1398 = vpop.permute.xlu0 %1397
          %1399 = vset.pattern.permute.xlu0 0
          %1400 = vperm.xlu0 %1399, %v837
          %v1401 = vpop.permute.xlu0 %1400
          %1402 = vset.pattern.permute.xlu0 0
          %1403 = vperm.xlu0 %1402, %v838
          %v1404 = vpop.permute.xlu0 %1403
          %1405 = vset.pattern.permute.xlu0 0
          %1406 = vperm.xlu0 %1405, %v839
          %v1407 = vpop.permute.xlu0 %1406
          %1408 = vset.pattern.permute.xlu0 0
          %1409 = vperm.xlu0 %1408, %v840
          %v1410 = vpop.permute.xlu0 %1409
          %1411 = vset.pattern.permute.xlu0 0
          %1412 = vperm.xlu0 %1411, %v841
          %v1413 = vpop.permute.xlu0 %1412
          %1414 = vset.pattern.permute.xlu0 0
          %1415 = vperm.xlu0 %1414, %v842
          %v1416 = vpop.permute.xlu0 %1415
          %1417 = vset.pattern.permute.xlu0 0
          %1418 = vperm.xlu0 %1417, %v843
          %v1419 = vpop.permute.xlu0 %1418
          %1420 = vset.pattern.permute.xlu0 0
          %1421 = vperm.xlu0 %1420, %v844
          %v1422 = vpop.permute.xlu0 %1421
          %1423 = vset.pattern.permute.xlu0 0
          %1424 = vperm.xlu0 %1423, %v845
          %v1425 = vpop.permute.xlu0 %1424
          %1426 = vset.pattern.permute.xlu0 0
          %1427 = vperm.xlu0 %1426, %v846
          %v1428 = vpop.permute.xlu0 %1427
          %1429 = vset.pattern.permute.xlu0 0
          %1430 = vperm.xlu0 %1429, %v847
          %v1431 = vpop.permute.xlu0 %1430
          %1432 = vset.pattern.permute.xlu0 0
          %1433 = vperm.xlu0 %1432, %v848
          %v1434 = vpop.permute.xlu0 %1433
          %1435 = vset.pattern.permute.xlu0 0
          %1436 = vperm.xlu0 %1435, %v849
          %v1437 = vpop.permute.xlu0 %1436
          %1438 = vset.pattern.permute.xlu0 0
          %1439 = vperm.xlu0 %1438, %v850
          %v1440 = vpop.permute.xlu0 %1439
          %1441 = vset.pattern.permute.xlu0 0
          %1442 = vperm.xlu0 %1441, %v851
          %v1443 = vpop.permute.xlu0 %1442
          %1444 = vset.pattern.permute.xlu0 0
          %1445 = vperm.xlu0 %1444, %v852
          %v1446 = vpop.permute.xlu0 %1445
          %1447 = vset.pattern.permute.xlu0 0
          %1448 = vperm.xlu0 %1447, %v853
          %v1449 = vpop.permute.xlu0 %1448
          %1450 = vset.pattern.permute.xlu0 0
          %1451 = vperm.xlu0 %1450, %v854
          %v1452 = vpop.permute.xlu0 %1451
          %1453 = vset.pattern.permute.xlu0 0
          %1454 = vperm.xlu0 %1453, %v855
          %v1455 = vpop.permute.xlu0 %1454
          %1456 = vset.pattern.permute.xlu0 0
          %1457 = vperm.xlu0 %1456, %v856
          %v1458 = vpop.permute.xlu0 %1457
          %1459 = vset.pattern.permute.xlu0 0
          %1460 = vperm.xlu0 %1459, %v857
          %v1461 = vpop.permute.xlu0 %1460
          %1462 = vset.pattern.permute.xlu0 0
          %1463 = vperm.xlu0 %1462, %v858
          %v1464 = vpop.permute.xlu0 %1463
          %1465 = vset.pattern.permute.xlu0 0
          %1466 = vperm.xlu0 %1465, %v859
          %v1467 = vpop.permute.xlu0 %1466
          %1468 = vset.pattern.permute.xlu0 0
          %1469 = vperm.xlu0 %1468, %v860
          %v1470 = vpop.permute.xlu0 %1469
          %1471 = vset.pattern.permute.xlu0 0
          %1472 = vperm.xlu0 %1471, %v861
          %v1473 = vpop.permute.xlu0 %1472
          %1474 = vset.pattern.permute.xlu0 0
          %1475 = vperm.xlu0 %1474, %v862
          %v1476 = vpop.permute.xlu0 %1475
          %1477 = vset.pattern.permute.xlu0 0
          %1478 = vperm.xlu0 %1477, %v863
          %v1479 = vpop.permute.xlu0 %1478
          %1480 = vset.pattern.permute.xlu0 0
          %1481 = vperm.xlu0 %1480, %v864
          %v1482 = vpop.permute.xlu0 %1481
          %1483 = vset.pattern.permute.xlu0 0
          %1484 = vperm.xlu0 %1483, %v865
          %v1485 = vpop.permute.xlu0 %1484
          %1486 = vset.pattern.permute.xlu0 0
          %1487 = vperm.xlu0 %1486, %v866
          %v1488 = vpop.permute.xlu0 %1487
          %1489 = vset.pattern.permute.xlu0 0
          %1490 = vperm.xlu0 %1489, %v867
          %v1491 = vpop.permute.xlu0 %1490
          %1492 = vset.pattern.permute.xlu0 0
          %1493 = vperm.xlu0 %1492, %v868
          %v1494 = vpop.permute.xlu0 %1493
          %1495 = vset.pattern.permute.xlu0 0
          %1496 = vperm.xlu0 %1495, %v869
          %v1497 = vpop.permute.xlu0 %1496
          %1498 = vset.pattern.permute.xlu0 0
          %1499 = vperm.xlu0 %1498, %v870
          %v1500 = vpop.permute.xlu0 %1499
          %1501 = vset.pattern.permute.xlu0 0
          %1502 = vperm.xlu0 %1501, %v871
          %v1503 = vpop.permute.xlu0 %1502
          %1504 = vset.pattern.permute.xlu0 0
          %1505 = vperm.xlu0 %1504, %v872
          %v1506 = vpop.permute.xlu0 %1505
          %1507 = vset.pattern.permute.xlu0 0
          %1508 = vperm.xlu0 %1507, %v873
          %v1509 = vpop.permute.xlu0 %1508
          %1510 = vset.pattern.permute.xlu0 0
          %1511 = vperm.xlu0 %1510, %v874
          %v1512 = vpop.permute.xlu0 %1511
          %1513 = vset.pattern.permute.xlu0 0
          %1514 = vperm.xlu0 %1513, %v875
          %v1515 = vpop.permute.xlu0 %1514
          %1516 = vset.pattern.permute.xlu0 0
          %1517 = vperm.xlu0 %1516, %v876
          %v1518 = vpop.permute.xlu0 %1517
          %1519 = vset.pattern.permute.xlu0 0
          %1520 = vperm.xlu0 %1519, %v877
          %v1521 = vpop.permute.xlu0 %1520
          %1522 = vset.pattern.permute.xlu0 0
          %1523 = vperm.xlu0 %1522, %v878
          %v1524 = vpop.permute.xlu0 %1523
          %1525 = vset.pattern.permute.xlu0 0
          %1526 = vperm.xlu0 %1525, %v879
          %v1527 = vpop.permute.xlu0 %1526
          %1528 = vset.pattern.permute.xlu0 0
          %1529 = vperm.xlu0 %1528, %v880
          %v1530 = vpop.permute.xlu0 %1529
          %1531 = vset.pattern.permute.xlu0 0
          %1532 = vperm.xlu0 %1531, %v881
          %v1533 = vpop.permute.xlu0 %1532
          %1534 = vset.pattern.permute.xlu0 0
          %1535 = vperm.xlu0 %1534, %v882
          %v1536 = vpop.permute.xlu0 %1535
          %1537 = vset.pattern.permute.xlu0 0
          %1538 = vperm.xlu0 %1537, %v883
          %v1539 = vpop.permute.xlu0 %1538
          %1540 = vset.pattern.permute.xlu0 0
          %1541 = vperm.xlu0 %1540, %v884
          %v1542 = vpop.permute.xlu0 %1541
          %1543 = vset.pattern.permute.xlu0 0
          %1544 = vperm.xlu0 %1543, %v885
          %v1545 = vpop.permute.xlu0 %1544
          %1546 = vset.pattern.permute.xlu0 0
          %1547 = vperm.xlu0 %1546, %v886
          %v1548 = vpop.permute.xlu0 %1547
          %1549 = vset.pattern.permute.xlu0 0
          %1550 = vperm.xlu0 %1549, %v887
          %v1551 = vpop.permute.xlu0 %1550
          %1552 = vset.pattern.permute.xlu0 0
          %1553 = vperm.xlu0 %1552, %v888
          %v1554 = vpop.permute.xlu0 %1553
          %1555 = vset.pattern.permute.xlu0 0
          %1556 = vperm.xlu0 %1555, %v889
          %v1557 = vpop.permute.xlu0 %1556
          %1558 = vset.pattern.permute.xlu0 0
          %1559 = vperm.xlu0 %1558, %v890
          %v1560 = vpop.permute.xlu0 %1559
          %1561 = vset.pattern.permute.xlu0 0
          %1562 = vperm.xlu0 %1561, %v891
          %v1563 = vpop.permute.xlu0 %1562
          %1564 = vset.pattern.permute.xlu0 0
          %1565 = vperm.xlu0 %1564, %v892
          %v1566 = vpop.permute.xlu0 %1565
          %1567 = vset.pattern.permute.xlu0 0
          %1568 = vperm.xlu0 %1567, %v893
          %v1569 = vpop.permute.xlu0 %1568
          %1570 = vset.pattern.permute.xlu0 0
          %1571 = vperm.xlu0 %1570, %v894
          %v1572 = vpop.permute.xlu0 %1571
          %1573 = vset.pattern.permute.xlu0 0
          %1574 = vperm.xlu0 %1573, %v895
          %v1575 = vpop.permute.xlu0 %1574
          %1576 = vset.pattern.permute.xlu0 0
          %1577 = vperm.xlu0 %1576, %v896
          %v1578 = vpop.permute.xlu0 %1577
          %1579 = vset.pattern.permute.xlu0 0
          %1580 = vperm.xlu0 %1579, %v897
          %v1581 = vpop.permute.xlu0 %1580
          %1582 = vset.pattern.permute.xlu0 0
          %1583 = vperm.xlu0 %1582, %v898
          %v1584 = vpop.permute.xlu0 %1583
          %1585 = vset.pattern.permute.xlu0 0
          %1586 = vperm.xlu0 %1585, %v899
          %v1587 = vpop.permute.xlu0 %1586
          %1588 = vset.pattern.permute.xlu0 0
          %1589 = vperm.xlu0 %1588, %v900
          %v1590 = vpop.permute.xlu0 %1589
          %1591 = vset.pattern.permute.xlu0 0
          %1592 = vperm.xlu0 %1591, %v901
          %v1593 = vpop.permute.xlu0 %1592
          %1594 = vset.pattern.permute.xlu0 0
          %1595 = vperm.xlu0 %1594, %v902
          %v1596 = vpop.permute.xlu0 %1595
          %1597 = vset.pattern.permute.xlu0 0
          %1598 = vperm.xlu0 %1597, %v903
          %v1599 = vpop.permute.xlu0 %1598
          %1600 = vset.pattern.permute.xlu0 0
          %1601 = vperm.xlu0 %1600, %v904
          %v1602 = vpop.permute.xlu0 %1601
          %1603 = vset.pattern.permute.xlu0 0
          %1604 = vperm.xlu0 %1603, %v905
          %v1605 = vpop.permute.xlu0 %1604
          %1606 = vset.pattern.permute.xlu0 0
          %1607 = vperm.xlu0 %1606, %v906
          %v1608 = vpop.permute.xlu0 %1607
          %1609 = vset.pattern.permute.xlu0 0
          %1610 = vperm.xlu0 %1609, %v907
          %v1611 = vpop.permute.xlu0 %1610
          %1612 = vset.pattern.permute.xlu0 0
          %1613 = vperm.xlu0 %1612, %v908
          %v1614 = vpop.permute.xlu0 %1613
          %1615 = vset.pattern.permute.xlu0 0
          %1616 = vperm.xlu0 %1615, %v909
          %v1617 = vpop.permute.xlu0 %1616
          %1618 = vset.pattern.permute.xlu0 0
          %1619 = vperm.xlu0 %1618, %v910
          %v1620 = vpop.permute.xlu0 %1619
          %1621 = vset.pattern.permute.xlu0 0
          %1622 = vperm.xlu0 %1621, %v911
          %v1623 = vpop.permute.xlu0 %1622
          %1624 = vset.pattern.permute.xlu0 0
          %1625 = vperm.xlu0 %1624, %v912
          %v1626 = vpop.permute.xlu0 %1625
          %1627 = vset.pattern.permute.xlu0 0
          %1628 = vperm.xlu0 %1627, %v913
          %v1629 = vpop.permute.xlu0 %1628
          %1630 = vset.pattern.permute.xlu0 0
          %1631 = vperm.xlu0 %1630, %v914
          %v1632 = vpop.permute.xlu0 %1631
          %1633 = vset.pattern.permute.xlu0 0
          %1634 = vperm.xlu0 %1633, %v915
          %v1635 = vpop.permute.xlu0 %1634
          %1636 = vset.pattern.permute.xlu0 0
          %1637 = vperm.xlu0 %1636, %v916
          %v1638 = vpop.permute.xlu0 %1637
          %1639 = vset.pattern.permute.xlu0 0
          %1640 = vperm.xlu0 %1639, %v917
          %v1641 = vpop.permute.xlu0 %1640
          %1642 = vset.pattern.permute.xlu0 0
          %1643 = vperm.xlu0 %1642, %v918
          %v1644 = vpop.permute.xlu0 %1643
          %1645 = vset.pattern.permute.xlu0 0
          %1646 = vperm.xlu0 %1645, %v919
          %v1647 = vpop.permute.xlu0 %1646
          %1648 = vset.pattern.permute.xlu0 0
          %1649 = vperm.xlu0 %1648, %v920
          %v1650 = vpop.permute.xlu0 %1649
          %1651 = vset.pattern.permute.xlu0 0
          %1652 = vperm.xlu0 %1651, %v921
          %v1653 = vpop.permute.xlu0 %1652
          %1654 = vset.pattern.permute.xlu0 0
          %1655 = vperm.xlu0 %1654, %v922
          %v1656 = vpop.permute.xlu0 %1655
          %1657 = vset.pattern.permute.xlu0 0
          %1658 = vperm.xlu0 %1657, %v923
          %v1659 = vpop.permute.xlu0 %1658
          %1660 = vset.pattern.permute.xlu0 0
          %1661 = vperm.xlu0 %1660, %v924
          %v1662 = vpop.permute.xlu0 %1661
          %1663 = vset.pattern.permute.xlu0 0
          %1664 = vperm.xlu0 %1663, %v925
          %v1665 = vpop.permute.xlu0 %1664
          %1666 = vset.pattern.permute.xlu0 0
          %1667 = vperm.xlu0 %1666, %v926
          %v1668 = vpop.permute.xlu0 %1667
          %1669 = vset.pattern.permute.xlu0 0
          %1670 = vperm.xlu0 %1669, %v927
          %v1671 = vpop.permute.xlu0 %1670
          %1672 = vset.pattern.permute.xlu0 0
          %1673 = vperm.xlu0 %1672, %v928
          %v1674 = vpop.permute.xlu0 %1673
          %1675 = vset.pattern.permute.xlu0 0
          %1676 = vperm.xlu0 %1675, %v929
          %v1677 = vpop.permute.xlu0 %1676
          %1678 = vset.pattern.permute.xlu0 0
          %1679 = vperm.xlu0 %1678, %v930
          %v1680 = vpop.permute.xlu0 %1679
          %1681 = vset.pattern.permute.xlu0 0
          %1682 = vperm.xlu0 %1681, %v931
          %v1683 = vpop.permute.xlu0 %1682
          %1684 = vset.pattern.permute.xlu0 0
          %1685 = vperm.xlu0 %1684, %v932
          %v1686 = vpop.permute.xlu0 %1685
          %1687 = vset.pattern.permute.xlu0 0
          %1688 = vperm.xlu0 %1687, %v933
          %v1689 = vpop.permute.xlu0 %1688
          %1690 = vset.pattern.permute.xlu0 0
          %1691 = vperm.xlu0 %1690, %v934
          %v1692 = vpop.permute.xlu0 %1691
          %1693 = vset.pattern.permute.xlu0 0
          %1694 = vperm.xlu0 %1693, %v935
          %v1695 = vpop.permute.xlu0 %1694
          %1696 = vset.pattern.permute.xlu0 0
          %1697 = vperm.xlu0 %1696, %v936
          %v1698 = vpop.permute.xlu0 %1697
          %1699 = vset.pattern.permute.xlu0 0
          %1700 = vperm.xlu0 %1699, %v937
          %v1701 = vpop.permute.xlu0 %1700
          %1702 = vset.pattern.permute.xlu0 0
          %1703 = vperm.xlu0 %1702, %v938
          %v1704 = vpop.permute.xlu0 %1703
          %1705 = vset.pattern.permute.xlu0 0
          %1706 = vperm.xlu0 %1705, %v939
          %v1707 = vpop.permute.xlu0 %1706
          %1708 = vset.pattern.permute.xlu0 0
          %1709 = vperm.xlu0 %1708, %v940
          %v1710 = vpop.permute.xlu0 %1709
          %1711 = vset.pattern.permute.xlu0 0
          %1712 = vperm.xlu0 %1711, %v941
          %v1713 = vpop.permute.xlu0 %1712
          %1714 = vset.pattern.permute.xlu0 0
          %1715 = vperm.xlu0 %1714, %v942
          %v1716 = vpop.permute.xlu0 %1715
          %1717 = vset.pattern.permute.xlu0 0
          %1718 = vperm.xlu0 %1717, %v943
          %v1719 = vpop.permute.xlu0 %1718
          %1720 = vset.pattern.permute.xlu0 0
          %1721 = vperm.xlu0 %1720, %v944
          %v1722 = vpop.permute.xlu0 %1721
          %1723 = vset.pattern.permute.xlu0 0
          %1724 = vperm.xlu0 %1723, %v945
          %v1725 = vpop.permute.xlu0 %1724
          %1726 = vset.pattern.permute.xlu0 0
          %1727 = vperm.xlu0 %1726, %v946
          %v1728 = vpop.permute.xlu0 %1727
          %1729 = vset.pattern.permute.xlu0 0
          %1730 = vperm.xlu0 %1729, %v947
          %v1731 = vpop.permute.xlu0 %1730
          %1732 = vset.pattern.permute.xlu0 0
          %1733 = vperm.xlu0 %1732, %v948
          %v1734 = vpop.permute.xlu0 %1733
          %1735 = vset.pattern.permute.xlu0 0
          %1736 = vperm.xlu0 %1735, %v949
          %v1737 = vpop.permute.xlu0 %1736
          %1738 = vset.pattern.permute.xlu0 0
          %1739 = vperm.xlu0 %1738, %v950
          %v1740 = vpop.permute.xlu0 %1739
          %1741 = vset.pattern.permute.xlu0 0
          %1742 = vperm.xlu0 %1741, %v951
          %v1743 = vpop.permute.xlu0 %1742
          %1744 = vset.pattern.permute.xlu0 0
          %1745 = vperm.xlu0 %1744, %v952
          %v1746 = vpop.permute.xlu0 %1745
          %1747 = vset.pattern.permute.xlu0 0
          %1748 = vperm.xlu0 %1747, %v953
          %v1749 = vpop.permute.xlu0 %1748
          %1750 = vset.pattern.permute.xlu0 0
          %1751 = vperm.xlu0 %1750, %v954
          %v1752 = vpop.permute.xlu0 %1751
          %1753 = vset.pattern.permute.xlu0 0
          %1754 = vperm.xlu0 %1753, %v955
          %v1755 = vpop.permute.xlu0 %1754
          %1756 = vset.pattern.permute.xlu0 0
          %1757 = vperm.xlu0 %1756, %v956
          %v1758 = vpop.permute.xlu0 %1757
          %1759 = vset.pattern.permute.xlu0 0
          %1760 = vperm.xlu0 %1759, %v957
          %v1761 = vpop.permute.xlu0 %1760
          %1762 = vset.pattern.permute.xlu0 0
          %1763 = vperm.xlu0 %1762, %v958
          %v1764 = vpop.permute.xlu0 %1763
          %1765 = vset.pattern.permute.xlu0 0
          %1766 = vperm.xlu0 %1765, %v959
          %v1767 = vpop.permute.xlu0 %1766
          %1768 = vset.pattern.permute.xlu0 0
          %1769 = vperm.xlu0 %1768, %v960
          %v1770 = vpop.permute.xlu0 %1769
          %1771 = vset.pattern.permute.xlu0 0
          %1772 = vperm.xlu0 %1771, %v961
          %v1773 = vpop.permute.xlu0 %1772
          %1774 = vset.pattern.permute.xlu0 0
          %1775 = vperm.xlu0 %1774, %v962
          %v1776 = vpop.permute.xlu0 %1775
          %1777 = vset.pattern.permute.xlu0 0
          %1778 = vperm.xlu0 %1777, %v963
          %v1779 = vpop.permute.xlu0 %1778
          %1780 = vset.pattern.permute.xlu0 0
          %1781 = vperm.xlu0 %1780, %v964
          %v1782 = vpop.permute.xlu0 %1781
          %1783 = vset.pattern.permute.xlu0 0
          %1784 = vperm.xlu0 %1783, %v965
          %v1785 = vpop.permute.xlu0 %1784
          %1786 = vset.pattern.permute.xlu0 0
          %1787 = vperm.xlu0 %1786, %v966
          %v1788 = vpop.permute.xlu0 %1787
          %1789 = vset.pattern.permute.xlu0 0
          %1790 = vperm.xlu0 %1789, %v967
          %v1791 = vpop.permute.xlu0 %1790
          %1792 = vset.pattern.permute.xlu0 0
          %1793 = vperm.xlu0 %1792, %v968
          %v1794 = vpop.permute.xlu0 %1793
          %1795 = vset.pattern.permute.xlu0 0
          %1796 = vperm.xlu0 %1795, %v969
          %v1797 = vpop.permute.xlu0 %1796
          %1798 = vset.pattern.permute.xlu0 0
          %1799 = vperm.xlu0 %1798, %v970
          %v1800 = vpop.permute.xlu0 %1799
          %1801 = vset.pattern.permute.xlu0 0
          %1802 = vperm.xlu0 %1801, %v971
          %v1803 = vpop.permute.xlu0 %1802
          %1804 = vset.pattern.permute.xlu0 0
          %1805 = vperm.xlu0 %1804, %v972
          %v1806 = vpop.permute.xlu0 %1805
          %1807 = vset.pattern.permute.xlu0 0
          %1808 = vperm.xlu0 %1807, %v973
          %v1809 = vpop.permute.xlu0 %1808
          %1810 = vset.pattern.permute.xlu0 0
          %1811 = vperm.xlu0 %1810, %v974
          %v1812 = vpop.permute.xlu0 %1811
          %1813 = vset.pattern.permute.xlu0 0
          %1814 = vperm.xlu0 %1813, %v975
          %v1815 = vpop.permute.xlu0 %1814
          %1816 = vset.pattern.permute.xlu0 0
          %1817 = vperm.xlu0 %1816, %v976
          %v1818 = vpop.permute.xlu0 %1817
          %1819 = vset.pattern.permute.xlu0 0
          %1820 = vperm.xlu0 %1819, %v977
          %v1821 = vpop.permute.xlu0 %1820
          %1822 = vset.pattern.permute.xlu0 0
          %1823 = vperm.xlu0 %1822, %v978
          %v1824 = vpop.permute.xlu0 %1823
          %1825 = vset.pattern.permute.xlu0 0
          %1826 = vperm.xlu0 %1825, %v979
          %v1827 = vpop.permute.xlu0 %1826
          %1828 = vset.pattern.permute.xlu0 0
          %1829 = vperm.xlu0 %1828, %v980
          %v1830 = vpop.permute.xlu0 %1829
          %1831 = vset.pattern.permute.xlu0 0
          %1832 = vperm.xlu0 %1831, %v981
          %v1833 = vpop.permute.xlu0 %1832
          %1834 = vset.pattern.permute.xlu0 0
          %1835 = vperm.xlu0 %1834, %v982
          %v1836 = vpop.permute.xlu0 %1835
          %1837 = vset.pattern.permute.xlu0 0
          %1838 = vperm.xlu0 %1837, %v983
          %v1839 = vpop.permute.xlu0 %1838
          %1840 = vset.pattern.permute.xlu0 0
          %1841 = vperm.xlu0 %1840, %v984
          %v1842 = vpop.permute.xlu0 %1841
          %1843 = vset.pattern.permute.xlu0 0
          %1844 = vperm.xlu0 %1843, %v985
          %v1845 = vpop.permute.xlu0 %1844
          %1846 = vset.pattern.permute.xlu0 0
          %1847 = vperm.xlu0 %1846, %v986
          %v1848 = vpop.permute.xlu0 %1847
          %1849 = vset.pattern.permute.xlu0 0
          %1850 = vperm.xlu0 %1849, %v987
          %v1851 = vpop.permute.xlu0 %1850
          %1852 = vset.pattern.permute.xlu0 0
          %1853 = vperm.xlu0 %1852, %v988
          %v1854 = vpop.permute.xlu0 %1853
          %1855 = vset.pattern.permute.xlu0 0
          %1856 = vperm.xlu0 %1855, %v989
          %v1857 = vpop.permute.xlu0 %1856
          %1858 = vset.pattern.permute.xlu0 0
          %1859 = vperm.xlu0 %1858, %v990
          %v1860 = vpop.permute.xlu0 %1859
          %1861 = vset.pattern.permute.xlu0 0
          %1862 = vperm.xlu0 %1861, %v991
          %v1863 = vpop.permute.xlu0 %1862
          %1864 = vset.pattern.permute.xlu0 0
          %1865 = vperm.xlu0 %1864, %v992
          %v1866 = vpop.permute.xlu0 %1865
          %1867 = vset.pattern.permute.xlu0 0
          %1868 = vperm.xlu0 %1867, %v993
          %v1869 = vpop.permute.xlu0 %1868
          %1870 = vset.pattern.permute.xlu0 0
          %1871 = vperm.xlu0 %1870, %v994
          %v1872 = vpop.permute.xlu0 %1871
          %1873 = vset.pattern.permute.xlu0 0
          %1874 = vperm.xlu0 %1873, %v995
          %v1875 = vpop.permute.xlu0 %1874
          %1876 = vset.pattern.permute.xlu0 0
          %1877 = vperm.xlu0 %1876, %v996
          %v1878 = vpop.permute.xlu0 %1877
          %1879 = vset.pattern.permute.xlu0 0
          %1880 = vperm.xlu0 %1879, %v997
          %v1881 = vpop.permute.xlu0 %1880
          %1882 = vset.pattern.permute.xlu0 0
          %1883 = vperm.xlu0 %1882, %v998
          %v1884 = vpop.permute.xlu0 %1883
          %1885 = vset.pattern.permute.xlu0 0
          %1886 = vperm.xlu0 %1885, %v999
          %v1887 = vpop.permute.xlu0 %1886
          %1888 = vset.pattern.permute.xlu0 0
          %1889 = vperm.xlu0 %1888, %v1000
          %v1890 = vpop.permute.xlu0 %1889
          %1891 = vset.pattern.permute.xlu0 0
          %1892 = vperm.xlu0 %1891, %v1001
          %v1893 = vpop.permute.xlu0 %1892
          %1894 = vset.pattern.permute.xlu0 0
          %1895 = vperm.xlu0 %1894, %v1002
          %v1896 = vpop.permute.xlu0 %1895
          %1897 = vset.pattern.permute.xlu0 0
          %1898 = vperm.xlu0 %1897, %v1003
          %v1899 = vpop.permute.xlu0 %1898
          %1900 = vset.pattern.permute.xlu0 0
          %1901 = vperm.xlu0 %1900, %v1004
          %v1902 = vpop.permute.xlu0 %1901
          %1903 = vset.pattern.permute.xlu0 0
          %1904 = vperm.xlu0 %1903, %v1005
          %v1905 = vpop.permute.xlu0 %1904
          %1906 = vset.pattern.permute.xlu0 0
          %1907 = vperm.xlu0 %1906, %v1006
          %v1908 = vpop.permute.xlu0 %1907
          %1909 = vset.pattern.permute.xlu0 0
          %1910 = vperm.xlu0 %1909, %v1007
          %v1911 = vpop.permute.xlu0 %1910
          %1912 = vset.pattern.permute.xlu0 0
          %1913 = vperm.xlu0 %1912, %v1008
          %v1914 = vpop.permute.xlu0 %1913
          %1915 = vset.pattern.permute.xlu0 0
          %1916 = vperm.xlu0 %1915, %v1009
          %v1917 = vpop.permute.xlu0 %1916
          %1918 = vset.pattern.permute.xlu0 0
          %1919 = vperm.xlu0 %1918, %v1010
          %v1920 = vpop.permute.xlu0 %1919
          %1921 = vset.pattern.permute.xlu0 0
          %1922 = vperm.xlu0 %1921, %v1011
          %v1923 = vpop.permute.xlu0 %1922
          %1924 = vset.pattern.permute.xlu0 0
          %1925 = vperm.xlu0 %1924, %v1012
          %v1926 = vpop.permute.xlu0 %1925
          %1927 = vset.pattern.permute.xlu0 0
          %1928 = vperm.xlu0 %1927, %v1013
          %v1929 = vpop.permute.xlu0 %1928
          %1930 = vset.pattern.permute.xlu0 0
          %1931 = vperm.xlu0 %1930, %v1014
          %v1932 = vpop.permute.xlu0 %1931
          %1933 = vset.pattern.permute.xlu0 0
          %1934 = vperm.xlu0 %1933, %v1015
          %v1935 = vpop.permute.xlu0 %1934
          %1936 = vset.pattern.permute.xlu0 0
          %1937 = vperm.xlu0 %1936, %v1016
          %v1938 = vpop.permute.xlu0 %1937
          %1939 = vset.pattern.permute.xlu0 0
          %1940 = vperm.xlu0 %1939, %v1017
          %v1941 = vpop.permute.xlu0 %1940
          %1942 = vset.pattern.permute.xlu0 0
          %1943 = vperm.xlu0 %1942, %v1018
          %v1944 = vpop.permute.xlu0 %1943
          %1945 = vset.pattern.permute.xlu0 0
          %1946 = vperm.xlu0 %1945, %v1019
          %v1947 = vpop.permute.xlu0 %1946
          %1948 = vset.pattern.permute.xlu0 0
          %1949 = vperm.xlu0 %1948, %v1020
          %v1950 = vpop.permute.xlu0 %1949
          %1951 = vset.pattern.permute.xlu0 0
          %1952 = vperm.xlu0 %1951, %v1021
          %v1953 = vpop.permute.xlu0 %1952
          %1954 = vset.pattern.permute.xlu0 0
          %1955 = vperm.xlu0 %1954, %v1022
          %v1956 = vpop.permute.xlu0 %1955
          %1957 = vset.pattern.permute.xlu0 0
          %1958 = vperm.xlu0 %1957, %v1023
          %v1959 = vpop.permute.xlu0 %1958
          %1960 = vset.pattern.permute.xlu0 0
          %1961 = vperm.xlu0 %1960, %v1024
          %v1962 = vpop.permute.xlu0 %1961
          %1963 = vset.pattern.permute.xlu0 0
          %1964 = vperm.xlu0 %1963, %v1025
          %v1965 = vpop.permute.xlu0 %1964
          %1966 = vset.pattern.permute.xlu0 0
          %1967 = vperm.xlu0 %1966, %v1026
          %v1968 = vpop.permute.xlu0 %1967
          %1969 = vset.pattern.permute.xlu0 0
          %1970 = vperm.xlu0 %1969, %v1027
          %v1971 = vpop.permute.xlu0 %1970
          %1972 = vset.pattern.permute.xlu0 0
          %1973 = vperm.xlu0 %1972, %v1028
          %v1974 = vpop.permute.xlu0 %1973
          %1975 = vset.pattern.permute.xlu0 0
          %1976 = vperm.xlu0 %1975, %v1029
          %v1977 = vpop.permute.xlu0 %1976
          %1978 = vset.pattern.permute.xlu0 0
          %1979 = vperm.xlu0 %1978, %v1030
          %v1980 = vpop.permute.xlu0 %1979
          %1981 = vset.pattern.permute.xlu0 0
          %1982 = vperm.xlu0 %1981, %v1031
          %v1983 = vpop.permute.xlu0 %1982
          %1984 = vset.pattern.permute.xlu0 0
          %1985 = vperm.xlu0 %1984, %v1032
          %v1986 = vpop.permute.xlu0 %1985
          %1987 = vset.pattern.permute.xlu0 0
          %1988 = vperm.xlu0 %1987, %v1033
          %v1989 = vpop.permute.xlu0 %1988
          %1990 = vset.pattern.permute.xlu0 0
          %1991 = vperm.xlu0 %1990, %v1034
          %v1992 = vpop.permute.xlu0 %1991
          %1993 = vset.pattern.permute.xlu0 0
          %1994 = vperm.xlu0 %1993, %v1035
          %v1995 = vpop.permute.xlu0 %1994
          %1996 = vset.pattern.permute.xlu0 0
          %1997 = vperm.xlu0 %1996, %v1036
          %v1998 = vpop.permute.xlu0 %1997
          %1999 = vset.pattern.permute.xlu0 0
          %2000 = vperm.xlu0 %1999, %v1037
          %v2001 = vpop.permute.xlu0 %2000
          %2002 = vset.pattern.permute.xlu0 0
          %2003 = vperm.xlu0 %2002, %v1038
          %v2004 = vpop.permute.xlu0 %2003
          %2005 = vset.pattern.permute.xlu0 0
          %2006 = vperm.xlu0 %2005, %v1039
          %v2007 = vpop.permute.xlu0 %2006
          %2008 = vset.pattern.permute.xlu0 0
          %2009 = vperm.xlu0 %2008, %v1040
          %v2010 = vpop.permute.xlu0 %2009
          %2011 = vset.pattern.permute.xlu0 0
          %2012 = vperm.xlu0 %2011, %v1041
          %v2013 = vpop.permute.xlu0 %2012
          %2014 = vset.pattern.permute.xlu0 0
          %2015 = vperm.xlu0 %2014, %v1042
          %v2016 = vpop.permute.xlu0 %2015
          %2017 = vset.pattern.permute.xlu0 0
          %2018 = vperm.xlu0 %2017, %v1043
          %v2019 = vpop.permute.xlu0 %2018
          %2020 = vset.pattern.permute.xlu0 0
          %2021 = vperm.xlu0 %2020, %v1044
          %v2022 = vpop.permute.xlu0 %2021
          %2023 = vset.pattern.permute.xlu0 0
          %2024 = vperm.xlu0 %2023, %v1045
          %v2025 = vpop.permute.xlu0 %2024
          %2026 = vset.pattern.permute.xlu0 0
          %2027 = vperm.xlu0 %2026, %v1046
          %v2028 = vpop.permute.xlu0 %2027
          %2029 = vset.pattern.permute.xlu0 0
          %2030 = vperm.xlu0 %2029, %v1047
          %v2031 = vpop.permute.xlu0 %2030
          %2032 = vset.pattern.permute.xlu0 0
          %2033 = vperm.xlu0 %2032, %v1048
          %v2034 = vpop.permute.xlu0 %2033
          %2035 = vset.pattern.permute.xlu0 0
          %2036 = vperm.xlu0 %2035, %v1049
          %v2037 = vpop.permute.xlu0 %2036
          %2038 = vset.pattern.permute.xlu0 0
          %2039 = vperm.xlu0 %2038, %v1050
          %v2040 = vpop.permute.xlu0 %2039
          %2041 = vset.pattern.permute.xlu0 0
          %2042 = vperm.xlu0 %2041, %v1051
          %v2043 = vpop.permute.xlu0 %2042
          %2044 = vset.pattern.permute.xlu0 0
          %2045 = vperm.xlu0 %2044, %v1052
          %v2046 = vpop.permute.xlu0 %2045
          %2047 = vset.pattern.permute.xlu0 0
          %2048 = vperm.xlu0 %2047, %v1053
          %v2049 = vpop.permute.xlu0 %2048
          %2050 = vset.pattern.permute.xlu0 0
          %2051 = vperm.xlu0 %2050, %v1054
          %v2052 = vpop.permute.xlu0 %2051
          %2053 = vset.pattern.permute.xlu0 0
          %2054 = vperm.xlu0 %2053, %v1055
          %v2055 = vpop.permute.xlu0 %2054
          %2056 = vset.pattern.permute.xlu0 0
          %2057 = vperm.xlu0 %2056, %v1056
          %v2058 = vpop.permute.xlu0 %2057
          %2059 = vset.pattern.permute.xlu0 0
          %2060 = vperm.xlu0 %2059, %v1057
          %v2061 = vpop.permute.xlu0 %2060
          %2062 = vset.pattern.permute.xlu0 0
          %2063 = vperm.xlu0 %2062, %v1058
          %v2064 = vpop.permute.xlu0 %2063
          %2065 = vset.pattern.permute.xlu0 0
          %2066 = vperm.xlu0 %2065, %v1059
          %v2067 = vpop.permute.xlu0 %2066
          %2068 = vset.pattern.permute.xlu0 0
          %2069 = vperm.xlu0 %2068, %v1060
          %v2070 = vpop.permute.xlu0 %2069
          %2071 = vset.pattern.permute.xlu0 0
          %2072 = vperm.xlu0 %2071, %v1061
          %v2073 = vpop.permute.xlu0 %2072
          %2074 = vset.pattern.permute.xlu0 0
          %2075 = vperm.xlu0 %2074, %v1062
          %v2076 = vpop.permute.xlu0 %2075
          %2077 = vset.pattern.permute.xlu0 0
          %2078 = vperm.xlu0 %2077, %v1063
          %v2079 = vpop.permute.xlu0 %2078
          %2080 = vset.pattern.permute.xlu0 0
          %2081 = vperm.xlu0 %2080, %v1064
          %v2082 = vpop.permute.xlu0 %2081
          %2083 = vset.pattern.permute.xlu0 0
          %2084 = vperm.xlu0 %2083, %v1065
          %v2085 = vpop.permute.xlu0 %2084
          %2086 = vset.pattern.permute.xlu0 0
          %2087 = vperm.xlu0 %2086, %v1066
          %v2088 = vpop.permute.xlu0 %2087
          %2089 = vset.pattern.permute.xlu0 0
          %2090 = vperm.xlu0 %2089, %v1067
          %v2091 = vpop.permute.xlu0 %2090
          %v2092 = vlaneseq
          %v2093 = vshrl.u32 %v2092, 7
          %v2094 = vsub.s32 %v485, %v2093
          %v2095 = vrot.slane %v1326, %v2094
          %v2096 = vadd.s32 %v485, 4294967288
          %v2097 = vlaneseq
          %v2098 = vshrl.u32 %v2097, 7
          %v2099 = vsub.s32 %v2096, %v2098
          %v2100 = vrot.slane %v1329, %v2099
          %vm2101 = vcmask 130112
          %v2102 = vsel %vm2101, %v2100, %v2095
          %v2103 = vlaneseq
          %v2104 = vshrl.u32 %v2103, 7
          %v2105 = vsub.s32 %v485, %v2104
          %v2106 = vrot.slane %v1332, %v2105
          %v2107 = vlaneseq
          %v2108 = vshrl.u32 %v2107, 7
          %v2109 = vsub.s32 %v2096, %v2108
          %v2110 = vrot.slane %v1335, %v2109
          %v2111 = vsel %vm2101, %v2110, %v2106
          %v2112 = vlaneseq
          %v2113 = vshrl.u32 %v2112, 7
          %v2114 = vsub.s32 %v485, %v2113
          %v2115 = vrot.slane %v1338, %v2114
          %v2116 = vlaneseq
          %v2117 = vshrl.u32 %v2116, 7
          %v2118 = vsub.s32 %v2096, %v2117
          %v2119 = vrot.slane %v1341, %v2118
          %v2120 = vsel %vm2101, %v2119, %v2115
          %v2121 = vlaneseq
          %v2122 = vshrl.u32 %v2121, 7
          %v2123 = vsub.s32 %v485, %v2122
          %v2124 = vrot.slane %v1344, %v2123
          %v2125 = vlaneseq
          %v2126 = vshrl.u32 %v2125, 7
          %v2127 = vsub.s32 %v2096, %v2126
          %v2128 = vrot.slane %v1347, %v2127
          %v2129 = vsel %vm2101, %v2128, %v2124
          %v2130 = vlaneseq
          %v2131 = vshrl.u32 %v2130, 7
          %v2132 = vsub.s32 %v485, %v2131
          %v2133 = vrot.slane %v1350, %v2132
          %v2134 = vlaneseq
          %v2135 = vshrl.u32 %v2134, 7
          %v2136 = vsub.s32 %v2096, %v2135
          %v2137 = vrot.slane %v1353, %v2136
          %v2138 = vsel %vm2101, %v2137, %v2133
          %v2139 = vlaneseq
          %v2140 = vshrl.u32 %v2139, 7
          %v2141 = vsub.s32 %v485, %v2140
          %v2142 = vrot.slane %v1356, %v2141
          %v2143 = vlaneseq
          %v2144 = vshrl.u32 %v2143, 7
          %v2145 = vsub.s32 %v2096, %v2144
          %v2146 = vrot.slane %v1359, %v2145
          %v2147 = vsel %vm2101, %v2146, %v2142
          %v2148 = vlaneseq
          %v2149 = vshrl.u32 %v2148, 7
          %v2150 = vsub.s32 %v485, %v2149
          %v2151 = vrot.slane %v1362, %v2150
          %v2152 = vlaneseq
          %v2153 = vshrl.u32 %v2152, 7
          %v2154 = vsub.s32 %v2096, %v2153
          %v2155 = vrot.slane %v1365, %v2154
          %v2156 = vsel %vm2101, %v2155, %v2151
          %v2157 = vlaneseq
          %v2158 = vshrl.u32 %v2157, 7
          %v2159 = vsub.s32 %v485, %v2158
          %v2160 = vrot.slane %v1368, %v2159
          %v2161 = vlaneseq
          %v2162 = vshrl.u32 %v2161, 7
          %v2163 = vsub.s32 %v2096, %v2162
          %v2164 = vrot.slane %v1371, %v2163
          %v2165 = vsel %vm2101, %v2164, %v2160
          %v2166 = vlaneseq
          %v2167 = vshrl.u32 %v2166, 7
          %v2168 = vsub.s32 %v485, %v2167
          %v2169 = vrot.slane %v1374, %v2168
          %v2170 = vlaneseq
          %v2171 = vshrl.u32 %v2170, 7
          %v2172 = vsub.s32 %v2096, %v2171
          %v2173 = vrot.slane %v1377, %v2172
          %v2174 = vsel %vm2101, %v2173, %v2169
          %v2175 = vlaneseq
          %v2176 = vshrl.u32 %v2175, 7
          %v2177 = vsub.s32 %v485, %v2176
          %v2178 = vrot.slane %v1380, %v2177
          %v2179 = vlaneseq
          %v2180 = vshrl.u32 %v2179, 7
          %v2181 = vsub.s32 %v2096, %v2180
          %v2182 = vrot.slane %v1383, %v2181
          %v2183 = vsel %vm2101, %v2182, %v2178
          %v2184 = vlaneseq
          %v2185 = vshrl.u32 %v2184, 7
          %v2186 = vsub.s32 %v485, %v2185
          %v2187 = vrot.slane %v1386, %v2186
          %v2188 = vlaneseq
          %v2189 = vshrl.u32 %v2188, 7
          %v2190 = vsub.s32 %v2096, %v2189
          %v2191 = vrot.slane %v1389, %v2190
          %v2192 = vsel %vm2101, %v2191, %v2187
          %v2193 = vlaneseq
          %v2194 = vshrl.u32 %v2193, 7
          %v2195 = vsub.s32 %v485, %v2194
          %v2196 = vrot.slane %v1392, %v2195
          %v2197 = vlaneseq
          %v2198 = vshrl.u32 %v2197, 7
          %v2199 = vsub.s32 %v2096, %v2198
          %v2200 = vrot.slane %v1395, %v2199
          %v2201 = vsel %vm2101, %v2200, %v2196
          %v2202 = vlaneseq
          %v2203 = vshrl.u32 %v2202, 7
          %v2204 = vsub.s32 %v485, %v2203
          %v2205 = vrot.slane %v1398, %v2204
          %v2206 = vlaneseq
          %v2207 = vshrl.u32 %v2206, 7
          %v2208 = vsub.s32 %v2096, %v2207
          %v2209 = vrot.slane %v1401, %v2208
          %v2210 = vsel %vm2101, %v2209, %v2205
          %v2211 = vlaneseq
          %v2212 = vshrl.u32 %v2211, 7
          %v2213 = vsub.s32 %v485, %v2212
          %v2214 = vrot.slane %v1404, %v2213
          %v2215 = vlaneseq
          %v2216 = vshrl.u32 %v2215, 7
          %v2217 = vsub.s32 %v2096, %v2216
          %v2218 = vrot.slane %v1407, %v2217
          %v2219 = vsel %vm2101, %v2218, %v2214
          %v2220 = vlaneseq
          %v2221 = vshrl.u32 %v2220, 7
          %v2222 = vsub.s32 %v485, %v2221
          %v2223 = vrot.slane %v1410, %v2222
          %v2224 = vlaneseq
          %v2225 = vshrl.u32 %v2224, 7
          %v2226 = vsub.s32 %v2096, %v2225
          %v2227 = vrot.slane %v1413, %v2226
          %v2228 = vsel %vm2101, %v2227, %v2223
          %v2229 = vlaneseq
          %v2230 = vshrl.u32 %v2229, 7
          %v2231 = vsub.s32 %v485, %v2230
          %v2232 = vrot.slane %v1416, %v2231
          %v2233 = vlaneseq
          %v2234 = vshrl.u32 %v2233, 7
          %v2235 = vsub.s32 %v2096, %v2234
          %v2236 = vrot.slane %v1419, %v2235
          %v2237 = vsel %vm2101, %v2236, %v2232
          %v2238 = vlaneseq
          %v2239 = vshrl.u32 %v2238, 7
          %v2240 = vsub.s32 %v485, %v2239
          %v2241 = vrot.slane %v1422, %v2240
          %v2242 = vlaneseq
          %v2243 = vshrl.u32 %v2242, 7
          %v2244 = vsub.s32 %v2096, %v2243
          %v2245 = vrot.slane %v1425, %v2244
          %v2246 = vsel %vm2101, %v2245, %v2241
          %v2247 = vlaneseq
          %v2248 = vshrl.u32 %v2247, 7
          %v2249 = vsub.s32 %v485, %v2248
          %v2250 = vrot.slane %v1428, %v2249
          %v2251 = vlaneseq
          %v2252 = vshrl.u32 %v2251, 7
          %v2253 = vsub.s32 %v2096, %v2252
          %v2254 = vrot.slane %v1431, %v2253
          %v2255 = vsel %vm2101, %v2254, %v2250
          %v2256 = vlaneseq
          %v2257 = vshrl.u32 %v2256, 7
          %v2258 = vsub.s32 %v485, %v2257
          %v2259 = vrot.slane %v1434, %v2258
          %v2260 = vlaneseq
          %v2261 = vshrl.u32 %v2260, 7
          %v2262 = vsub.s32 %v2096, %v2261
          %v2263 = vrot.slane %v1437, %v2262
          %v2264 = vsel %vm2101, %v2263, %v2259
          %v2265 = vlaneseq
          %v2266 = vshrl.u32 %v2265, 7
          %v2267 = vsub.s32 %v485, %v2266
          %v2268 = vrot.slane %v1440, %v2267
          %v2269 = vlaneseq
          %v2270 = vshrl.u32 %v2269, 7
          %v2271 = vsub.s32 %v2096, %v2270
          %v2272 = vrot.slane %v1443, %v2271
          %v2273 = vsel %vm2101, %v2272, %v2268
          %v2274 = vlaneseq
          %v2275 = vshrl.u32 %v2274, 7
          %v2276 = vsub.s32 %v485, %v2275
          %v2277 = vrot.slane %v1446, %v2276
          %v2278 = vlaneseq
          %v2279 = vshrl.u32 %v2278, 7
          %v2280 = vsub.s32 %v2096, %v2279
          %v2281 = vrot.slane %v1449, %v2280
          %v2282 = vsel %vm2101, %v2281, %v2277
          %v2283 = vlaneseq
          %v2284 = vshrl.u32 %v2283, 7
          %v2285 = vsub.s32 %v485, %v2284
          %v2286 = vrot.slane %v1452, %v2285
          %v2287 = vlaneseq
          %v2288 = vshrl.u32 %v2287, 7
          %v2289 = vsub.s32 %v2096, %v2288
          %v2290 = vrot.slane %v1455, %v2289
          %v2291 = vsel %vm2101, %v2290, %v2286
          %v2292 = vlaneseq
          %v2293 = vshrl.u32 %v2292, 7
          %v2294 = vsub.s32 %v485, %v2293
          %v2295 = vrot.slane %v1458, %v2294
          %v2296 = vlaneseq
          %v2297 = vshrl.u32 %v2296, 7
          %v2298 = vsub.s32 %v2096, %v2297
          %v2299 = vrot.slane %v1461, %v2298
          %v2300 = vsel %vm2101, %v2299, %v2295
          %v2301 = vlaneseq
          %v2302 = vshrl.u32 %v2301, 7
          %v2303 = vsub.s32 %v485, %v2302
          %v2304 = vrot.slane %v1464, %v2303
          %v2305 = vlaneseq
          %v2306 = vshrl.u32 %v2305, 7
          %v2307 = vsub.s32 %v2096, %v2306
          %v2308 = vrot.slane %v1467, %v2307
          %v2309 = vsel %vm2101, %v2308, %v2304
          %v2310 = vlaneseq
          %v2311 = vshrl.u32 %v2310, 7
          %v2312 = vsub.s32 %v485, %v2311
          %v2313 = vrot.slane %v1470, %v2312
          %v2314 = vlaneseq
          %v2315 = vshrl.u32 %v2314, 7
          %v2316 = vsub.s32 %v2096, %v2315
          %v2317 = vrot.slane %v1473, %v2316
          %v2318 = vsel %vm2101, %v2317, %v2313
          %v2319 = vlaneseq
          %v2320 = vshrl.u32 %v2319, 7
          %v2321 = vsub.s32 %v485, %v2320
          %v2322 = vrot.slane %v1476, %v2321
          %v2323 = vlaneseq
          %v2324 = vshrl.u32 %v2323, 7
          %v2325 = vsub.s32 %v2096, %v2324
          %v2326 = vrot.slane %v1479, %v2325
          %v2327 = vsel %vm2101, %v2326, %v2322
          %v2328 = vlaneseq
          %v2329 = vshrl.u32 %v2328, 7
          %v2330 = vsub.s32 %v485, %v2329
          %v2331 = vrot.slane %v1482, %v2330
          %v2332 = vlaneseq
          %v2333 = vshrl.u32 %v2332, 7
          %v2334 = vsub.s32 %v2096, %v2333
          %v2335 = vrot.slane %v1485, %v2334
          %v2336 = vsel %vm2101, %v2335, %v2331
          %v2337 = vlaneseq
          %v2338 = vshrl.u32 %v2337, 7
          %v2339 = vsub.s32 %v485, %v2338
          %v2340 = vrot.slane %v1488, %v2339
          %v2341 = vlaneseq
          %v2342 = vshrl.u32 %v2341, 7
          %v2343 = vsub.s32 %v2096, %v2342
          %v2344 = vrot.slane %v1491, %v2343
          %v2345 = vsel %vm2101, %v2344, %v2340
          %v2346 = vlaneseq
          %v2347 = vshrl.u32 %v2346, 7
          %v2348 = vsub.s32 %v485, %v2347
          %v2349 = vrot.slane %v1494, %v2348
          %v2350 = vlaneseq
          %v2351 = vshrl.u32 %v2350, 7
          %v2352 = vsub.s32 %v2096, %v2351
          %v2353 = vrot.slane %v1497, %v2352
          %v2354 = vsel %vm2101, %v2353, %v2349
          %v2355 = vlaneseq
          %v2356 = vshrl.u32 %v2355, 7
          %v2357 = vsub.s32 %v485, %v2356
          %v2358 = vrot.slane %v1500, %v2357
          %v2359 = vlaneseq
          %v2360 = vshrl.u32 %v2359, 7
          %v2361 = vsub.s32 %v2096, %v2360
          %v2362 = vrot.slane %v1503, %v2361
          %v2363 = vsel %vm2101, %v2362, %v2358
          %v2364 = vlaneseq
          %v2365 = vshrl.u32 %v2364, 7
          %v2366 = vsub.s32 %v485, %v2365
          %v2367 = vrot.slane %v1506, %v2366
          %v2368 = vlaneseq
          %v2369 = vshrl.u32 %v2368, 7
          %v2370 = vsub.s32 %v2096, %v2369
          %v2371 = vrot.slane %v1509, %v2370
          %v2372 = vsel %vm2101, %v2371, %v2367
          %v2373 = vlaneseq
          %v2374 = vshrl.u32 %v2373, 7
          %v2375 = vsub.s32 %v485, %v2374
          %v2376 = vrot.slane %v1512, %v2375
          %v2377 = vlaneseq
          %v2378 = vshrl.u32 %v2377, 7
          %v2379 = vsub.s32 %v2096, %v2378
          %v2380 = vrot.slane %v1515, %v2379
          %v2381 = vsel %vm2101, %v2380, %v2376
          %v2382 = vlaneseq
          %v2383 = vshrl.u32 %v2382, 7
          %v2384 = vsub.s32 %v485, %v2383
          %v2385 = vrot.slane %v1518, %v2384
          %v2386 = vlaneseq
          %v2387 = vshrl.u32 %v2386, 7
          %v2388 = vsub.s32 %v2096, %v2387
          %v2389 = vrot.slane %v1521, %v2388
          %v2390 = vsel %vm2101, %v2389, %v2385
          %v2391 = vlaneseq
          %v2392 = vshrl.u32 %v2391, 7
          %v2393 = vsub.s32 %v485, %v2392
          %v2394 = vrot.slane %v1524, %v2393
          %v2395 = vlaneseq
          %v2396 = vshrl.u32 %v2395, 7
          %v2397 = vsub.s32 %v2096, %v2396
          %v2398 = vrot.slane %v1527, %v2397
          %v2399 = vsel %vm2101, %v2398, %v2394
          %v2400 = vlaneseq
          %v2401 = vshrl.u32 %v2400, 7
          %v2402 = vsub.s32 %v485, %v2401
          %v2403 = vrot.slane %v1530, %v2402
          %v2404 = vlaneseq
          %v2405 = vshrl.u32 %v2404, 7
          %v2406 = vsub.s32 %v2096, %v2405
          %v2407 = vrot.slane %v1533, %v2406
          %v2408 = vsel %vm2101, %v2407, %v2403
          %v2409 = vlaneseq
          %v2410 = vshrl.u32 %v2409, 7
          %v2411 = vsub.s32 %v485, %v2410
          %v2412 = vrot.slane %v1536, %v2411
          %v2413 = vlaneseq
          %v2414 = vshrl.u32 %v2413, 7
          %v2415 = vsub.s32 %v2096, %v2414
          %v2416 = vrot.slane %v1539, %v2415
          %v2417 = vsel %vm2101, %v2416, %v2412
          %v2418 = vlaneseq
          %v2419 = vshrl.u32 %v2418, 7
          %v2420 = vsub.s32 %v485, %v2419
          %v2421 = vrot.slane %v1542, %v2420
          %v2422 = vlaneseq
          %v2423 = vshrl.u32 %v2422, 7
          %v2424 = vsub.s32 %v2096, %v2423
          %v2425 = vrot.slane %v1545, %v2424
          %v2426 = vsel %vm2101, %v2425, %v2421
          %v2427 = vlaneseq
          %v2428 = vshrl.u32 %v2427, 7
          %v2429 = vsub.s32 %v485, %v2428
          %v2430 = vrot.slane %v1548, %v2429
          %v2431 = vlaneseq
          %v2432 = vshrl.u32 %v2431, 7
          %v2433 = vsub.s32 %v2096, %v2432
          %v2434 = vrot.slane %v1551, %v2433
          %v2435 = vsel %vm2101, %v2434, %v2430
          %v2436 = vlaneseq
          %v2437 = vshrl.u32 %v2436, 7
          %v2438 = vsub.s32 %v485, %v2437
          %v2439 = vrot.slane %v1554, %v2438
          %v2440 = vlaneseq
          %v2441 = vshrl.u32 %v2440, 7
          %v2442 = vsub.s32 %v2096, %v2441
          %v2443 = vrot.slane %v1557, %v2442
          %v2444 = vsel %vm2101, %v2443, %v2439
          %v2445 = vlaneseq
          %v2446 = vshrl.u32 %v2445, 7
          %v2447 = vsub.s32 %v485, %v2446
          %v2448 = vrot.slane %v1560, %v2447
          %v2449 = vlaneseq
          %v2450 = vshrl.u32 %v2449, 7
          %v2451 = vsub.s32 %v2096, %v2450
          %v2452 = vrot.slane %v1563, %v2451
          %v2453 = vsel %vm2101, %v2452, %v2448
          %v2454 = vlaneseq
          %v2455 = vshrl.u32 %v2454, 7
          %v2456 = vsub.s32 %v485, %v2455
          %v2457 = vrot.slane %v1566, %v2456
          %v2458 = vlaneseq
          %v2459 = vshrl.u32 %v2458, 7
          %v2460 = vsub.s32 %v2096, %v2459
          %v2461 = vrot.slane %v1569, %v2460
          %v2462 = vsel %vm2101, %v2461, %v2457
          %v2463 = vlaneseq
          %v2464 = vshrl.u32 %v2463, 7
          %v2465 = vsub.s32 %v485, %v2464
          %v2466 = vrot.slane %v1572, %v2465
          %v2467 = vlaneseq
          %v2468 = vshrl.u32 %v2467, 7
          %v2469 = vsub.s32 %v2096, %v2468
          %v2470 = vrot.slane %v1575, %v2469
          %v2471 = vsel %vm2101, %v2470, %v2466
          %v2472 = vlaneseq
          %v2473 = vshrl.u32 %v2472, 7
          %v2474 = vsub.s32 %v485, %v2473
          %v2475 = vrot.slane %v1578, %v2474
          %v2476 = vlaneseq
          %v2477 = vshrl.u32 %v2476, 7
          %v2478 = vsub.s32 %v2096, %v2477
          %v2479 = vrot.slane %v1581, %v2478
          %v2480 = vsel %vm2101, %v2479, %v2475
          %v2481 = vlaneseq
          %v2482 = vshrl.u32 %v2481, 7
          %v2483 = vsub.s32 %v485, %v2482
          %v2484 = vrot.slane %v1584, %v2483
          %v2485 = vlaneseq
          %v2486 = vshrl.u32 %v2485, 7
          %v2487 = vsub.s32 %v2096, %v2486
          %v2488 = vrot.slane %v1587, %v2487
          %v2489 = vsel %vm2101, %v2488, %v2484
          %v2490 = vlaneseq
          %v2491 = vshrl.u32 %v2490, 7
          %v2492 = vsub.s32 %v485, %v2491
          %v2493 = vrot.slane %v1590, %v2492
          %v2494 = vlaneseq
          %v2495 = vshrl.u32 %v2494, 7
          %v2496 = vsub.s32 %v2096, %v2495
          %v2497 = vrot.slane %v1593, %v2496
          %v2498 = vsel %vm2101, %v2497, %v2493
          %v2499 = vlaneseq
          %v2500 = vshrl.u32 %v2499, 7
          %v2501 = vsub.s32 %v485, %v2500
          %v2502 = vrot.slane %v1596, %v2501
          %v2503 = vlaneseq
          %v2504 = vshrl.u32 %v2503, 7
          %v2505 = vsub.s32 %v2096, %v2504
          %v2506 = vrot.slane %v1599, %v2505
          %v2507 = vsel %vm2101, %v2506, %v2502
          %v2508 = vlaneseq
          %v2509 = vshrl.u32 %v2508, 7
          %v2510 = vsub.s32 %v485, %v2509
          %v2511 = vrot.slane %v1602, %v2510
          %v2512 = vlaneseq
          %v2513 = vshrl.u32 %v2512, 7
          %v2514 = vsub.s32 %v2096, %v2513
          %v2515 = vrot.slane %v1605, %v2514
          %v2516 = vsel %vm2101, %v2515, %v2511
          %v2517 = vlaneseq
          %v2518 = vshrl.u32 %v2517, 7
          %v2519 = vsub.s32 %v485, %v2518
          %v2520 = vrot.slane %v1608, %v2519
          %v2521 = vlaneseq
          %v2522 = vshrl.u32 %v2521, 7
          %v2523 = vsub.s32 %v2096, %v2522
          %v2524 = vrot.slane %v1611, %v2523
          %v2525 = vsel %vm2101, %v2524, %v2520
          %v2526 = vlaneseq
          %v2527 = vshrl.u32 %v2526, 7
          %v2528 = vsub.s32 %v485, %v2527
          %v2529 = vrot.slane %v1614, %v2528
          %v2530 = vlaneseq
          %v2531 = vshrl.u32 %v2530, 7
          %v2532 = vsub.s32 %v2096, %v2531
          %v2533 = vrot.slane %v1617, %v2532
          %v2534 = vsel %vm2101, %v2533, %v2529
          %v2535 = vlaneseq
          %v2536 = vshrl.u32 %v2535, 7
          %v2537 = vsub.s32 %v485, %v2536
          %v2538 = vrot.slane %v1620, %v2537
          %v2539 = vlaneseq
          %v2540 = vshrl.u32 %v2539, 7
          %v2541 = vsub.s32 %v2096, %v2540
          %v2542 = vrot.slane %v1623, %v2541
          %v2543 = vsel %vm2101, %v2542, %v2538
          %v2544 = vlaneseq
          %v2545 = vshrl.u32 %v2544, 7
          %v2546 = vsub.s32 %v485, %v2545
          %v2547 = vrot.slane %v1626, %v2546
          %v2548 = vlaneseq
          %v2549 = vshrl.u32 %v2548, 7
          %v2550 = vsub.s32 %v2096, %v2549
          %v2551 = vrot.slane %v1629, %v2550
          %v2552 = vsel %vm2101, %v2551, %v2547
          %v2553 = vlaneseq
          %v2554 = vshrl.u32 %v2553, 7
          %v2555 = vsub.s32 %v485, %v2554
          %v2556 = vrot.slane %v1632, %v2555
          %v2557 = vlaneseq
          %v2558 = vshrl.u32 %v2557, 7
          %v2559 = vsub.s32 %v2096, %v2558
          %v2560 = vrot.slane %v1635, %v2559
          %v2561 = vsel %vm2101, %v2560, %v2556
          %v2562 = vlaneseq
          %v2563 = vshrl.u32 %v2562, 7
          %v2564 = vsub.s32 %v485, %v2563
          %v2565 = vrot.slane %v1638, %v2564
          %v2566 = vlaneseq
          %v2567 = vshrl.u32 %v2566, 7
          %v2568 = vsub.s32 %v2096, %v2567
          %v2569 = vrot.slane %v1641, %v2568
          %v2570 = vsel %vm2101, %v2569, %v2565
          %v2571 = vlaneseq
          %v2572 = vshrl.u32 %v2571, 7
          %v2573 = vsub.s32 %v485, %v2572
          %v2574 = vrot.slane %v1644, %v2573
          %v2575 = vlaneseq
          %v2576 = vshrl.u32 %v2575, 7
          %v2577 = vsub.s32 %v2096, %v2576
          %v2578 = vrot.slane %v1647, %v2577
          %v2579 = vsel %vm2101, %v2578, %v2574
          %v2580 = vlaneseq
          %v2581 = vshrl.u32 %v2580, 7
          %v2582 = vsub.s32 %v485, %v2581
          %v2583 = vrot.slane %v1650, %v2582
          %v2584 = vlaneseq
          %v2585 = vshrl.u32 %v2584, 7
          %v2586 = vsub.s32 %v2096, %v2585
          %v2587 = vrot.slane %v1653, %v2586
          %v2588 = vsel %vm2101, %v2587, %v2583
          %v2589 = vlaneseq
          %v2590 = vshrl.u32 %v2589, 7
          %v2591 = vsub.s32 %v485, %v2590
          %v2592 = vrot.slane %v1656, %v2591
          %v2593 = vlaneseq
          %v2594 = vshrl.u32 %v2593, 7
          %v2595 = vsub.s32 %v2096, %v2594
          %v2596 = vrot.slane %v1659, %v2595
          %v2597 = vsel %vm2101, %v2596, %v2592
          %v2598 = vlaneseq
          %v2599 = vshrl.u32 %v2598, 7
          %v2600 = vsub.s32 %v485, %v2599
          %v2601 = vrot.slane %v1662, %v2600
          %v2602 = vlaneseq
          %v2603 = vshrl.u32 %v2602, 7
          %v2604 = vsub.s32 %v2096, %v2603
          %v2605 = vrot.slane %v1665, %v2604
          %v2606 = vsel %vm2101, %v2605, %v2601
          %v2607 = vlaneseq
          %v2608 = vshrl.u32 %v2607, 7
          %v2609 = vsub.s32 %v485, %v2608
          %v2610 = vrot.slane %v1668, %v2609
          %v2611 = vlaneseq
          %v2612 = vshrl.u32 %v2611, 7
          %v2613 = vsub.s32 %v2096, %v2612
          %v2614 = vrot.slane %v1671, %v2613
          %v2615 = vsel %vm2101, %v2614, %v2610
          %v2616 = vlaneseq
          %v2617 = vshrl.u32 %v2616, 7
          %v2618 = vsub.s32 %v485, %v2617
          %v2619 = vrot.slane %v1674, %v2618
          %v2620 = vlaneseq
          %v2621 = vshrl.u32 %v2620, 7
          %v2622 = vsub.s32 %v2096, %v2621
          %v2623 = vrot.slane %v1677, %v2622
          %v2624 = vsel %vm2101, %v2623, %v2619
          %v2625 = vlaneseq
          %v2626 = vshrl.u32 %v2625, 7
          %v2627 = vsub.s32 %v485, %v2626
          %v2628 = vrot.slane %v1680, %v2627
          %v2629 = vlaneseq
          %v2630 = vshrl.u32 %v2629, 7
          %v2631 = vsub.s32 %v2096, %v2630
          %v2632 = vrot.slane %v1683, %v2631
          %v2633 = vsel %vm2101, %v2632, %v2628
          %v2634 = vlaneseq
          %v2635 = vshrl.u32 %v2634, 7
          %v2636 = vsub.s32 %v485, %v2635
          %v2637 = vrot.slane %v1686, %v2636
          %v2638 = vlaneseq
          %v2639 = vshrl.u32 %v2638, 7
          %v2640 = vsub.s32 %v2096, %v2639
          %v2641 = vrot.slane %v1689, %v2640
          %v2642 = vsel %vm2101, %v2641, %v2637
          %v2643 = vlaneseq
          %v2644 = vshrl.u32 %v2643, 7
          %v2645 = vsub.s32 %v485, %v2644
          %v2646 = vrot.slane %v1692, %v2645
          %v2647 = vlaneseq
          %v2648 = vshrl.u32 %v2647, 7
          %v2649 = vsub.s32 %v2096, %v2648
          %v2650 = vrot.slane %v1695, %v2649
          %v2651 = vsel %vm2101, %v2650, %v2646
          %v2652 = vlaneseq
          %v2653 = vshrl.u32 %v2652, 7
          %v2654 = vsub.s32 %v485, %v2653
          %v2655 = vrot.slane %v1698, %v2654
          %v2656 = vlaneseq
          %v2657 = vshrl.u32 %v2656, 7
          %v2658 = vsub.s32 %v2096, %v2657
          %v2659 = vrot.slane %v1701, %v2658
          %v2660 = vsel %vm2101, %v2659, %v2655
          %v2661 = vlaneseq
          %v2662 = vshrl.u32 %v2661, 7
          %v2663 = vsub.s32 %v485, %v2662
          %v2664 = vrot.slane %v1704, %v2663
          %v2665 = vlaneseq
          %v2666 = vshrl.u32 %v2665, 7
          %v2667 = vsub.s32 %v2096, %v2666
          %v2668 = vrot.slane %v1707, %v2667
          %v2669 = vsel %vm2101, %v2668, %v2664
          %v2670 = vlaneseq
          %v2671 = vshrl.u32 %v2670, 7
          %v2672 = vsub.s32 %v485, %v2671
          %v2673 = vrot.slane %v1710, %v2672
          %v2674 = vlaneseq
          %v2675 = vshrl.u32 %v2674, 7
          %v2676 = vsub.s32 %v2096, %v2675
          %v2677 = vrot.slane %v1713, %v2676
          %v2678 = vsel %vm2101, %v2677, %v2673
          %v2679 = vlaneseq
          %v2680 = vshrl.u32 %v2679, 7
          %v2681 = vsub.s32 %v485, %v2680
          %v2682 = vrot.slane %v1716, %v2681
          %v2683 = vlaneseq
          %v2684 = vshrl.u32 %v2683, 7
          %v2685 = vsub.s32 %v2096, %v2684
          %v2686 = vrot.slane %v1719, %v2685
          %v2687 = vsel %vm2101, %v2686, %v2682
          %v2688 = vlaneseq
          %v2689 = vshrl.u32 %v2688, 7
          %v2690 = vsub.s32 %v485, %v2689
          %v2691 = vrot.slane %v1722, %v2690
          %v2692 = vlaneseq
          %v2693 = vshrl.u32 %v2692, 7
          %v2694 = vsub.s32 %v2096, %v2693
          %v2695 = vrot.slane %v1725, %v2694
          %v2696 = vsel %vm2101, %v2695, %v2691
          %v2697 = vlaneseq
          %v2698 = vshrl.u32 %v2697, 7
          %v2699 = vsub.s32 %v485, %v2698
          %v2700 = vrot.slane %v1728, %v2699
          %v2701 = vlaneseq
          %v2702 = vshrl.u32 %v2701, 7
          %v2703 = vsub.s32 %v2096, %v2702
          %v2704 = vrot.slane %v1731, %v2703
          %v2705 = vsel %vm2101, %v2704, %v2700
          %v2706 = vlaneseq
          %v2707 = vshrl.u32 %v2706, 7
          %v2708 = vsub.s32 %v485, %v2707
          %v2709 = vrot.slane %v1734, %v2708
          %v2710 = vlaneseq
          %v2711 = vshrl.u32 %v2710, 7
          %v2712 = vsub.s32 %v2096, %v2711
          %v2713 = vrot.slane %v1737, %v2712
          %v2714 = vsel %vm2101, %v2713, %v2709
          %v2715 = vlaneseq
          %v2716 = vshrl.u32 %v2715, 7
          %v2717 = vsub.s32 %v485, %v2716
          %v2718 = vrot.slane %v1740, %v2717
          %v2719 = vlaneseq
          %v2720 = vshrl.u32 %v2719, 7
          %v2721 = vsub.s32 %v2096, %v2720
          %v2722 = vrot.slane %v1743, %v2721
          %v2723 = vsel %vm2101, %v2722, %v2718
          %v2724 = vlaneseq
          %v2725 = vshrl.u32 %v2724, 7
          %v2726 = vsub.s32 %v485, %v2725
          %v2727 = vrot.slane %v1746, %v2726
          %v2728 = vlaneseq
          %v2729 = vshrl.u32 %v2728, 7
          %v2730 = vsub.s32 %v2096, %v2729
          %v2731 = vrot.slane %v1749, %v2730
          %v2732 = vsel %vm2101, %v2731, %v2727
          %v2733 = vlaneseq
          %v2734 = vshrl.u32 %v2733, 7
          %v2735 = vsub.s32 %v485, %v2734
          %v2736 = vrot.slane %v1752, %v2735
          %v2737 = vlaneseq
          %v2738 = vshrl.u32 %v2737, 7
          %v2739 = vsub.s32 %v2096, %v2738
          %v2740 = vrot.slane %v1755, %v2739
          %v2741 = vsel %vm2101, %v2740, %v2736
          %v2742 = vlaneseq
          %v2743 = vshrl.u32 %v2742, 7
          %v2744 = vsub.s32 %v485, %v2743
          %v2745 = vrot.slane %v1758, %v2744
          %v2746 = vlaneseq
          %v2747 = vshrl.u32 %v2746, 7
          %v2748 = vsub.s32 %v2096, %v2747
          %v2749 = vrot.slane %v1761, %v2748
          %v2750 = vsel %vm2101, %v2749, %v2745
          %v2751 = vlaneseq
          %v2752 = vshrl.u32 %v2751, 7
          %v2753 = vsub.s32 %v485, %v2752
          %v2754 = vrot.slane %v1764, %v2753
          %v2755 = vlaneseq
          %v2756 = vshrl.u32 %v2755, 7
          %v2757 = vsub.s32 %v2096, %v2756
          %v2758 = vrot.slane %v1767, %v2757
          %v2759 = vsel %vm2101, %v2758, %v2754
          %v2760 = vlaneseq
          %v2761 = vshrl.u32 %v2760, 7
          %v2762 = vsub.s32 %v485, %v2761
          %v2763 = vrot.slane %v1770, %v2762
          %v2764 = vlaneseq
          %v2765 = vshrl.u32 %v2764, 7
          %v2766 = vsub.s32 %v2096, %v2765
          %v2767 = vrot.slane %v1773, %v2766
          %v2768 = vsel %vm2101, %v2767, %v2763
          %v2769 = vlaneseq
          %v2770 = vshrl.u32 %v2769, 7
          %v2771 = vsub.s32 %v485, %v2770
          %v2772 = vrot.slane %v1776, %v2771
          %v2773 = vlaneseq
          %v2774 = vshrl.u32 %v2773, 7
          %v2775 = vsub.s32 %v2096, %v2774
          %v2776 = vrot.slane %v1779, %v2775
          %v2777 = vsel %vm2101, %v2776, %v2772
          %v2778 = vlaneseq
          %v2779 = vshrl.u32 %v2778, 7
          %v2780 = vsub.s32 %v485, %v2779
          %v2781 = vrot.slane %v1782, %v2780
          %v2782 = vlaneseq
          %v2783 = vshrl.u32 %v2782, 7
          %v2784 = vsub.s32 %v2096, %v2783
          %v2785 = vrot.slane %v1785, %v2784
          %v2786 = vsel %vm2101, %v2785, %v2781
          %v2787 = vlaneseq
          %v2788 = vshrl.u32 %v2787, 7
          %v2789 = vsub.s32 %v485, %v2788
          %v2790 = vrot.slane %v1788, %v2789
          %v2791 = vlaneseq
          %v2792 = vshrl.u32 %v2791, 7
          %v2793 = vsub.s32 %v2096, %v2792
          %v2794 = vrot.slane %v1791, %v2793
          %v2795 = vsel %vm2101, %v2794, %v2790
          %v2796 = vlaneseq
          %v2797 = vshrl.u32 %v2796, 7
          %v2798 = vsub.s32 %v485, %v2797
          %v2799 = vrot.slane %v1794, %v2798
          %v2800 = vlaneseq
          %v2801 = vshrl.u32 %v2800, 7
          %v2802 = vsub.s32 %v2096, %v2801
          %v2803 = vrot.slane %v1797, %v2802
          %v2804 = vsel %vm2101, %v2803, %v2799
          %v2805 = vlaneseq
          %v2806 = vshrl.u32 %v2805, 7
          %v2807 = vsub.s32 %v485, %v2806
          %v2808 = vrot.slane %v1800, %v2807
          %v2809 = vlaneseq
          %v2810 = vshrl.u32 %v2809, 7
          %v2811 = vsub.s32 %v2096, %v2810
          %v2812 = vrot.slane %v1803, %v2811
          %v2813 = vsel %vm2101, %v2812, %v2808
          %v2814 = vlaneseq
          %v2815 = vshrl.u32 %v2814, 7
          %v2816 = vsub.s32 %v485, %v2815
          %v2817 = vrot.slane %v1806, %v2816
          %v2818 = vlaneseq
          %v2819 = vshrl.u32 %v2818, 7
          %v2820 = vsub.s32 %v2096, %v2819
          %v2821 = vrot.slane %v1809, %v2820
          %v2822 = vsel %vm2101, %v2821, %v2817
          %v2823 = vlaneseq
          %v2824 = vshrl.u32 %v2823, 7
          %v2825 = vsub.s32 %v485, %v2824
          %v2826 = vrot.slane %v1812, %v2825
          %v2827 = vlaneseq
          %v2828 = vshrl.u32 %v2827, 7
          %v2829 = vsub.s32 %v2096, %v2828
          %v2830 = vrot.slane %v1815, %v2829
          %v2831 = vsel %vm2101, %v2830, %v2826
          %v2832 = vlaneseq
          %v2833 = vshrl.u32 %v2832, 7
          %v2834 = vsub.s32 %v485, %v2833
          %v2835 = vrot.slane %v1818, %v2834
          %v2836 = vlaneseq
          %v2837 = vshrl.u32 %v2836, 7
          %v2838 = vsub.s32 %v2096, %v2837
          %v2839 = vrot.slane %v1821, %v2838
          %v2840 = vsel %vm2101, %v2839, %v2835
          %v2841 = vlaneseq
          %v2842 = vshrl.u32 %v2841, 7
          %v2843 = vsub.s32 %v485, %v2842
          %v2844 = vrot.slane %v1824, %v2843
          %v2845 = vlaneseq
          %v2846 = vshrl.u32 %v2845, 7
          %v2847 = vsub.s32 %v2096, %v2846
          %v2848 = vrot.slane %v1827, %v2847
          %v2849 = vsel %vm2101, %v2848, %v2844
          %v2850 = vlaneseq
          %v2851 = vshrl.u32 %v2850, 7
          %v2852 = vsub.s32 %v485, %v2851
          %v2853 = vrot.slane %v1830, %v2852
          %v2854 = vlaneseq
          %v2855 = vshrl.u32 %v2854, 7
          %v2856 = vsub.s32 %v2096, %v2855
          %v2857 = vrot.slane %v1833, %v2856
          %v2858 = vsel %vm2101, %v2857, %v2853
          %v2859 = vlaneseq
          %v2860 = vshrl.u32 %v2859, 7
          %v2861 = vsub.s32 %v485, %v2860
          %v2862 = vrot.slane %v1836, %v2861
          %v2863 = vlaneseq
          %v2864 = vshrl.u32 %v2863, 7
          %v2865 = vsub.s32 %v2096, %v2864
          %v2866 = vrot.slane %v1839, %v2865
          %v2867 = vsel %vm2101, %v2866, %v2862
          %v2868 = vlaneseq
          %v2869 = vshrl.u32 %v2868, 7
          %v2870 = vsub.s32 %v485, %v2869
          %v2871 = vrot.slane %v1842, %v2870
          %v2872 = vlaneseq
          %v2873 = vshrl.u32 %v2872, 7
          %v2874 = vsub.s32 %v2096, %v2873
          %v2875 = vrot.slane %v1845, %v2874
          %v2876 = vsel %vm2101, %v2875, %v2871
          %v2877 = vlaneseq
          %v2878 = vshrl.u32 %v2877, 7
          %v2879 = vsub.s32 %v485, %v2878
          %v2880 = vrot.slane %v1848, %v2879
          %v2881 = vlaneseq
          %v2882 = vshrl.u32 %v2881, 7
          %v2883 = vsub.s32 %v2096, %v2882
          %v2884 = vrot.slane %v1851, %v2883
          %v2885 = vsel %vm2101, %v2884, %v2880
          %v2886 = vlaneseq
          %v2887 = vshrl.u32 %v2886, 7
          %v2888 = vsub.s32 %v485, %v2887
          %v2889 = vrot.slane %v1854, %v2888
          %v2890 = vlaneseq
          %v2891 = vshrl.u32 %v2890, 7
          %v2892 = vsub.s32 %v2096, %v2891
          %v2893 = vrot.slane %v1857, %v2892
          %v2894 = vsel %vm2101, %v2893, %v2889
          %v2895 = vlaneseq
          %v2896 = vshrl.u32 %v2895, 7
          %v2897 = vsub.s32 %v485, %v2896
          %v2898 = vrot.slane %v1860, %v2897
          %v2899 = vlaneseq
          %v2900 = vshrl.u32 %v2899, 7
          %v2901 = vsub.s32 %v2096, %v2900
          %v2902 = vrot.slane %v1863, %v2901
          %v2903 = vsel %vm2101, %v2902, %v2898
          %v2904 = vlaneseq
          %v2905 = vshrl.u32 %v2904, 7
          %v2906 = vsub.s32 %v485, %v2905
          %v2907 = vrot.slane %v1866, %v2906
          %v2908 = vlaneseq
          %v2909 = vshrl.u32 %v2908, 7
          %v2910 = vsub.s32 %v2096, %v2909
          %v2911 = vrot.slane %v1869, %v2910
          %v2912 = vsel %vm2101, %v2911, %v2907
          %v2913 = vlaneseq
          %v2914 = vshrl.u32 %v2913, 7
          %v2915 = vsub.s32 %v485, %v2914
          %v2916 = vrot.slane %v1872, %v2915
          %v2917 = vlaneseq
          %v2918 = vshrl.u32 %v2917, 7
          %v2919 = vsub.s32 %v2096, %v2918
          %v2920 = vrot.slane %v1875, %v2919
          %v2921 = vsel %vm2101, %v2920, %v2916
          %v2922 = vlaneseq
          %v2923 = vshrl.u32 %v2922, 7
          %v2924 = vsub.s32 %v485, %v2923
          %v2925 = vrot.slane %v1878, %v2924
          %v2926 = vlaneseq
          %v2927 = vshrl.u32 %v2926, 7
          %v2928 = vsub.s32 %v2096, %v2927
          %v2929 = vrot.slane %v1881, %v2928
          %v2930 = vsel %vm2101, %v2929, %v2925
          %v2931 = vlaneseq
          %v2932 = vshrl.u32 %v2931, 7
          %v2933 = vsub.s32 %v485, %v2932
          %v2934 = vrot.slane %v1884, %v2933
          %v2935 = vlaneseq
          %v2936 = vshrl.u32 %v2935, 7
          %v2937 = vsub.s32 %v2096, %v2936
          %v2938 = vrot.slane %v1887, %v2937
          %v2939 = vsel %vm2101, %v2938, %v2934
          %v2940 = vlaneseq
          %v2941 = vshrl.u32 %v2940, 7
          %v2942 = vsub.s32 %v485, %v2941
          %v2943 = vrot.slane %v1890, %v2942
          %v2944 = vlaneseq
          %v2945 = vshrl.u32 %v2944, 7
          %v2946 = vsub.s32 %v2096, %v2945
          %v2947 = vrot.slane %v1893, %v2946
          %v2948 = vsel %vm2101, %v2947, %v2943
          %v2949 = vlaneseq
          %v2950 = vshrl.u32 %v2949, 7
          %v2951 = vsub.s32 %v485, %v2950
          %v2952 = vrot.slane %v1896, %v2951
          %v2953 = vlaneseq
          %v2954 = vshrl.u32 %v2953, 7
          %v2955 = vsub.s32 %v2096, %v2954
          %v2956 = vrot.slane %v1899, %v2955
          %v2957 = vsel %vm2101, %v2956, %v2952
          %v2958 = vlaneseq
          %v2959 = vshrl.u32 %v2958, 7
          %v2960 = vsub.s32 %v485, %v2959
          %v2961 = vrot.slane %v1902, %v2960
          %v2962 = vlaneseq
          %v2963 = vshrl.u32 %v2962, 7
          %v2964 = vsub.s32 %v2096, %v2963
          %v2965 = vrot.slane %v1905, %v2964
          %v2966 = vsel %vm2101, %v2965, %v2961
          %v2967 = vlaneseq
          %v2968 = vshrl.u32 %v2967, 7
          %v2969 = vsub.s32 %v485, %v2968
          %v2970 = vrot.slane %v1908, %v2969
          %v2971 = vlaneseq
          %v2972 = vshrl.u32 %v2971, 7
          %v2973 = vsub.s32 %v2096, %v2972
          %v2974 = vrot.slane %v1911, %v2973
          %v2975 = vsel %vm2101, %v2974, %v2970
          %v2976 = vlaneseq
          %v2977 = vshrl.u32 %v2976, 7
          %v2978 = vsub.s32 %v485, %v2977
          %v2979 = vrot.slane %v1914, %v2978
          %v2980 = vlaneseq
          %v2981 = vshrl.u32 %v2980, 7
          %v2982 = vsub.s32 %v2096, %v2981
          %v2983 = vrot.slane %v1917, %v2982
          %v2984 = vsel %vm2101, %v2983, %v2979
          %v2985 = vlaneseq
          %v2986 = vshrl.u32 %v2985, 7
          %v2987 = vsub.s32 %v485, %v2986
          %v2988 = vrot.slane %v1920, %v2987
          %v2989 = vlaneseq
          %v2990 = vshrl.u32 %v2989, 7
          %v2991 = vsub.s32 %v2096, %v2990
          %v2992 = vrot.slane %v1923, %v2991
          %v2993 = vsel %vm2101, %v2992, %v2988
          %v2994 = vlaneseq
          %v2995 = vshrl.u32 %v2994, 7
          %v2996 = vsub.s32 %v485, %v2995
          %v2997 = vrot.slane %v1926, %v2996
          %v2998 = vlaneseq
          %v2999 = vshrl.u32 %v2998, 7
          %v3000 = vsub.s32 %v2096, %v2999
          %v3001 = vrot.slane %v1929, %v3000
          %v3002 = vsel %vm2101, %v3001, %v2997
          %v3003 = vlaneseq
          %v3004 = vshrl.u32 %v3003, 7
          %v3005 = vsub.s32 %v485, %v3004
          %v3006 = vrot.slane %v1932, %v3005
          %v3007 = vlaneseq
          %v3008 = vshrl.u32 %v3007, 7
          %v3009 = vsub.s32 %v2096, %v3008
          %v3010 = vrot.slane %v1935, %v3009
          %v3011 = vsel %vm2101, %v3010, %v3006
          %v3012 = vlaneseq
          %v3013 = vshrl.u32 %v3012, 7
          %v3014 = vsub.s32 %v485, %v3013
          %v3015 = vrot.slane %v1938, %v3014
          %v3016 = vlaneseq
          %v3017 = vshrl.u32 %v3016, 7
          %v3018 = vsub.s32 %v2096, %v3017
          %v3019 = vrot.slane %v1941, %v3018
          %v3020 = vsel %vm2101, %v3019, %v3015
          %v3021 = vlaneseq
          %v3022 = vshrl.u32 %v3021, 7
          %v3023 = vsub.s32 %v485, %v3022
          %v3024 = vrot.slane %v1944, %v3023
          %v3025 = vlaneseq
          %v3026 = vshrl.u32 %v3025, 7
          %v3027 = vsub.s32 %v2096, %v3026
          %v3028 = vrot.slane %v1947, %v3027
          %v3029 = vsel %vm2101, %v3028, %v3024
          %v3030 = vlaneseq
          %v3031 = vshrl.u32 %v3030, 7
          %v3032 = vsub.s32 %v485, %v3031
          %v3033 = vrot.slane %v1950, %v3032
          %v3034 = vlaneseq
          %v3035 = vshrl.u32 %v3034, 7
          %v3036 = vsub.s32 %v2096, %v3035
          %v3037 = vrot.slane %v1953, %v3036
          %v3038 = vsel %vm2101, %v3037, %v3033
          %v3039 = vlaneseq
          %v3040 = vshrl.u32 %v3039, 7
          %v3041 = vsub.s32 %v485, %v3040
          %v3042 = vrot.slane %v1956, %v3041
          %v3043 = vlaneseq
          %v3044 = vshrl.u32 %v3043, 7
          %v3045 = vsub.s32 %v2096, %v3044
          %v3046 = vrot.slane %v1959, %v3045
          %v3047 = vsel %vm2101, %v3046, %v3042
          %v3048 = vlaneseq
          %v3049 = vshrl.u32 %v3048, 7
          %v3050 = vsub.s32 %v485, %v3049
          %v3051 = vrot.slane %v1962, %v3050
          %v3052 = vlaneseq
          %v3053 = vshrl.u32 %v3052, 7
          %v3054 = vsub.s32 %v2096, %v3053
          %v3055 = vrot.slane %v1965, %v3054
          %v3056 = vsel %vm2101, %v3055, %v3051
          %v3057 = vlaneseq
          %v3058 = vshrl.u32 %v3057, 7
          %v3059 = vsub.s32 %v485, %v3058
          %v3060 = vrot.slane %v1968, %v3059
          %v3061 = vlaneseq
          %v3062 = vshrl.u32 %v3061, 7
          %v3063 = vsub.s32 %v2096, %v3062
          %v3064 = vrot.slane %v1971, %v3063
          %v3065 = vsel %vm2101, %v3064, %v3060
          %v3066 = vlaneseq
          %v3067 = vshrl.u32 %v3066, 7
          %v3068 = vsub.s32 %v485, %v3067
          %v3069 = vrot.slane %v1974, %v3068
          %v3070 = vlaneseq
          %v3071 = vshrl.u32 %v3070, 7
          %v3072 = vsub.s32 %v2096, %v3071
          %v3073 = vrot.slane %v1977, %v3072
          %v3074 = vsel %vm2101, %v3073, %v3069
          %v3075 = vlaneseq
          %v3076 = vshrl.u32 %v3075, 7
          %v3077 = vsub.s32 %v485, %v3076
          %v3078 = vrot.slane %v1980, %v3077
          %v3079 = vlaneseq
          %v3080 = vshrl.u32 %v3079, 7
          %v3081 = vsub.s32 %v2096, %v3080
          %v3082 = vrot.slane %v1983, %v3081
          %v3083 = vsel %vm2101, %v3082, %v3078
          %v3084 = vlaneseq
          %v3085 = vshrl.u32 %v3084, 7
          %v3086 = vsub.s32 %v485, %v3085
          %v3087 = vrot.slane %v1986, %v3086
          %v3088 = vlaneseq
          %v3089 = vshrl.u32 %v3088, 7
          %v3090 = vsub.s32 %v2096, %v3089
          %v3091 = vrot.slane %v1989, %v3090
          %v3092 = vsel %vm2101, %v3091, %v3087
          %v3093 = vlaneseq
          %v3094 = vshrl.u32 %v3093, 7
          %v3095 = vsub.s32 %v485, %v3094
          %v3096 = vrot.slane %v1992, %v3095
          %v3097 = vlaneseq
          %v3098 = vshrl.u32 %v3097, 7
          %v3099 = vsub.s32 %v2096, %v3098
          %v3100 = vrot.slane %v1995, %v3099
          %v3101 = vsel %vm2101, %v3100, %v3096
          %v3102 = vlaneseq
          %v3103 = vshrl.u32 %v3102, 7
          %v3104 = vsub.s32 %v485, %v3103
          %v3105 = vrot.slane %v1998, %v3104
          %v3106 = vlaneseq
          %v3107 = vshrl.u32 %v3106, 7
          %v3108 = vsub.s32 %v2096, %v3107
          %v3109 = vrot.slane %v2001, %v3108
          %v3110 = vsel %vm2101, %v3109, %v3105
          %v3111 = vlaneseq
          %v3112 = vshrl.u32 %v3111, 7
          %v3113 = vsub.s32 %v485, %v3112
          %v3114 = vrot.slane %v2004, %v3113
          %v3115 = vlaneseq
          %v3116 = vshrl.u32 %v3115, 7
          %v3117 = vsub.s32 %v2096, %v3116
          %v3118 = vrot.slane %v2007, %v3117
          %v3119 = vsel %vm2101, %v3118, %v3114
          %v3120 = vlaneseq
          %v3121 = vshrl.u32 %v3120, 7
          %v3122 = vsub.s32 %v485, %v3121
          %v3123 = vrot.slane %v2010, %v3122
          %v3124 = vlaneseq
          %v3125 = vshrl.u32 %v3124, 7
          %v3126 = vsub.s32 %v2096, %v3125
          %v3127 = vrot.slane %v2013, %v3126
          %v3128 = vsel %vm2101, %v3127, %v3123
          %v3129 = vlaneseq
          %v3130 = vshrl.u32 %v3129, 7
          %v3131 = vsub.s32 %v485, %v3130
          %v3132 = vrot.slane %v2016, %v3131
          %v3133 = vlaneseq
          %v3134 = vshrl.u32 %v3133, 7
          %v3135 = vsub.s32 %v2096, %v3134
          %v3136 = vrot.slane %v2019, %v3135
          %v3137 = vsel %vm2101, %v3136, %v3132
          %v3138 = vlaneseq
          %v3139 = vshrl.u32 %v3138, 7
          %v3140 = vsub.s32 %v485, %v3139
          %v3141 = vrot.slane %v2022, %v3140
          %v3142 = vlaneseq
          %v3143 = vshrl.u32 %v3142, 7
          %v3144 = vsub.s32 %v2096, %v3143
          %v3145 = vrot.slane %v2025, %v3144
          %v3146 = vsel %vm2101, %v3145, %v3141
          %v3147 = vlaneseq
          %v3148 = vshrl.u32 %v3147, 7
          %v3149 = vsub.s32 %v485, %v3148
          %v3150 = vrot.slane %v2028, %v3149
          %v3151 = vlaneseq
          %v3152 = vshrl.u32 %v3151, 7
          %v3153 = vsub.s32 %v2096, %v3152
          %v3154 = vrot.slane %v2031, %v3153
          %v3155 = vsel %vm2101, %v3154, %v3150
          %v3156 = vlaneseq
          %v3157 = vshrl.u32 %v3156, 7
          %v3158 = vsub.s32 %v485, %v3157
          %v3159 = vrot.slane %v2034, %v3158
          %v3160 = vlaneseq
          %v3161 = vshrl.u32 %v3160, 7
          %v3162 = vsub.s32 %v2096, %v3161
          %v3163 = vrot.slane %v2037, %v3162
          %v3164 = vsel %vm2101, %v3163, %v3159
          %v3165 = vlaneseq
          %v3166 = vshrl.u32 %v3165, 7
          %v3167 = vsub.s32 %v485, %v3166
          %v3168 = vrot.slane %v2040, %v3167
          %v3169 = vlaneseq
          %v3170 = vshrl.u32 %v3169, 7
          %v3171 = vsub.s32 %v2096, %v3170
          %v3172 = vrot.slane %v2043, %v3171
          %v3173 = vsel %vm2101, %v3172, %v3168
          %v3174 = vlaneseq
          %v3175 = vshrl.u32 %v3174, 7
          %v3176 = vsub.s32 %v485, %v3175
          %v3177 = vrot.slane %v2046, %v3176
          %v3178 = vlaneseq
          %v3179 = vshrl.u32 %v3178, 7
          %v3180 = vsub.s32 %v2096, %v3179
          %v3181 = vrot.slane %v2049, %v3180
          %v3182 = vsel %vm2101, %v3181, %v3177
          %v3183 = vlaneseq
          %v3184 = vshrl.u32 %v3183, 7
          %v3185 = vsub.s32 %v485, %v3184
          %v3186 = vrot.slane %v2052, %v3185
          %v3187 = vlaneseq
          %v3188 = vshrl.u32 %v3187, 7
          %v3189 = vsub.s32 %v2096, %v3188
          %v3190 = vrot.slane %v2055, %v3189
          %v3191 = vsel %vm2101, %v3190, %v3186
          %v3192 = vlaneseq
          %v3193 = vshrl.u32 %v3192, 7
          %v3194 = vsub.s32 %v485, %v3193
          %v3195 = vrot.slane %v2058, %v3194
          %v3196 = vlaneseq
          %v3197 = vshrl.u32 %v3196, 7
          %v3198 = vsub.s32 %v2096, %v3197
          %v3199 = vrot.slane %v2061, %v3198
          %v3200 = vsel %vm2101, %v3199, %v3195
          %v3201 = vlaneseq
          %v3202 = vshrl.u32 %v3201, 7
          %v3203 = vsub.s32 %v485, %v3202
          %v3204 = vrot.slane %v2064, %v3203
          %v3205 = vlaneseq
          %v3206 = vshrl.u32 %v3205, 7
          %v3207 = vsub.s32 %v2096, %v3206
          %v3208 = vrot.slane %v2067, %v3207
          %v3209 = vsel %vm2101, %v3208, %v3204
          %v3210 = vlaneseq
          %v3211 = vshrl.u32 %v3210, 7
          %v3212 = vsub.s32 %v485, %v3211
          %v3213 = vrot.slane %v2070, %v3212
          %v3214 = vlaneseq
          %v3215 = vshrl.u32 %v3214, 7
          %v3216 = vsub.s32 %v2096, %v3215
          %v3217 = vrot.slane %v2073, %v3216
          %v3218 = vsel %vm2101, %v3217, %v3213
          %v3219 = vlaneseq
          %v3220 = vshrl.u32 %v3219, 7
          %v3221 = vsub.s32 %v485, %v3220
          %v3222 = vrot.slane %v2076, %v3221
          %v3223 = vlaneseq
          %v3224 = vshrl.u32 %v3223, 7
          %v3225 = vsub.s32 %v2096, %v3224
          %v3226 = vrot.slane %v2079, %v3225
          %v3227 = vsel %vm2101, %v3226, %v3222
          %v3228 = vlaneseq
          %v3229 = vshrl.u32 %v3228, 7
          %v3230 = vsub.s32 %v485, %v3229
          %v3231 = vrot.slane %v2082, %v3230
          %v3232 = vlaneseq
          %v3233 = vshrl.u32 %v3232, 7
          %v3234 = vsub.s32 %v2096, %v3233
          %v3235 = vrot.slane %v2085, %v3234
          %v3236 = vsel %vm2101, %v3235, %v3231
          %v3237 = vlaneseq
          %v3238 = vshrl.u32 %v3237, 7
          %v3239 = vsub.s32 %v485, %v3238
          %v3240 = vrot.slane %v2088, %v3239
          %v3241 = vlaneseq
          %v3242 = vshrl.u32 %v3241, 7
          %v3243 = vsub.s32 %v2096, %v3242
          %v3244 = vrot.slane %v2091, %v3243
          %v3245 = vsel %vm2101, %v3244, %v3240
          %vm3246 = vcmask 1041409
          %v3247 = vsel %vm3246, %v2111, %v2102
          %vm3248 = vcmask 1042434
          %v3249 = vsel %vm3248, %v2120, %v3247
          %vm3250 = vcmask 1043459
          %v3251 = vsel %vm3250, %v2129, %v3249
          %vm3252 = vcmask 1044484
          %v3253 = vsel %vm3252, %v2138, %v3251
          %vm3254 = vcmask 1045509
          %v3255 = vsel %vm3254, %v2147, %v3253
          %vm3256 = vcmask 1046534
          %v3257 = vsel %vm3256, %v2156, %v3255
          %vm3258 = vcmask 1047559
          %v3259 = vsel %vm3258, %v2165, %v3257
          %v3260 = vsel %vm3246, %v2183, %v2174
          %v3261 = vsel %vm3248, %v2192, %v3260
          %v3262 = vsel %vm3250, %v2201, %v3261
          %v3263 = vsel %vm3252, %v2210, %v3262
          %v3264 = vsel %vm3254, %v2219, %v3263
          %v3265 = vsel %vm3256, %v2228, %v3264
          %v3266 = vsel %vm3258, %v2237, %v3265
          %v3267 = vsel %vm3246, %v2255, %v2246
          %v3268 = vsel %vm3248, %v2264, %v3267
          %v3269 = vsel %vm3250, %v2273, %v3268
          %v3270 = vsel %vm3252, %v2282, %v3269
          %v3271 = vsel %vm3254, %v2291, %v3270
          %v3272 = vsel %vm3256, %v2300, %v3271
          %v3273 = vsel %vm3258, %v2309, %v3272
          %v3274 = vsel %vm3246, %v2327, %v2318
          %v3275 = vsel %vm3248, %v2336, %v3274
          %v3276 = vsel %vm3250, %v2345, %v3275
          %v3277 = vsel %vm3252, %v2354, %v3276
          %v3278 = vsel %vm3254, %v2363, %v3277
          %v3279 = vsel %vm3256, %v2372, %v3278
          %v3280 = vsel %vm3258, %v2381, %v3279
          %v3281 = vsel %vm3246, %v2399, %v2390
          %v3282 = vsel %vm3248, %v2408, %v3281
          %v3283 = vsel %vm3250, %v2417, %v3282
          %v3284 = vsel %vm3252, %v2426, %v3283
          %v3285 = vsel %vm3254, %v2435, %v3284
          %v3286 = vsel %vm3256, %v2444, %v3285
          %v3287 = vsel %vm3258, %v2453, %v3286
          %v3288 = vsel %vm3246, %v2471, %v2462
          %v3289 = vsel %vm3248, %v2480, %v3288
          %v3290 = vsel %vm3250, %v2489, %v3289
          %v3291 = vsel %vm3252, %v2498, %v3290
          %v3292 = vsel %vm3254, %v2507, %v3291
          %v3293 = vsel %vm3256, %v2516, %v3292
          %v3294 = vsel %vm3258, %v2525, %v3293
          %v3295 = vsel %vm3246, %v2543, %v2534
          %v3296 = vsel %vm3248, %v2552, %v3295
          %v3297 = vsel %vm3250, %v2561, %v3296
          %v3298 = vsel %vm3252, %v2570, %v3297
          %v3299 = vsel %vm3254, %v2579, %v3298
          %v3300 = vsel %vm3256, %v2588, %v3299
          %v3301 = vsel %vm3258, %v2597, %v3300
          %v3302 = vsel %vm3246, %v2615, %v2606
          %v3303 = vsel %vm3248, %v2624, %v3302
          %v3304 = vsel %vm3250, %v2633, %v3303
          %v3305 = vsel %vm3252, %v2642, %v3304
          %v3306 = vsel %vm3254, %v2651, %v3305
          %v3307 = vsel %vm3256, %v2660, %v3306
          %v3308 = vsel %vm3258, %v2669, %v3307
          %v3309 = vsel %vm3246, %v2687, %v2678
          %v3310 = vsel %vm3248, %v2696, %v3309
          %v3311 = vsel %vm3250, %v2705, %v3310
          %v3312 = vsel %vm3252, %v2714, %v3311
          %v3313 = vsel %vm3254, %v2723, %v3312
          %v3314 = vsel %vm3256, %v2732, %v3313
          %v3315 = vsel %vm3258, %v2741, %v3314
          %v3316 = vsel %vm3246, %v2759, %v2750
          %v3317 = vsel %vm3248, %v2768, %v3316
          %v3318 = vsel %vm3250, %v2777, %v3317
          %v3319 = vsel %vm3252, %v2786, %v3318
          %v3320 = vsel %vm3254, %v2795, %v3319
          %v3321 = vsel %vm3256, %v2804, %v3320
          %v3322 = vsel %vm3258, %v2813, %v3321
          %v3323 = vsel %vm3246, %v2831, %v2822
          %v3324 = vsel %vm3248, %v2840, %v3323
          %v3325 = vsel %vm3250, %v2849, %v3324
          %v3326 = vsel %vm3252, %v2858, %v3325
          %v3327 = vsel %vm3254, %v2867, %v3326
          %v3328 = vsel %vm3256, %v2876, %v3327
          %v3329 = vsel %vm3258, %v2885, %v3328
          %v3330 = vsel %vm3246, %v2903, %v2894
          %v3331 = vsel %vm3248, %v2912, %v3330
          %v3332 = vsel %vm3250, %v2921, %v3331
          %v3333 = vsel %vm3252, %v2930, %v3332
          %v3334 = vsel %vm3254, %v2939, %v3333
          %v3335 = vsel %vm3256, %v2948, %v3334
          %v3336 = vsel %vm3258, %v2957, %v3335
          %v3337 = vsel %vm3246, %v2975, %v2966
          %v3338 = vsel %vm3248, %v2984, %v3337
          %v3339 = vsel %vm3250, %v2993, %v3338
          %v3340 = vsel %vm3252, %v3002, %v3339
          %v3341 = vsel %vm3254, %v3011, %v3340
          %v3342 = vsel %vm3256, %v3020, %v3341
          %v3343 = vsel %vm3258, %v3029, %v3342
          %v3344 = vsel %vm3246, %v3047, %v3038
          %v3345 = vsel %vm3248, %v3056, %v3344
          %v3346 = vsel %vm3250, %v3065, %v3345
          %v3347 = vsel %vm3252, %v3074, %v3346
          %v3348 = vsel %vm3254, %v3083, %v3347
          %v3349 = vsel %vm3256, %v3092, %v3348
          %v3350 = vsel %vm3258, %v3101, %v3349
          %v3351 = vsel %vm3246, %v3119, %v3110
          %v3352 = vsel %vm3248, %v3128, %v3351
          %v3353 = vsel %vm3250, %v3137, %v3352
          %v3354 = vsel %vm3252, %v3146, %v3353
          %v3355 = vsel %vm3254, %v3155, %v3354
          %v3356 = vsel %vm3256, %v3164, %v3355
          %v3357 = vsel %vm3258, %v3173, %v3356
          %v3358 = vsel %vm3246, %v3191, %v3182
          %v3359 = vsel %vm3248, %v3200, %v3358
          %v3360 = vsel %vm3250, %v3209, %v3359
          %v3361 = vsel %vm3252, %v3218, %v3360
          %v3362 = vsel %vm3254, %v3227, %v3361
          %v3363 = vsel %vm3256, %v3236, %v3362
          %v3364 = vsel %vm3258, %v3245, %v3363
          %vm3381 = vcmask 130048
          %v3382 = vsel %vm3381, %v3259, 0.0
          %3383 = vadd.xlane.f32.xlu0 %v3382
          %v3384 = vpop.xlane.xlu0 %3383
          %v3385 = vsel %vm3381, %v3266, 0.0
          %3386 = vadd.xlane.f32.xlu0 %v3385
          %v3387 = vpop.xlane.xlu0 %3386
          %v3388 = vsel %vm3381, %v3273, 0.0
          %3389 = vadd.xlane.f32.xlu0 %v3388
          %v3390 = vpop.xlane.xlu0 %3389
          %v3391 = vsel %vm3381, %v3280, 0.0
          %3392 = vadd.xlane.f32.xlu0 %v3391
          %v3393 = vpop.xlane.xlu0 %3392
          %v3394 = vsel %vm3381, %v3287, 0.0
          %3395 = vadd.xlane.f32.xlu0 %v3394
          %v3396 = vpop.xlane.xlu0 %3395
          %v3397 = vsel %vm3381, %v3294, 0.0
          %3398 = vadd.xlane.f32.xlu0 %v3397
          %v3399 = vpop.xlane.xlu0 %3398
          %v3400 = vsel %vm3381, %v3301, 0.0
          %3401 = vadd.xlane.f32.xlu0 %v3400
          %v3402 = vpop.xlane.xlu0 %3401
          %v3403 = vsel %vm3381, %v3308, 0.0
          %3404 = vadd.xlane.f32.xlu0 %v3403
          %v3405 = vpop.xlane.xlu0 %3404
          %v3406 = vsel %vm3381, %v3315, 0.0
          %3407 = vadd.xlane.f32.xlu0 %v3406
          %v3408 = vpop.xlane.xlu0 %3407
          %v3409 = vsel %vm3381, %v3322, 0.0
          %3410 = vadd.xlane.f32.xlu0 %v3409
          %v3411 = vpop.xlane.xlu0 %3410
          %v3412 = vsel %vm3381, %v3329, 0.0
          %3413 = vadd.xlane.f32.xlu0 %v3412
          %v3414 = vpop.xlane.xlu0 %3413
          %v3415 = vsel %vm3381, %v3336, 0.0
          %3416 = vadd.xlane.f32.xlu0 %v3415
          %v3417 = vpop.xlane.xlu0 %3416
          %v3418 = vsel %vm3381, %v3343, 0.0
          %3419 = vadd.xlane.f32.xlu0 %v3418
          %v3420 = vpop.xlane.xlu0 %3419
          %v3421 = vsel %vm3381, %v3350, 0.0
          %3422 = vadd.xlane.f32.xlu0 %v3421
          %v3423 = vpop.xlane.xlu0 %3422
          %v3424 = vsel %vm3381, %v3357, 0.0
          %3425 = vadd.xlane.f32.xlu0 %v3424
          %v3426 = vpop.xlane.xlu0 %3425
          %v3427 = vsel %vm3381, %v3364, 0.0
          %3428 = vadd.xlane.f32.xlu0 %v3427
          %v3429 = vpop.xlane.xlu0 %3428
          %v3430 = vlaneseq
          %v3431 = vshrl.u32 %v3430, 7
          %v3432 = vadd.s32 %v3431, 8
          %v3433 = vsub.s32 %v3431, %v485
          %v3434 = vsub.s32 %v3432, %v485
          %vm3435 = vcmp.lt.s32.totalorder %v3433, 0
          %v3436 = vsub.s32 0, %v3433
          %v3437 = vsel %vm3435, %v3436, %v3433
          %vm3438 = vcmp.lt.s32.totalorder %v3434, 0
          %v3439 = vsub.s32 0, %v3434
          %v3440 = vsel %vm3438, %v3439, %v3434
          %vm3441 = vcmp.le.s32.totalorder %v3437, 1
          %vm3442 = vcmp.le.s32.totalorder %v3440, 1
          %v3443 = vsel %vm3441, 1, 0
          %v3444 = vsel %vm3442, 1, 0
          %vm3445 = vcmp.eq.s32.totalorder %v3443, 1
          %vm3446 = vcmp.eq.s32.totalorder %v3444, 1
          %v3463 = vlaneseq
          %v3464 = vshrl.u32 %v3463, 7
          %v3465 = vsub.s32 %v485, %v3464
          %v3466 = vrot.slane %v584, %v3465
          %v3467 = vlaneseq
          %v3468 = vshrl.u32 %v3467, 7
          %v3469 = vsub.s32 %v2096, %v3468
          %v3470 = vrot.slane %v585, %v3469
          %v3471 = vsel %vm2101, %v3470, %v3466
          %v3472 = vlaneseq
          %v3473 = vshrl.u32 %v3472, 7
          %v3474 = vsub.s32 %v485, %v3473
          %v3475 = vrot.slane %v586, %v3474
          %v3476 = vlaneseq
          %v3477 = vshrl.u32 %v3476, 7
          %v3478 = vsub.s32 %v2096, %v3477
          %v3479 = vrot.slane %v587, %v3478
          %v3480 = vsel %vm2101, %v3479, %v3475
          %v3481 = vlaneseq
          %v3482 = vshrl.u32 %v3481, 7
          %v3483 = vsub.s32 %v485, %v3482
          %v3484 = vrot.slane %v588, %v3483
          %v3485 = vlaneseq
          %v3486 = vshrl.u32 %v3485, 7
          %v3487 = vsub.s32 %v2096, %v3486
          %v3488 = vrot.slane %v589, %v3487
          %v3489 = vsel %vm2101, %v3488, %v3484
          %v3490 = vlaneseq
          %v3491 = vshrl.u32 %v3490, 7
          %v3492 = vsub.s32 %v485, %v3491
          %v3493 = vrot.slane %v590, %v3492
          %v3494 = vlaneseq
          %v3495 = vshrl.u32 %v3494, 7
          %v3496 = vsub.s32 %v2096, %v3495
          %v3497 = vrot.slane %v591, %v3496
          %v3498 = vsel %vm2101, %v3497, %v3493
          %v3499 = vlaneseq
          %v3500 = vshrl.u32 %v3499, 7
          %v3501 = vsub.s32 %v485, %v3500
          %v3502 = vrot.slane %v592, %v3501
          %v3503 = vlaneseq
          %v3504 = vshrl.u32 %v3503, 7
          %v3505 = vsub.s32 %v2096, %v3504
          %v3506 = vrot.slane %v593, %v3505
          %v3507 = vsel %vm2101, %v3506, %v3502
          %v3508 = vlaneseq
          %v3509 = vshrl.u32 %v3508, 7
          %v3510 = vsub.s32 %v485, %v3509
          %v3511 = vrot.slane %v594, %v3510
          %v3512 = vlaneseq
          %v3513 = vshrl.u32 %v3512, 7
          %v3514 = vsub.s32 %v2096, %v3513
          %v3515 = vrot.slane %v595, %v3514
          %v3516 = vsel %vm2101, %v3515, %v3511
          %v3517 = vlaneseq
          %v3518 = vshrl.u32 %v3517, 7
          %v3519 = vsub.s32 %v485, %v3518
          %v3520 = vrot.slane %v596, %v3519
          %v3521 = vlaneseq
          %v3522 = vshrl.u32 %v3521, 7
          %v3523 = vsub.s32 %v2096, %v3522
          %v3524 = vrot.slane %v597, %v3523
          %v3525 = vsel %vm2101, %v3524, %v3520
          %v3526 = vlaneseq
          %v3527 = vshrl.u32 %v3526, 7
          %v3528 = vsub.s32 %v485, %v3527
          %v3529 = vrot.slane %v598, %v3528
          %v3530 = vlaneseq
          %v3531 = vshrl.u32 %v3530, 7
          %v3532 = vsub.s32 %v2096, %v3531
          %v3533 = vrot.slane %v599, %v3532
          %v3534 = vsel %vm2101, %v3533, %v3529
          %v3535 = vsel %vm3248, %v3471, %v3471
          %v3536 = vsel %vm3250, %v3471, %v3535
          %v3537 = vsel %vm3252, %v3471, %v3536
          %v3538 = vsel %vm3254, %v3471, %v3537
          %v3539 = vsel %vm3256, %v3471, %v3538
          %v3540 = vsel %vm3258, %v3471, %v3539
          %v3541 = vsel %vm3248, %v3480, %v3480
          %v3542 = vsel %vm3250, %v3480, %v3541
          %v3543 = vsel %vm3252, %v3480, %v3542
          %v3544 = vsel %vm3254, %v3480, %v3543
          %v3545 = vsel %vm3256, %v3480, %v3544
          %v3546 = vsel %vm3258, %v3480, %v3545
          %v3547 = vsel %vm3248, %v3489, %v3489
          %v3548 = vsel %vm3250, %v3489, %v3547
          %v3549 = vsel %vm3252, %v3489, %v3548
          %v3550 = vsel %vm3254, %v3489, %v3549
          %v3551 = vsel %vm3256, %v3489, %v3550
          %v3552 = vsel %vm3258, %v3489, %v3551
          %v3553 = vsel %vm3248, %v3498, %v3498
          %v3554 = vsel %vm3250, %v3498, %v3553
          %v3555 = vsel %vm3252, %v3498, %v3554
          %v3556 = vsel %vm3254, %v3498, %v3555
          %v3557 = vsel %vm3256, %v3498, %v3556
          %v3558 = vsel %vm3258, %v3498, %v3557
          %v3559 = vsel %vm3248, %v3507, %v3507
          %v3560 = vsel %vm3250, %v3507, %v3559
          %v3561 = vsel %vm3252, %v3507, %v3560
          %v3562 = vsel %vm3254, %v3507, %v3561
          %v3563 = vsel %vm3256, %v3507, %v3562
          %v3564 = vsel %vm3258, %v3507, %v3563
          %v3565 = vsel %vm3248, %v3516, %v3516
          %v3566 = vsel %vm3250, %v3516, %v3565
          %v3567 = vsel %vm3252, %v3516, %v3566
          %v3568 = vsel %vm3254, %v3516, %v3567
          %v3569 = vsel %vm3256, %v3516, %v3568
          %v3570 = vsel %vm3258, %v3516, %v3569
          %v3571 = vsel %vm3248, %v3525, %v3525
          %v3572 = vsel %vm3250, %v3525, %v3571
          %v3573 = vsel %vm3252, %v3525, %v3572
          %v3574 = vsel %vm3254, %v3525, %v3573
          %v3575 = vsel %vm3256, %v3525, %v3574
          %v3576 = vsel %vm3258, %v3525, %v3575
          %v3577 = vsel %vm3248, %v3534, %v3534
          %v3578 = vsel %vm3250, %v3534, %v3577
          %v3579 = vsel %vm3252, %v3534, %v3578
          %v3580 = vsel %vm3254, %v3534, %v3579
          %v3581 = vsel %vm3256, %v3534, %v3580
          %v3582 = vsel %vm3258, %v3534, %v3581
          %v3591 = vsel %vm3445, %v3540, -inf
          %v3592 = vsel %vm3446, %v3540, -inf
          %v3593 = vsel %vm3445, %v3546, -inf
          %v3594 = vsel %vm3446, %v3546, -inf
          %v3595 = vsel %vm3445, %v3552, -inf
          %v3596 = vsel %vm3446, %v3552, -inf
          %v3597 = vsel %vm3445, %v3558, -inf
          %v3598 = vsel %vm3446, %v3558, -inf
          %v3599 = vsel %vm3445, %v3564, -inf
          %v3600 = vsel %vm3446, %v3564, -inf
          %v3601 = vsel %vm3445, %v3570, -inf
          %v3602 = vsel %vm3446, %v3570, -inf
          %v3603 = vsel %vm3445, %v3576, -inf
          %v3604 = vsel %vm3446, %v3576, -inf
          %v3605 = vsel %vm3445, %v3582, -inf
          %v3606 = vsel %vm3446, %v3582, -inf
          %v3607 = vsel %vm3381, %v3591, -inf
          %3608 = vmax.xlane.f32.xlu0 %v3607
          %v3609 = vpop.xlane.xlu0 %3608
          %v3610 = vsel %vm3381, %v3592, -inf
          %3611 = vmax.xlane.f32.xlu0 %v3610
          %v3612 = vpop.xlane.xlu0 %3611
          %v3613 = vsel %vm3381, %v3593, -inf
          %3614 = vmax.xlane.f32.xlu0 %v3613
          %v3615 = vpop.xlane.xlu0 %3614
          %v3616 = vsel %vm3381, %v3594, -inf
          %3617 = vmax.xlane.f32.xlu0 %v3616
          %v3618 = vpop.xlane.xlu0 %3617
          %v3619 = vsel %vm3381, %v3595, -inf
          %3620 = vmax.xlane.f32.xlu0 %v3619
          %v3621 = vpop.xlane.xlu0 %3620
          %v3622 = vsel %vm3381, %v3596, -inf
          %3623 = vmax.xlane.f32.xlu0 %v3622
          %v3624 = vpop.xlane.xlu0 %3623
          %v3625 = vsel %vm3381, %v3597, -inf
          %3626 = vmax.xlane.f32.xlu0 %v3625
          %v3627 = vpop.xlane.xlu0 %3626
          %v3628 = vsel %vm3381, %v3598, -inf
          %3629 = vmax.xlane.f32.xlu0 %v3628
          %v3630 = vpop.xlane.xlu0 %3629
          %v3631 = vsel %vm3381, %v3599, -inf
          %3632 = vmax.xlane.f32.xlu0 %v3631
          %v3633 = vpop.xlane.xlu0 %3632
          %v3634 = vsel %vm3381, %v3600, -inf
          %3635 = vmax.xlane.f32.xlu0 %v3634
          %v3636 = vpop.xlane.xlu0 %3635
          %v3637 = vsel %vm3381, %v3601, -inf
          %3638 = vmax.xlane.f32.xlu0 %v3637
          %v3639 = vpop.xlane.xlu0 %3638
          %v3640 = vsel %vm3381, %v3602, -inf
          %3641 = vmax.xlane.f32.xlu0 %v3640
          %v3642 = vpop.xlane.xlu0 %3641
          %v3643 = vsel %vm3381, %v3603, -inf
          %3644 = vmax.xlane.f32.xlu0 %v3643
          %v3645 = vpop.xlane.xlu0 %3644
          %v3646 = vsel %vm3381, %v3604, -inf
          %3647 = vmax.xlane.f32.xlu0 %v3646
          %v3648 = vpop.xlane.xlu0 %3647
          %v3649 = vsel %vm3381, %v3605, -inf
          %3650 = vmax.xlane.f32.xlu0 %v3649
          %v3651 = vpop.xlane.xlu0 %3650
          %v3652 = vsel %vm3381, %v3606, -inf
          %3653 = vmax.xlane.f32.xlu0 %v3652
          %v3654 = vpop.xlane.xlu0 %3653
          %v3655 = vld [vmem:[#allocation5] sm:$0x1]
          %v3656 = vld [vmem:[#allocation5 + $0x1] sm:$0x1]
          %v3657 = vlaneseq
          %v3658 = vshrl.u32 %v3657, 7
          %v3659 = vsub.s32 0, %v3658
          %v3660 = vrot.slane %v3655, %v3659
          %3663 = vbcast.lane.b32.xlu0 %v3660, 256
          %v3664 = vpop.permute.xlu0 %3663
          %s3666 = sor.u32 256, 8
          %3667 = vbcast.lane.b32.xlu0 %v3660, %s3666
          %v3668 = vpop.permute.xlu0 %3667
          %v3671 = vadd.f32 %v3384, %v3664
          %v3672 = vadd.f32 %v3387, %v3668
          %v3673 = vadd.f32 %v3390, %v3664
          %v3674 = vadd.f32 %v3393, %v3668
          %v3675 = vadd.f32 %v3396, %v3664
          %v3676 = vadd.f32 %v3399, %v3668
          %v3677 = vadd.f32 %v3402, %v3664
          %v3678 = vadd.f32 %v3405, %v3668
          %v3679 = vadd.f32 %v3408, %v3664
          %v3680 = vadd.f32 %v3411, %v3668
          %v3681 = vadd.f32 %v3414, %v3664
          %v3682 = vadd.f32 %v3417, %v3668
          %v3683 = vadd.f32 %v3420, %v3664
          %v3684 = vadd.f32 %v3423, %v3668
          %v3685 = vadd.f32 %v3426, %v3664
          %v3686 = vadd.f32 %v3429, %v3668
          %v3687 = vlaneseq
          %v3688 = vshrl.u32 %v3687, 7
          %v3689 = vsub.s32 0, %v3688
          %v3690 = vrot.slane %v3656, %v3689
          %v3707 = vlaneseq
          %v3708 = vshrl.u32 %v3707, 7
          %v3709 = vsub.s32 %v485, %v3708
          %v3710 = vrot.slane %v3609, %v3709
          %v3711 = vlaneseq
          %v3712 = vshrl.u32 %v3711, 7
          %v3713 = vsub.s32 %v2096, %v3712
          %v3714 = vrot.slane %v3612, %v3713
          %v3715 = vsel %vm2101, %v3714, %v3710
          %v3716 = vlaneseq
          %v3717 = vshrl.u32 %v3716, 7
          %v3718 = vsub.s32 %v485, %v3717
          %v3719 = vrot.slane %v3615, %v3718
          %v3720 = vlaneseq
          %v3721 = vshrl.u32 %v3720, 7
          %v3722 = vsub.s32 %v2096, %v3721
          %v3723 = vrot.slane %v3618, %v3722
          %v3724 = vsel %vm2101, %v3723, %v3719
          %v3725 = vlaneseq
          %v3726 = vshrl.u32 %v3725, 7
          %v3727 = vsub.s32 %v485, %v3726
          %v3728 = vrot.slane %v3621, %v3727
          %v3729 = vlaneseq
          %v3730 = vshrl.u32 %v3729, 7
          %v3731 = vsub.s32 %v2096, %v3730
          %v3732 = vrot.slane %v3624, %v3731
          %v3733 = vsel %vm2101, %v3732, %v3728
          %v3734 = vlaneseq
          %v3735 = vshrl.u32 %v3734, 7
          %v3736 = vsub.s32 %v485, %v3735
          %v3737 = vrot.slane %v3627, %v3736
          %v3738 = vlaneseq
          %v3739 = vshrl.u32 %v3738, 7
          %v3740 = vsub.s32 %v2096, %v3739
          %v3741 = vrot.slane %v3630, %v3740
          %v3742 = vsel %vm2101, %v3741, %v3737
          %v3743 = vlaneseq
          %v3744 = vshrl.u32 %v3743, 7
          %v3745 = vsub.s32 %v485, %v3744
          %v3746 = vrot.slane %v3633, %v3745
          %v3747 = vlaneseq
          %v3748 = vshrl.u32 %v3747, 7
          %v3749 = vsub.s32 %v2096, %v3748
          %v3750 = vrot.slane %v3636, %v3749
          %v3751 = vsel %vm2101, %v3750, %v3746
          %v3752 = vlaneseq
          %v3753 = vshrl.u32 %v3752, 7
          %v3754 = vsub.s32 %v485, %v3753
          %v3755 = vrot.slane %v3639, %v3754
          %v3756 = vlaneseq
          %v3757 = vshrl.u32 %v3756, 7
          %v3758 = vsub.s32 %v2096, %v3757
          %v3759 = vrot.slane %v3642, %v3758
          %v3760 = vsel %vm2101, %v3759, %v3755
          %v3761 = vlaneseq
          %v3762 = vshrl.u32 %v3761, 7
          %v3763 = vsub.s32 %v485, %v3762
          %v3764 = vrot.slane %v3645, %v3763
          %v3765 = vlaneseq
          %v3766 = vshrl.u32 %v3765, 7
          %v3767 = vsub.s32 %v2096, %v3766
          %v3768 = vrot.slane %v3648, %v3767
          %v3769 = vsel %vm2101, %v3768, %v3764
          %v3770 = vlaneseq
          %v3771 = vshrl.u32 %v3770, 7
          %v3772 = vsub.s32 %v485, %v3771
          %v3773 = vrot.slane %v3651, %v3772
          %v3774 = vlaneseq
          %v3775 = vshrl.u32 %v3774, 7
          %v3776 = vsub.s32 %v2096, %v3775
          %v3777 = vrot.slane %v3654, %v3776
          %v3778 = vsel %vm2101, %v3777, %v3773
          %v3779 = vsel %vm3246, %v3724, %v3715
          %v3780 = vsel %vm3248, %v3733, %v3779
          %v3781 = vsel %vm3250, %v3742, %v3780
          %v3782 = vsel %vm3252, %v3751, %v3781
          %v3783 = vsel %vm3254, %v3760, %v3782
          %v3784 = vsel %vm3256, %v3769, %v3783
          %v3785 = vsel %vm3258, %v3778, %v3784
          %v3787 = vmul.f32 %v3690, %v3785
          %v3789 = vlaneseq
          %v3790 = vshrl.u32 %v3789, 7
          %v3791 = vsub.s32 0, %v3790
          %v3792 = vrot.slane %v3787, %v3791
          %3794 = vbcast.lane.b32.xlu0 %v3792, 256
          %v3795 = vpop.permute.xlu0 %3794
          %s3797 = sor.u32 256, 8
          %3798 = vbcast.lane.b32.xlu0 %v3792, %s3797
          %v3799 = vpop.permute.xlu0 %3798
          %v3800 = vlaneseq
          %v3801 = vshrl.u32 %v3800, 7
          %v3802 = vsub.s32 1, %v3801
          %v3803 = vrot.slane %v3787, %v3802
          %3805 = vbcast.lane.b32.xlu0 %v3803, 256
          %v3806 = vpop.permute.xlu0 %3805
          %s3808 = sor.u32 256, 8
          %3809 = vbcast.lane.b32.xlu0 %v3803, %s3808
          %v3810 = vpop.permute.xlu0 %3809
          %v3811 = vlaneseq
          %v3812 = vshrl.u32 %v3811, 7
          %v3813 = vsub.s32 2, %v3812
          %v3814 = vrot.slane %v3787, %v3813
          %3816 = vbcast.lane.b32.xlu0 %v3814, 256
          %v3817 = vpop.permute.xlu0 %3816
          %s3819 = sor.u32 256, 8
          %3820 = vbcast.lane.b32.xlu0 %v3814, %s3819
          %v3821 = vpop.permute.xlu0 %3820
          %v3822 = vlaneseq
          %v3823 = vshrl.u32 %v3822, 7
          %v3824 = vsub.s32 3, %v3823
          %v3825 = vrot.slane %v3787, %v3824
          %3827 = vbcast.lane.b32.xlu0 %v3825, 256
          %v3828 = vpop.permute.xlu0 %3827
          %s3830 = sor.u32 256, 8
          %3831 = vbcast.lane.b32.xlu0 %v3825, %s3830
          %v3832 = vpop.permute.xlu0 %3831
          %v3833 = vlaneseq
          %v3834 = vshrl.u32 %v3833, 7
          %v3835 = vsub.s32 4, %v3834
          %v3836 = vrot.slane %v3787, %v3835
          %3838 = vbcast.lane.b32.xlu0 %v3836, 256
          %v3839 = vpop.permute.xlu0 %3838
          %s3841 = sor.u32 256, 8
          %3842 = vbcast.lane.b32.xlu0 %v3836, %s3841
          %v3843 = vpop.permute.xlu0 %3842
          %v3844 = vlaneseq
          %v3845 = vshrl.u32 %v3844, 7
          %v3846 = vsub.s32 5, %v3845
          %v3847 = vrot.slane %v3787, %v3846
          %3849 = vbcast.lane.b32.xlu0 %v3847, 256
          %v3850 = vpop.permute.xlu0 %3849
          %s3852 = sor.u32 256, 8
          %3853 = vbcast.lane.b32.xlu0 %v3847, %s3852
          %v3854 = vpop.permute.xlu0 %3853
          %v3855 = vlaneseq
          %v3856 = vshrl.u32 %v3855, 7
          %v3857 = vsub.s32 6, %v3856
          %v3858 = vrot.slane %v3787, %v3857
          %3860 = vbcast.lane.b32.xlu0 %v3858, 256
          %v3861 = vpop.permute.xlu0 %3860
          %s3863 = sor.u32 256, 8
          %3864 = vbcast.lane.b32.xlu0 %v3858, %s3863
          %v3865 = vpop.permute.xlu0 %3864
          %v3866 = vlaneseq
          %v3867 = vshrl.u32 %v3866, 7
          %v3868 = vsub.s32 7, %v3867
          %v3869 = vrot.slane %v3787, %v3868
          %3871 = vbcast.lane.b32.xlu0 %v3869, 256
          %v3872 = vpop.permute.xlu0 %3871
          %s3874 = sor.u32 256, 8
          %3875 = vbcast.lane.b32.xlu0 %v3869, %s3874
          %v3876 = vpop.permute.xlu0 %3875
          %v3893 = vadd.f32 %v3671, %v3795
          %v3894 = vadd.f32 %v3672, %v3799
          %v3895 = vadd.f32 %v3673, %v3806
          %v3896 = vadd.f32 %v3674, %v3810
          %v3897 = vadd.f32 %v3675, %v3817
          %v3898 = vadd.f32 %v3676, %v3821
          %v3899 = vadd.f32 %v3677, %v3828
          %v3900 = vadd.f32 %v3678, %v3832
          %v3901 = vadd.f32 %v3679, %v3839
          %v3902 = vadd.f32 %v3680, %v3843
          %v3903 = vadd.f32 %v3681, %v3850
          %v3904 = vadd.f32 %v3682, %v3854
          %v3905 = vadd.f32 %v3683, %v3861
          %v3906 = vadd.f32 %v3684, %v3865
          %v3907 = vadd.f32 %v3685, %v3872
          %v3908 = vadd.f32 %v3686, %v3876
          %v3909 = vxor.u32 %v3893, 2147483648
          %v3910 = vxor.u32 %v3894, 2147483648
          %v3911 = vxor.u32 %v3895, 2147483648
          %v3912 = vxor.u32 %v3896, 2147483648
          %v3913 = vxor.u32 %v3897, 2147483648
          %v3914 = vxor.u32 %v3898, 2147483648
          %v3915 = vxor.u32 %v3899, 2147483648
          %v3916 = vxor.u32 %v3900, 2147483648
          %v3917 = vxor.u32 %v3901, 2147483648
          %v3918 = vxor.u32 %v3902, 2147483648
          %v3919 = vxor.u32 %v3903, 2147483648
          %v3920 = vxor.u32 %v3904, 2147483648
          %v3921 = vxor.u32 %v3905, 2147483648
          %v3922 = vxor.u32 %v3906, 2147483648
          %v3923 = vxor.u32 %v3907, 2147483648
          %v3924 = vxor.u32 %v3908, 2147483648
          %v3925 = vmul.f32 %v3909, 1.442695
          %v3926 = vpow.pop %v3925
          %v3927 = vmul.f32 %v3910, 1.442695
          %v3928 = vpow.pop %v3927
          %v3929 = vmul.f32 %v3911, 1.442695
          %v3930 = vpow.pop %v3929
          %v3931 = vmul.f32 %v3912, 1.442695
          %v3932 = vpow.pop %v3931
          %v3933 = vmul.f32 %v3913, 1.442695
          %v3934 = vpow.pop %v3933
          %v3935 = vmul.f32 %v3914, 1.442695
          %v3936 = vpow.pop %v3935
          %v3937 = vmul.f32 %v3915, 1.442695
          %v3938 = vpow.pop %v3937
          %v3939 = vmul.f32 %v3916, 1.442695
          %v3940 = vpow.pop %v3939
          %v3941 = vmul.f32 %v3917, 1.442695
          %v3942 = vpow.pop %v3941
          %v3943 = vmul.f32 %v3918, 1.442695
          %v3944 = vpow.pop %v3943
          %v3945 = vmul.f32 %v3919, 1.442695
          %v3946 = vpow.pop %v3945
          %v3947 = vmul.f32 %v3920, 1.442695
          %v3948 = vpow.pop %v3947
          %v3949 = vmul.f32 %v3921, 1.442695
          %v3950 = vpow.pop %v3949
          %v3951 = vmul.f32 %v3922, 1.442695
          %v3952 = vpow.pop %v3951
          %v3953 = vmul.f32 %v3923, 1.442695
          %v3954 = vpow.pop %v3953
          %v3955 = vmul.f32 %v3924, 1.442695
          %v3956 = vpow.pop %v3955
          %v3957 = vadd.f32 %v3926, 1.0
          %v3958 = vadd.f32 %v3928, 1.0
          %v3959 = vadd.f32 %v3930, 1.0
          %v3960 = vadd.f32 %v3932, 1.0
          %v3961 = vadd.f32 %v3934, 1.0
          %v3962 = vadd.f32 %v3936, 1.0
          %v3963 = vadd.f32 %v3938, 1.0
          %v3964 = vadd.f32 %v3940, 1.0
          %v3965 = vadd.f32 %v3942, 1.0
          %v3966 = vadd.f32 %v3944, 1.0
          %v3967 = vadd.f32 %v3946, 1.0
          %v3968 = vadd.f32 %v3948, 1.0
          %v3969 = vadd.f32 %v3950, 1.0
          %v3970 = vadd.f32 %v3952, 1.0
          %v3971 = vadd.f32 %v3954, 1.0
          %v3972 = vadd.f32 %v3956, 1.0
          %v3973 = vrcp.pop %v3957
          %v3974 = vmul.f32 1.0, %v3973
          %v3975 = vrcp.pop %v3958
          %v3976 = vmul.f32 1.0, %v3975
          %v3977 = vrcp.pop %v3959
          %v3978 = vmul.f32 1.0, %v3977
          %v3979 = vrcp.pop %v3960
          %v3980 = vmul.f32 1.0, %v3979
          %v3981 = vrcp.pop %v3961
          %v3982 = vmul.f32 1.0, %v3981
          %v3983 = vrcp.pop %v3962
          %v3984 = vmul.f32 1.0, %v3983
          %v3985 = vrcp.pop %v3963
          %v3986 = vmul.f32 1.0, %v3985
          %v3987 = vrcp.pop %v3964
          %v3988 = vmul.f32 1.0, %v3987
          %v3989 = vrcp.pop %v3965
          %v3990 = vmul.f32 1.0, %v3989
          %v3991 = vrcp.pop %v3966
          %v3992 = vmul.f32 1.0, %v3991
          %v3993 = vrcp.pop %v3967
          %v3994 = vmul.f32 1.0, %v3993
          %v3995 = vrcp.pop %v3968
          %v3996 = vmul.f32 1.0, %v3995
          %v3997 = vrcp.pop %v3969
          %v3998 = vmul.f32 1.0, %v3997
          %v3999 = vrcp.pop %v3970
          %v4000 = vmul.f32 1.0, %v3999
          %v4001 = vrcp.pop %v3971
          %v4002 = vmul.f32 1.0, %v4001
          %v4003 = vrcp.pop %v3972
          %v4004 = vmul.f32 1.0, %v4003
          %4021 = vset.pattern.permute.xlu0 0
          %4022 = vperm.xlu0 %4021, %v3974
          %v4023 = vpop.permute.xlu0 %4022
          %4024 = vset.pattern.permute.xlu0 0
          %4025 = vperm.xlu0 %4024, %v3976
          %v4026 = vpop.permute.xlu0 %4025
          %4027 = vset.pattern.permute.xlu0 0
          %4028 = vperm.xlu0 %4027, %v3978
          %v4029 = vpop.permute.xlu0 %4028
          %4030 = vset.pattern.permute.xlu0 0
          %4031 = vperm.xlu0 %4030, %v3980
          %v4032 = vpop.permute.xlu0 %4031
          %4033 = vset.pattern.permute.xlu0 0
          %4034 = vperm.xlu0 %4033, %v3982
          %v4035 = vpop.permute.xlu0 %4034
          %4036 = vset.pattern.permute.xlu0 0
          %4037 = vperm.xlu0 %4036, %v3984
          %v4038 = vpop.permute.xlu0 %4037
          %4039 = vset.pattern.permute.xlu0 0
          %4040 = vperm.xlu0 %4039, %v3986
          %v4041 = vpop.permute.xlu0 %4040
          %4042 = vset.pattern.permute.xlu0 0
          %4043 = vperm.xlu0 %4042, %v3988
          %v4044 = vpop.permute.xlu0 %4043
          %4045 = vset.pattern.permute.xlu0 0
          %4046 = vperm.xlu0 %4045, %v3990
          %v4047 = vpop.permute.xlu0 %4046
          %4048 = vset.pattern.permute.xlu0 0
          %4049 = vperm.xlu0 %4048, %v3992
          %v4050 = vpop.permute.xlu0 %4049
          %4051 = vset.pattern.permute.xlu0 0
          %4052 = vperm.xlu0 %4051, %v3994
          %v4053 = vpop.permute.xlu0 %4052
          %4054 = vset.pattern.permute.xlu0 0
          %4055 = vperm.xlu0 %4054, %v3996
          %v4056 = vpop.permute.xlu0 %4055
          %4057 = vset.pattern.permute.xlu0 0
          %4058 = vperm.xlu0 %4057, %v3998
          %v4059 = vpop.permute.xlu0 %4058
          %4060 = vset.pattern.permute.xlu0 0
          %4061 = vperm.xlu0 %4060, %v4000
          %v4062 = vpop.permute.xlu0 %4061
          %4063 = vset.pattern.permute.xlu0 0
          %4064 = vperm.xlu0 %4063, %v4002
          %v4065 = vpop.permute.xlu0 %4064
          %4066 = vset.pattern.permute.xlu0 0
          %4067 = vperm.xlu0 %4066, %v4004
          %v4068 = vpop.permute.xlu0 %4067
          %v4069 = vlaneseq
          %v4070 = vshrl.u32 %v4069, 7
          %v4071 = vsub.s32 %v485, %v4070
          %v4072 = vrot.slane %v4023, %v4071
          %v4073 = vlaneseq
          %v4074 = vshrl.u32 %v4073, 7
          %v4075 = vsub.s32 %v2096, %v4074
          %v4076 = vrot.slane %v4026, %v4075
          %v4077 = vsel %vm2101, %v4076, %v4072
          %v4078 = vlaneseq
          %v4079 = vshrl.u32 %v4078, 7
          %v4080 = vsub.s32 %v485, %v4079
          %v4081 = vrot.slane %v4029, %v4080
          %v4082 = vlaneseq
          %v4083 = vshrl.u32 %v4082, 7
          %v4084 = vsub.s32 %v2096, %v4083
          %v4085 = vrot.slane %v4032, %v4084
          %v4086 = vsel %vm2101, %v4085, %v4081
          %v4087 = vlaneseq
          %v4088 = vshrl.u32 %v4087, 7
          %v4089 = vsub.s32 %v485, %v4088
          %v4090 = vrot.slane %v4035, %v4089
          %v4091 = vlaneseq
          %v4092 = vshrl.u32 %v4091, 7
          %v4093 = vsub.s32 %v2096, %v4092
          %v4094 = vrot.slane %v4038, %v4093
          %v4095 = vsel %vm2101, %v4094, %v4090
          %v4096 = vlaneseq
          %v4097 = vshrl.u32 %v4096, 7
          %v4098 = vsub.s32 %v485, %v4097
          %v4099 = vrot.slane %v4041, %v4098
          %v4100 = vlaneseq
          %v4101 = vshrl.u32 %v4100, 7
          %v4102 = vsub.s32 %v2096, %v4101
          %v4103 = vrot.slane %v4044, %v4102
          %v4104 = vsel %vm2101, %v4103, %v4099
          %v4105 = vlaneseq
          %v4106 = vshrl.u32 %v4105, 7
          %v4107 = vsub.s32 %v485, %v4106
          %v4108 = vrot.slane %v4047, %v4107
          %v4109 = vlaneseq
          %v4110 = vshrl.u32 %v4109, 7
          %v4111 = vsub.s32 %v2096, %v4110
          %v4112 = vrot.slane %v4050, %v4111
          %v4113 = vsel %vm2101, %v4112, %v4108
          %v4114 = vlaneseq
          %v4115 = vshrl.u32 %v4114, 7
          %v4116 = vsub.s32 %v485, %v4115
          %v4117 = vrot.slane %v4053, %v4116
          %v4118 = vlaneseq
          %v4119 = vshrl.u32 %v4118, 7
          %v4120 = vsub.s32 %v2096, %v4119
          %v4121 = vrot.slane %v4056, %v4120
          %v4122 = vsel %vm2101, %v4121, %v4117
          %v4123 = vlaneseq
          %v4124 = vshrl.u32 %v4123, 7
          %v4125 = vsub.s32 %v485, %v4124
          %v4126 = vrot.slane %v4059, %v4125
          %v4127 = vlaneseq
          %v4128 = vshrl.u32 %v4127, 7
          %v4129 = vsub.s32 %v2096, %v4128
          %v4130 = vrot.slane %v4062, %v4129
          %v4131 = vsel %vm2101, %v4130, %v4126
          %v4132 = vlaneseq
          %v4133 = vshrl.u32 %v4132, 7
          %v4134 = vsub.s32 %v485, %v4133
          %v4135 = vrot.slane %v4065, %v4134
          %v4136 = vlaneseq
          %v4137 = vshrl.u32 %v4136, 7
          %v4138 = vsub.s32 %v2096, %v4137
          %v4139 = vrot.slane %v4068, %v4138
          %v4140 = vsel %vm2101, %v4139, %v4135
          %v4141 = vsel %vm3246, %v4086, %v4077
          %v4142 = vsel %vm3248, %v4095, %v4141
          %v4143 = vsel %vm3250, %v4104, %v4142
          %v4144 = vsel %vm3252, %v4113, %v4143
          %v4145 = vsel %vm3254, %v4122, %v4144
          %v4146 = vsel %vm3256, %v4131, %v4145
          %v4147 = vsel %vm3258, %v4140, %v4146
          %4149 = vst.msk [vmem:[%s231] sm:$0xff] %vm3381, %v4147
        $region52: #{eica_forward.2} parent=31 // pred_fallthru
          _
        %p4150 = scmp.lt.s32.totalorder %s22, 1
        %s4151 = scalar_select %p4150, %s22, 1
        %s4152 = smul.addr %s4151, 8
        %s4153 = scalar_lea.vmem %s3, %s4152
        // Predicated region
        $region53: #{eica_forward.2} parent=31 // pred_check
          %p4154 = pneg %p118
        $region54: #{eica_forward.2} parent=31 // pred_check_branch
          %4156 = sbr.rel (%p4154) target = $region56
        $region55: #{eica_forward.2} parent=31 // pred_region
          _
        $region56: #{eica_forward.2} parent=31 // pred_fallthru
          _
      $region32: #{eica_forward.2} parent=5 // pred_fallthru
        _
      %p4157 = scmp.le.s32.totalorder 2, %s13
      // Predicated region
      $region57: #{eica_forward.2} parent=5 // pred_check
        %p4158 = pneg %p4157
      $region58: #{eica_forward.2} parent=5 // pred_check_branch
        %4160 = sbr.rel (%p4158) target = $region60
      $region59: #{eica_forward.2} parent=5 // pred_region
        %s4161 = ssub.s32 %s13, 2
        // Predicated region
        $region61: #{eica_forward.2} parent=59 // pred_check
          %p4162 = pneg %p124
        $region62: #{eica_forward.2} parent=59 // pred_check_branch
          %4164 = sbr.rel (%p4162) target = $region64
        $region63: #{eica_forward.2} parent=59 // pred_region
          %p4165 = scmp.lt.s32.totalorder %s24, 1
          %s4166 = scalar_select %p4165, %s24, 1
          %s4167 = smul.addr %s4166, 8
          %s4168 = scalar_lea.vmem %s3, %s4167
        $region64: #{eica_forward.2} parent=59 // pred_fallthru
          _
      $region60: #{eica_forward.2} parent=5 // pred_fallthru
        _
    $region6: #{eica_forward.2} parent=1 // loop_footer
      %s17 = sadd.s32 1, %s13
    $region7: #{eica_forward.2} parent=1 // loop_footer_branch
      %12 = sbr.rel target = $region3
    $region8: #{eica_forward.2} parent=1 // loop_exit
      _
    %4169 = vsyncpa [#allocation4], 1
    %s4170 = scalar_lea.sflag [#allocation4], 1
    %4171 = vsyncpa %s4170, 1
    %4172 = vsyncpa [#allocation6], 1

</llo_original>
